<compile_context>
chip_gen: v7x
topology: tpu7x:2x2x1
jax: 0.10.0
libtpu: 0.0.40
codegen_flags: <defaults>
</compile_context>

<pallas_src>
import functools

import jax
import jax.numpy as jnp
from jax import lax
from jax.experimental import pallas as pl
from jax.experimental.pallas import tpu as pltpu

EPS = 1e-5
LANE = 128


def _round_up(v, m):
    return (v + m - 1) // m * m


@functools.lru_cache(None)
def _vmem_limit_bytes():
    """Generation-aware VMEM budget: ~75% of physical capacity (128 MiB on
    v5e/v6e, 64 MiB on v7x), leaving headroom for Mosaic's own scratch."""
    try:
        cap = pltpu.get_tpu_info().vmem_capacity_bytes
    except Exception:
        cap = 64 * 1024 * 1024
    return min(int(cap * 3 // 4), 100 * 1024 * 1024)


def _cparams(ndims):
    return pltpu.CompilerParams(
        dimension_semantics=("parallel",) * ndims,   # megacore splits the grid
        vmem_limit_bytes=_vmem_limit_bytes(),
    )


def _pick_tile_m(m):
    """Largest row tile that divides M exactly and leaves >= 4 grid steps
    (so both v7x TensorCores get >= 2 pipelined steps each); falls back for
    tiny problems.
    # TODO(synk): switch to pl.cdiv grids with masked tails so awkward M does
    # not collapse the tile size (needs row-masked BN partial sums)."""
    for min_steps in (4, 2, 1):
        for t in (2048, 1024, 512, 256, 128, 64, 32, 16, 8):
            if m % t == 0 and m // t >= min_steps:
                return t
    return m


def _pick_band_h(h, n):
    """Row-band height for the 3x3 conv: divide H so the (image, band) grid
    has >= 4 steps and the halo / im2col scratch stays small."""
    for t in (32, 16, 8, 4, 2, 1):
        if h % t == 0 and n * (h // t) >= 4:
            return t
    return h


# ----------------------------- Pallas kernels -------------------------------

def _conv1_short_kernel(x_ref, w1_ref, ws_ref,
                        y1_ref, ysc_ref, s1_ref, q1_ref, ss_ref, qs_ref):
    """conv1 (1x1) and the shortcut 1x1 conv in one pass over x (single HBM
    read of x).  bf16 MXU operands, f32 accumulation.  BN partial sums come
    from the f32 accumulators, so bf16 storage does not perturb statistics.
    The shortcut conv bias is dropped on purpose: a per-channel constant added
    before a training-mode BatchNorm is exactly cancelled by the mean
    subtraction (variance unchanged) — only valid with batch statistics."""
    x = x_ref[...]
    y1 = jnp.dot(x, w1_ref[...], preferred_element_type=jnp.float32)
    ysc = jnp.dot(x, ws_ref[...], preferred_element_type=jnp.float32)
    y1_ref[...] = y1.astype(jnp.bfloat16)
    ysc_ref[...] = ysc.astype(jnp.bfloat16)
    s1_ref[0] = jnp.sum(y1, axis=0, keepdims=True)
    q1_ref[0] = jnp.sum(y1 * y1, axis=0, keepdims=True)
    ss_ref[0] = jnp.sum(ysc, axis=0, keepdims=True)
    qs_ref[0] = jnp.sum(ysc * ysc, axis=0, keepdims=True)


def _conv2_kernel(y1_ref, sc_ref, sh_ref, w2_ref,
                  y2_ref, s_ref, q_ref, hp_ref, col_ref):
    """Apply BN1 (folded scale/shift, f32 math) + ReLU, then the 3x3 conv on
    one row band of one image: fill a zero-halo VMEM buffer (only the four
    1-wide border strips are zeroed), build a (band*W, 9*C) bf16 im2col tile
    in VMEM and run a single MXU matmul with K = 9*C."""
    _, bh, w, c = y2_ref.shape
    j = pl.program_id(1)
    nb = pl.num_programs(1)
    row0 = j * bh
    sc = sc_ref[...]
    sh = sh_ref[...]

    def bn_relu(v):  # f32 element-wise math; bf16 only for storage/MXU
        return jnp.maximum(v.astype(jnp.float32) * sc + sh, 0.0).astype(jnp.bfloat16)

    # Zero only the border strips; the interior is fully overwritten below.
    zrow = jnp.zeros((1, w + 2, c), jnp.bfloat16)
    zcol = jnp.zeros((bh + 2, 1, c), jnp.bfloat16)
    hp_ref[pl.ds(0, 1), :, :] = zrow
    hp_ref[pl.ds(bh + 1, 1), :, :] = zrow
    hp_ref[:, pl.ds(0, 1), :] = zcol
    hp_ref[:, pl.ds(w + 1, 1), :] = zcol

    # Band interior + top / bottom halo rows (left zero at the image border).
    hp_ref[pl.ds(1, bh), pl.ds(1, w), :] = bn_relu(y1_ref[0, pl.ds(row0, bh), :, :])

    @pl.when(j > 0)
    def _():
        hp_ref[pl.ds(0, 1), pl.ds(1, w), :] = bn_relu(
            y1_ref[0, pl.ds(row0 - 1, 1), :, :])

    @pl.when(j < nb - 1)
    def _():
        hp_ref[pl.ds(bh + 1, 1), pl.ds(1, w), :] = bn_relu(
            y1_ref[0, pl.ds(row0 + bh, 1), :, :])

    # im2col: nine shifted taps -> lane-aligned column blocks of the scratch.
    for k in range(9):
        kh, kw = k // 3, k % 3
        tap = hp_ref[pl.ds(kh, bh), pl.ds(kw, w), :]
        col_ref[:, pl.ds(k * c, c)] = tap.reshape(bh * w, c)

    y2 = jnp.dot(col_ref[...], w2_ref[...], preferred_element_type=jnp.float32)
    y2_ref[0] = y2.reshape(bh, w, c).astype(jnp.bfloat16)
    s_ref[0] = jnp.sum(y2, axis=0, keepdims=True)
    q_ref[0] = jnp.sum(y2 * y2, axis=0, keepdims=True)


def _conv3_kernel(y2_ref, sc_ref, sh_ref, w3_ref, y3_ref, s_ref, q_ref):
    """Apply BN2 + ReLU (f32 math), then conv3 (1x1)."""
    h2 = jnp.maximum(y2_ref[...].astype(jnp.float32) * sc_ref[...] + sh_ref[...], 0.0)
    y3 = jnp.dot(h2.astype(jnp.bfloat16), w3_ref[...],
                 preferred_element_type=jnp.float32)
    y3_ref[...] = y3.astype(jnp.bfloat16)
    s_ref[0] = jnp.sum(y3, axis=0, keepdims=True)
    q_ref[0] = jnp.sum(y3 * y3, axis=0, keepdims=True)


def _finalize_kernel(y3_ref, ysc_ref, sc3_ref, sh3_ref, scs_ref, shs_ref, o_ref):
    """BN3 || BN_shortcut -> add -> ReLU (f32 math; bf16 inputs)."""
    a = y3_ref[...].astype(jnp.float32) * sc3_ref[...] + sh3_ref[...]
    b = ysc_ref[...].astype(jnp.float32) * scs_ref[...] + shs_ref[...]
    o_ref[...] = jnp.maximum(a + b, 0.0)


# ------------------------------ pallas_call wrappers ------------------------

def _run_conv1_short(x_bf, w1, ws, tile_m):
    m, cin_p = x_bf.shape
    c_p = w1.shape[1]
    nt = m // tile_m
    tile_out = pl.BlockSpec((tile_m, c_p), lambda i: (i, 0))
    part = pl.BlockSpec((1, 1, c_p), lambda i: (i, 0, 0))
    cost = pl.CostEstimate(
        flops=4 * m * cin_p * c_p, transcendentals=0,
        bytes_accessed=x_bf.size * 2 + (w1.size + ws.size) * 2 + 2 * m * c_p * 2)
    return pl.pallas_call(
        _conv1_short_kernel,
        grid_spec=pltpu.PrefetchScalarGridSpec(
            num_scalar_prefetch=0,
            grid=(nt,),
            in_specs=[
                pl.BlockSpec((tile_m, cin_p), lambda i: (i, 0)),
                pl.BlockSpec((cin_p, c_p), lambda i: (0, 0)),
                pl.BlockSpec((cin_p, c_p), lambda i: (0, 0)),
            ],
            out_specs=[tile_out, tile_out, part, part, part, part],
        ),
        out_shape=[
            jax.ShapeDtypeStruct((m, c_p), jnp.bfloat16),
            jax.ShapeDtypeStruct((m, c_p), jnp.bfloat16),
            jax.ShapeDtypeStruct((nt, 1, c_p), jnp.float32),
            jax.ShapeDtypeStruct((nt, 1, c_p), jnp.float32),
            jax.ShapeDtypeStruct((nt, 1, c_p), jnp.float32),
            jax.ShapeDtypeStruct((nt, 1, c_p), jnp.float32),
        ],
        compiler_params=_cparams(1),
        cost_estimate=cost,
    )(x_bf, w1, ws)


def _run_conv2(y1_img, sc1, sh1, w2_mat, band_h):
    n, h, w, c_p = y1_img.shape
    nb = h // band_h
    cost = pl.CostEstimate(
        flops=2 * n * h * w * 9 * c_p * c_p, transcendentals=0,
        bytes_accessed=y1_img.size * 2 + w2_mat.size * 2 + n * h * w * c_p * 2)
    return pl.pallas_call(
        _conv2_kernel,
        grid_spec=pltpu.PrefetchScalarGridSpec(
            num_scalar_prefetch=0,
            grid=(n, nb),
            in_specs=[
                # Whole image stays resident across its row bands (same block
                # index across j -> no re-DMA).
                pl.BlockSpec((1, h, w, c_p), lambda i, j: (i, 0, 0, 0)),
                pl.BlockSpec((1, c_p), lambda i, j: (0, 0)),
                pl.BlockSpec((1, c_p), lambda i, j: (0, 0)),
                pl.BlockSpec((9 * c_p, c_p), lambda i, j: (0, 0)),
            ],
            out_specs=[
                pl.BlockSpec((1, band_h, w, c_p), lambda i, j: (i, j, 0, 0)),
                pl.BlockSpec((1, 1, c_p), lambda i, j: (i * nb + j, 0, 0)),
                pl.BlockSpec((1, 1, c_p), lambda i, j: (i * nb + j, 0, 0)),
            ],
            scratch_shapes=[
                pltpu.VMEM((band_h + 2, w + 2, c_p), jnp.bfloat16),   # halo
                pltpu.VMEM((band_h * w, 9 * c_p), jnp.bfloat16),      # im2col
            ],
        ),
        out_shape=[
            jax.ShapeDtypeStruct((n, h, w, c_p), jnp.bfloat16),
            jax.ShapeDtypeStruct((n * nb, 1, c_p), jnp.float32),
            jax.ShapeDtypeStruct((n * nb, 1, c_p), jnp.float32),
        ],
        compiler_params=_cparams(2),
        cost_estimate=cost,
    )(y1_img, sc1, sh1, w2_mat)


def _run_conv3(y2_flat, sc2, sh2, w3, tile_m):
    m, c_p = y2_flat.shape
    nt = m // tile_m
    vec = pl.BlockSpec((1, c_p), lambda i: (0, 0))
    tile = pl.BlockSpec((tile_m, c_p), lambda i: (i, 0))
    part = pl.BlockSpec((1, 1, c_p), lambda i: (i, 0, 0))
    cost = pl.CostEstimate(
        flops=2 * m * c_p * c_p, transcendentals=0,
        bytes_accessed=2 * m * c_p * 2 + w3.size * 2)
    return pl.pallas_call(
        _conv3_kernel,
        grid_spec=pltpu.PrefetchScalarGridSpec(
            num_scalar_prefetch=0,
            grid=(nt,),
            in_specs=[tile, vec, vec, pl.BlockSpec((c_p, c_p), lambda i: (0, 0))],
            out_specs=[tile, part, part],
        ),
        out_shape=[
            jax.ShapeDtypeStruct((m, c_p), jnp.bfloat16),
            jax.ShapeDtypeStruct((nt, 1, c_p), jnp.float32),
            jax.ShapeDtypeStruct((nt, 1, c_p), jnp.float32),
        ],
        compiler_params=_cparams(1),
        cost_estimate=cost,
    )(y2_flat, sc2, sh2, w3)


def _run_finalize(y3, ysc, sc3, sh3, scs, shs, tile_m):
    m, c_p = y3.shape
    nt = m // tile_m
    vec = pl.BlockSpec((1, c_p), lambda i: (0, 0))
    tile = pl.BlockSpec((tile_m, c_p), lambda i: (i, 0))
    cost = pl.CostEstimate(flops=6 * m * c_p, transcendentals=0,
                           bytes_accessed=2 * m * c_p * 2 + m * c_p * 4)
    return pl.pallas_call(
        _finalize_kernel,
        grid_spec=pltpu.PrefetchScalarGridSpec(
            num_scalar_prefetch=0,
            grid=(nt,),
            in_specs=[tile, tile, vec, vec, vec, vec],
            out_specs=pl.BlockSpec((tile_m, c_p), lambda i: (i, 0)),
        ),
        out_shape=jax.ShapeDtypeStruct((m, c_p), jnp.float32),
        compiler_params=_cparams(1),
        cost_estimate=cost,
    )(y3, ysc, sc3, sh3, scs, shs)


def _bn_affine(sum_parts, sq_parts, m_total, g, b):
    """Finalize full-batch BN statistics from per-tile partials (taken from
    the f32 accumulators inside the kernels) and fold the affine into a
    per-channel scale/shift: y_bn = y*scale + shift.
    # TODO(synk): use mean-shifted / Welford-merged partials if |mean| >> std
    # at production sizes (single-pass E[y^2]-E[y]^2 can cancel)."""
    total = jnp.sum(sum_parts, axis=(0, 1))
    total_sq = jnp.sum(sq_parts, axis=(0, 1))
    mean = total / m_total
    var = total_sq / m_total - mean * mean
    scale = g * lax.rsqrt(var + EPS)          # (1, C_pad)
    shift = b - mean * scale
    return scale, shift


# ------------------------------ forward pass --------------------------------

def residual_bottleneck_block_nhwc(x_nhwc, p):
    """Forward pass on NHWC input (stride=1, training-mode BatchNorm, conv
    shortcut).  Channels are zero-padded to the 128-lane width so every
    matmul and BN broadcast is lane-dense; the pad is sliced off at the end."""
    n, h, w, cin = x_nhwc.shape
    c = p["w1"].shape[1]
    cin_p = _round_up(cin, LANE)
    c_p = _round_up(c, LANE)
    m = n * h * w
    tile_m = _pick_tile_m(m)
    band_h = _pick_band_h(h, n)

    # Flatten spatial, cast to bf16 (MXU operand), pad channels to lane width.
    x_bf = jnp.pad(x_nhwc.reshape(m, cin).astype(jnp.bfloat16),
                   ((0, 0), (0, cin_p - cin)))

    pad_mat = lambda a, r, cc: jnp.pad(a, ((0, r - a.shape[0]), (0, cc - a.shape[1])))
    pad_vec = lambda v: jnp.pad(v, ((0, 0), (0, c_p - c))).astype(jnp.float32)

    w1 = pad_mat(p["w1"], cin_p, c_p).astype(jnp.bfloat16)
    w3 = pad_mat(p["w3"], c_p, c_p).astype(jnp.bfloat16)
    ws = pad_mat(p["ws"], cin_p, c_p).astype(jnp.bfloat16)
    # (OC, IC, 3, 3) -> (9, IC, OC) taps -> lane-padded -> (9*C_p, C_p), so the
    # 3x3 conv is one K = 9*C_p matmul against the in-VMEM im2col tile.
    w2 = jnp.transpose(p["w2"], (2, 3, 1, 0)).reshape(9, c, c)
    w2 = jnp.pad(w2, ((0, 0), (0, c_p - c), (0, c_p - c)))
    w2 = w2.reshape(9 * c_p, c_p).astype(jnp.bfloat16)

    g1, b1 = pad_vec(p["g1"]), pad_vec(p["b1"])
    g2, b2 = pad_vec(p["g2"]), pad_vec(p["b2"])
    g3, b3 = pad_vec(p["g3"]), pad_vec(p["b3"])
    gs, bsh = pad_vec(p["gs"]), pad_vec(p["bsh"])
    # p["bs"] (shortcut conv bias) is unused: exactly cancelled by its
    # training-mode BatchNorm (guarded by comments in the kernel).

    # conv1 + shortcut conv share the single HBM read of x.
    y1, ysc, s1, q1, ss, qs = _run_conv1_short(x_bf, w1, ws, tile_m)
    sc1, sh1 = _bn_affine(s1, q1, m, g1, b1)

    # BN1+ReLU fused into the 3x3 conv (row-band grid, halo + im2col in VMEM).
    y2, s2, q2 = _run_conv2(y1.reshape(n, h, w, c_p), sc1, sh1, w2, band_h)
    sc2, sh2 = _bn_affine(s2, q2, m, g2, b2)

    # BN2+ReLU fused into conv3 (1x1).
    y3, s3, q3 = _run_conv3(y2.reshape(m, c_p), sc2, sh2, w3, tile_m)
    sc3, sh3 = _bn_affine(s3, q3, m, g3, b3)
    scs, shs = _bn_affine(ss, qs, m, gs, bsh)

    # BN3 || BN_shortcut -> add -> ReLU.
    out = _run_finalize(y3, ysc, sc3, sh3, scs, shs, tile_m)
    # TODO(synk): the channel-pad slice is unavoidable while C % 128 != 0; a
    # caller that accepts lane-padded channels could consume `out` directly.
    return out[:, :c].reshape(n, h, w, c)


def residual_bottleneck_block(x_nchw, p):
    """NCHW wrapper matching the PyTorch module's layout.
    # TODO(synk): callers that already hold NHWC activations should use
    # residual_bottleneck_block_nhwc and skip these two transposes."""
    x_nhwc = jnp.transpose(x_nchw, (0, 2, 3, 1))
    y = residual_bottleneck_block_nhwc(x_nhwc, p)
    return jnp.transpose(y, (0, 3, 1, 2))


# --------------------------- pure-JAX reference -----------------------------

def reference_block(x_nchw, p):
    """Pure-JAX reference mirroring the PyTorch module (training-mode BN).
    Conv/matmul operands are cast to bf16 with f32 accumulation to emulate the
    kernel's MXU precision choice; the structure (conv -> BN(batch stats) ->
    ReLU, shortcut conv+bias -> BN, add -> ReLU) is exactly the module's."""
    bf = jnp.bfloat16
    x = jnp.transpose(x_nchw, (0, 2, 3, 1))
    xb = x.astype(bf)

    def bn(y, g, b):
        mu = jnp.mean(y, axis=(0, 1, 2), keepdims=True)
        var = jnp.mean((y - mu) ** 2, axis=(0, 1, 2), keepdims=True)
        return (y - mu) * lax.rsqrt(var + EPS) * g.reshape(1, 1, 1, -1) \
            + b.reshape(1, 1, 1, -1)

    h = jnp.einsum("nhwc,co->nhwo", xb, p["w1"].astype(bf),
                   preferred_element_type=jnp.float32)
    h = jax.nn.relu(bn(h, p["g1"], p["b1"]))

    h2 = lax.conv_general_dilated(
        h.astype(bf), jnp.transpose(p["w2"], (2, 3, 1, 0)).astype(bf),
        (1, 1), "SAME", dimension_numbers=("NHWC", "HWIO", "NHWC"),
        preferred_element_type=jnp.float32)
    h2 = jax.nn.relu(bn(h2, p["g2"], p["b2"]))

    y1 = bn(jnp.einsum("nhwc,co->nhwo", h2.astype(bf), p["w3"].astype(bf),
                       preferred_element_type=jnp.float32), p["g3"], p["b3"])
    y2 = bn(jnp.einsum("nhwc,co->nhwo", xb, p["ws"].astype(bf),
                       preferred_element_type=jnp.float32)
            + p["bs"].reshape(1, 1, 1, -1),
            p["gs"], p["bsh"])
    y = jax.nn.relu(y1 + y2)
    return jnp.transpose(y, (0, 3, 1, 2))


# ------------------------------- params / main -------------------------------

def make_params(key, in_channel, out_channel):
    C = out_channel  # expansion == ResidualBasicBlock.expansion == 1
    ks = jax.random.split(key, 12)
    f32 = jnp.float32
    return {
        # conv weights stored as (Cin, Cout) for 1x1, (OC, IC, 3, 3) for 3x3
        "w1": 0.1 * jax.random.normal(ks[0], (in_channel, C), f32),
        "g1": 1.0 + 0.1 * jax.random.normal(ks[1], (1, C), f32),
        "b1": 0.1 * jax.random.normal(ks[2], (1, C), f32),
        "w2": 0.1 * jax.random.normal(ks[3], (C, C, 3, 3), f32),
        "g2": 1.0 + 0.1 * jax.random.normal(ks[4], (1, C), f32),
        "b2": 0.1 * jax.random.normal(ks[5], (1, C), f32),
        "w3": 0.1 * jax.random.normal(ks[6], (C, C), f32),
        "g3": 1.0 + 0.1 * jax.random.normal(ks[7], (1, C), f32),
        "b3": 0.1 * jax.random.normal(ks[8], (1, C), f32),
        # shortcut (in_channel != out_channel -> conv(1x1, bias=True) + BN)
        "ws": 0.1 * jax.random.normal(ks[9], (in_channel, C), f32),
        "bs": 0.1 * jax.random.normal(ks[10], (1, C), f32),
        "gs": jnp.ones((1, C), f32),
        "bsh": jnp.zeros((1, C), f32),
    }


if __name__ == "__main__":
    key = jax.random.PRNGKey(0)
    k_x, k_p = jax.random.split(key)

    N, Cin, H, W = 2, 4, 16, 16
    Cout = 8                 # in_channel != out_channel -> conv-shortcut path
    x = jax.random.normal(k_x, (N, Cin, H, W), jnp.float32)
    params = make_params(k_p, Cin, Cout)

    y = jax.jit(residual_bottleneck_block)(x, params)
    y = jax.block_until_ready(y)

    y_ref = reference_block(x, params)
    assert y.shape == (N, Cout, H, W)
    # Tolerance reflects the intentional bf16 MXU operands (f32 accumulation)
    # plus bf16 storage of the pre-BN intermediates.
    assert jnp.allclose(y, y_ref, rtol=4e-2, atol=4e-2), "mismatch vs reference"

    print("KERNEL_OK")
</pallas_src>

<mosaic_0001>
module attributes {stable_mosaic.version = 11 : i64} {
  func.func @_conv1_short_kernel(%arg0: i32, %arg1: memref<128x128xbf16, #tpu.memory_space<vmem>>, %arg2: memref<128x128xbf16, #tpu.memory_space<vmem>>, %arg3: memref<128x128xbf16, #tpu.memory_space<vmem>>, %arg4: memref<128x128xbf16, #tpu.memory_space<vmem>>, %arg5: memref<128x128xbf16, #tpu.memory_space<vmem>>, %arg6: memref<1x1x128xf32, #tpu.memory_space<vmem>>, %arg7: memref<1x1x128xf32, #tpu.memory_space<vmem>>, %arg8: memref<1x1x128xf32, #tpu.memory_space<vmem>>, %arg9: memref<1x1x128xf32, #tpu.memory_space<vmem>>) attributes {dimension_semantics = [#tpu.dimension_semantics<parallel>], iteration_bounds = array<i64: 4>, scalar_prefetch = 0 : i64, scratch_operands = 0 : i64, tpu.core_type = #tpu.core_type<tc>, window_params = [{transform_indices = @transform_0, window_bounds = array<i64: 128, 128>}, {pipeline_mode = #tpu.pipeline_mode<synchronous>, transform_indices = @transform_1, window_bounds = array<i64: 128, 128>}, {pipeline_mode = #tpu.pipeline_mode<synchronous>, transform_indices = @transform_2, window_bounds = array<i64: 128, 128>}, {transform_indices = @transform_3, window_bounds = array<i64: 128, 128>}, {transform_indices = @transform_4, window_bounds = array<i64: 128, 128>}, {transform_indices = @transform_5, window_bounds = array<i64: 1, 1, 128>}, {transform_indices = @transform_6, window_bounds = array<i64: 1, 1, 128>}, {transform_indices = @transform_7, window_bounds = array<i64: 1, 1, 128>}, {transform_indices = @transform_8, window_bounds = array<i64: 1, 1, 128>}]} {
    %c0 = arith.constant 0 : index
    %c0_0 = arith.constant 0 : index
    %0 = vector.load %arg1[%c0, %c0_0] : memref<128x128xbf16, #tpu.memory_space<vmem>>, vector<128x128xbf16>
    %c0_1 = arith.constant 0 : index
    %c0_2 = arith.constant 0 : index
    %1 = vector.load %arg2[%c0_1, %c0_2] : memref<128x128xbf16, #tpu.memory_space<vmem>>, vector<128x128xbf16>
    %cst = arith.constant dense<0.000000e+00> : vector<128x128xf32>
    %2 = tpu.matmul %0, %1, %cst {dimension_numbers = #tpu.dot_dimension_numbers<[1], [0], [0], [1], [0, 0, 1, 1], [], []>} : vector<128x128xbf16>, vector<128x128xbf16>, vector<128x128xf32> -> vector<128x128xf32>
    %c0_3 = arith.constant 0 : index
    %c0_4 = arith.constant 0 : index
    %3 = vector.load %arg3[%c0_3, %c0_4] : memref<128x128xbf16, #tpu.memory_space<vmem>>, vector<128x128xbf16>
    %cst_5 = arith.constant dense<0.000000e+00> : vector<128x128xf32>
    %4 = tpu.matmul %0, %3, %cst_5 {dimension_numbers = #tpu.dot_dimension_numbers<[1], [0], [0], [1], [0, 0, 1, 1], [], []>} : vector<128x128xbf16>, vector<128x128xbf16>, vector<128x128xf32> -> vector<128x128xf32>
    %5 = arith.truncf %2 : vector<128x128xf32> to vector<128x128xbf16>
    %c0_6 = arith.constant 0 : index
    %c0_7 = arith.constant 0 : index
    %6 = vector.load %arg4[%c0_6, %c0_7] : memref<128x128xbf16, #tpu.memory_space<vmem>>, vector<128x128xbf16>
    tpu.vector_store %arg4[%c0_6, %c0_7], %5 {strides = array<i32>} : memref<128x128xbf16, #tpu.memory_space<vmem>>, vector<128x128xbf16>,
    %7 = arith.truncf %4 : vector<128x128xf32> to vector<128x128xbf16>
    %c0_8 = arith.constant 0 : index
    %c0_9 = arith.constant 0 : index
    %8 = vector.load %arg5[%c0_8, %c0_9] : memref<128x128xbf16, #tpu.memory_space<vmem>>, vector<128x128xbf16>
    tpu.vector_store %arg5[%c0_8, %c0_9], %7 {strides = array<i32>} : memref<128x128xbf16, #tpu.memory_space<vmem>>, vector<128x128xbf16>,
    %cst_10 = arith.constant dense<0.000000e+00> : vector<128xf32>
    %9 = vector.multi_reduction <add>, %2, %cst_10 [0] : vector<128x128xf32> to vector<128xf32>
    %10 = vector.shape_cast %9 : vector<128xf32> to vector<1x128xf32>
    %c0_11 = arith.constant 0 : index
    %c0_12 = arith.constant 0 : index
    %c0_13 = arith.constant 0 : index
    %11 = vector.load %arg6[%c0_11, %c0_12, %c0_13] : memref<1x1x128xf32, #tpu.memory_space<vmem>>, vector<1x1x128xf32>
    %12 = vector.shape_cast %11 : vector<1x1x128xf32> to vector<1x128xf32>
    %13 = vector.shape_cast %10 : vector<1x128xf32> to vector<1x1x128xf32>
    tpu.vector_store %arg6[%c0_11, %c0_12, %c0_13], %13 {strides = array<i32>} : memref<1x1x128xf32, #tpu.memory_space<vmem>>, vector<1x1x128xf32>,
    %14 = arith.mulf %2, %2 : vector<128x128xf32>
    %cst_14 = arith.constant dense<0.000000e+00> : vector<128xf32>
    %15 = vector.multi_reduction <add>, %14, %cst_14 [0] : vector<128x128xf32> to vector<128xf32>
    %16 = vector.shape_cast %15 : vector<128xf32> to vector<1x128xf32>
    %c0_15 = arith.constant 0 : index
    %c0_16 = arith.constant 0 : index
    %c0_17 = arith.constant 0 : index
    %17 = vector.load %arg7[%c0_15, %c0_16, %c0_17] : memref<1x1x128xf32, #tpu.memory_space<vmem>>, vector<1x1x128xf32>
    %18 = vector.shape_cast %17 : vector<1x1x128xf32> to vector<1x128xf32>
    %19 = vector.shape_cast %16 : vector<1x128xf32> to vector<1x1x128xf32>
    tpu.vector_store %arg7[%c0_15, %c0_16, %c0_17], %19 {strides = array<i32>} : memref<1x1x128xf32, #tpu.memory_space<vmem>>, vector<1x1x128xf32>,
    %cst_18 = arith.constant dense<0.000000e+00> : vector<128xf32>
    %20 = vector.multi_reduction <add>, %4, %cst_18 [0] : vector<128x128xf32> to vector<128xf32>
    %21 = vector.shape_cast %20 : vector<128xf32> to vector<1x128xf32>
    %c0_19 = arith.constant 0 : index
    %c0_20 = arith.constant 0 : index
    %c0_21 = arith.constant 0 : index
    %22 = vector.load %arg8[%c0_19, %c0_20, %c0_21] : memref<1x1x128xf32, #tpu.memory_space<vmem>>, vector<1x1x128xf32>
    %23 = vector.shape_cast %22 : vector<1x1x128xf32> to vector<1x128xf32>
    %24 = vector.shape_cast %21 : vector<1x128xf32> to vector<1x1x128xf32>
    tpu.vector_store %arg8[%c0_19, %c0_20, %c0_21], %24 {strides = array<i32>} : memref<1x1x128xf32, #tpu.memory_space<vmem>>, vector<1x1x128xf32>,
    %25 = arith.mulf %4, %4 : vector<128x128xf32>
    %cst_22 = arith.constant dense<0.000000e+00> : vector<128xf32>
    %26 = vector.multi_reduction <add>, %25, %cst_22 [0] : vector<128x128xf32> to vector<128xf32>
    %27 = vector.shape_cast %26 : vector<128xf32> to vector<1x128xf32>
    %c0_23 = arith.constant 0 : index
    %c0_24 = arith.constant 0 : index
    %c0_25 = arith.constant 0 : index
    %28 = vector.load %arg9[%c0_23, %c0_24, %c0_25] : memref<1x1x128xf32, #tpu.memory_space<vmem>>, vector<1x1x128xf32>
    %29 = vector.shape_cast %28 : vector<1x1x128xf32> to vector<1x128xf32>
    %30 = vector.shape_cast %27 : vector<1x128xf32> to vector<1x1x128xf32>
    tpu.vector_store %arg9[%c0_23, %c0_24, %c0_25], %30 {strides = array<i32>} : memref<1x1x128xf32, #tpu.memory_space<vmem>>, vector<1x1x128xf32>,
    return
  }
  func.func @transform_0(%arg0: i32) -> (i32, i32) {
    %c0_i32 = arith.constant 0 : i32
    %c0_i32_0 = arith.constant 0 : i32
    return %arg0, %c0_i32 : i32, i32
  }
  func.func @transform_1(%arg0: i32) -> (i32, i32) {
    %c0_i32 = arith.constant 0 : i32
    %c0_i32_0 = arith.constant 0 : i32
    %c0_i32_1 = arith.constant 0 : i32
    return %c0_i32, %c0_i32_0 : i32, i32
  }
  func.func @transform_2(%arg0: i32) -> (i32, i32) {
    %c0_i32 = arith.constant 0 : i32
    %c0_i32_0 = arith.constant 0 : i32
    %c0_i32_1 = arith.constant 0 : i32
    return %c0_i32, %c0_i32_0 : i32, i32
  }
  func.func @transform_3(%arg0: i32) -> (i32, i32) {
    %c0_i32 = arith.constant 0 : i32
    %c0_i32_0 = arith.constant 0 : i32
    return %arg0, %c0_i32 : i32, i32
  }
  func.func @transform_4(%arg0: i32) -> (i32, i32) {
    %c0_i32 = arith.constant 0 : i32
    %c0_i32_0 = arith.constant 0 : i32
    return %arg0, %c0_i32 : i32, i32
  }
  func.func @transform_5(%arg0: i32) -> (i32, i32, i32) {
    %c0_i32 = arith.constant 0 : i32
    %c0_i32_0 = arith.constant 0 : i32
    %c0_i32_1 = arith.constant 0 : i32
    return %arg0, %c0_i32, %c0_i32_0 : i32, i32, i32
  }
  func.func @transform_6(%arg0: i32) -> (i32, i32, i32) {
    %c0_i32 = arith.constant 0 : i32
    %c0_i32_0 = arith.constant 0 : i32
    %c0_i32_1 = arith.constant 0 : i32
    return %arg0, %c0_i32, %c0_i32_0 : i32, i32, i32
  }
  func.func @transform_7(%arg0: i32) -> (i32, i32, i32) {
    %c0_i32 = arith.constant 0 : i32
    %c0_i32_0 = arith.constant 0 : i32
    %c0_i32_1 = arith.constant 0 : i32
    return %arg0, %c0_i32, %c0_i32_0 : i32, i32, i32
  }
  func.func @transform_8(%arg0: i32) -> (i32, i32, i32) {
    %c0_i32 = arith.constant 0 : i32
    %c0_i32_0 = arith.constant 0 : i32
    %c0_i32_1 = arith.constant 0 : i32
    return %arg0, %c0_i32, %c0_i32_0 : i32, i32, i32
  }
}

module attributes {stable_mosaic.version = 11 : i64} {
  func.func @_conv2_kernel(%arg0: i32, %arg1: i32, %arg2: memref<1x16x16x128xbf16, #tpu.memory_space<vmem>>, %arg3: memref<1x128xf32, #tpu.memory_space<vmem>>, %arg4: memref<1x128xf32, #tpu.memory_space<vmem>>, %arg5: memref<1152x128xbf16, #tpu.memory_space<vmem>>, %arg6: memref<1x8x16x128xbf16, #tpu.memory_space<vmem>>, %arg7: memref<1x1x128xf32, #tpu.memory_space<vmem>>, %arg8: memref<1x1x128xf32, #tpu.memory_space<vmem>>, %arg9: memref<10x18x128xbf16, #tpu.memory_space<vmem>>, %arg10: memref<128x1152xbf16, #tpu.memory_space<vmem>>) attributes {dimension_semantics = [#tpu.dimension_semantics<parallel>, #tpu.dimension_semantics<parallel>], iteration_bounds = array<i64: 2, 2>, scalar_prefetch = 0 : i64, scratch_operands = 2 : i64, tpu.core_type = #tpu.core_type<tc>, window_params = [{transform_indices = @transform_0, window_bounds = array<i64: 1, 16, 16, 128>}, {pipeline_mode = #tpu.pipeline_mode<synchronous>, transform_indices = @transform_1, window_bounds = array<i64: 1, 128>}, {pipeline_mode = #tpu.pipeline_mode<synchronous>, transform_indices = @transform_2, window_bounds = array<i64: 1, 128>}, {pipeline_mode = #tpu.pipeline_mode<synchronous>, transform_indices = @transform_3, window_bounds = array<i64: 1152, 128>}, {transform_indices = @transform_4, window_bounds = array<i64: 1, 8, 16, 128>}, {transform_indices = @transform_5, window_bounds = array<i64: 1, 1, 128>}, {transform_indices = @transform_6, window_bounds = array<i64: 1, 1, 128>}]} {
    %c8_i32 = arith.constant 8 : i32
    %0 = arith.muli %arg1, %c8_i32 : i32
    %c0 = arith.constant 0 : index
    %c0_0 = arith.constant 0 : index
    %1 = vector.load %arg3[%c0, %c0_0] : memref<1x128xf32, #tpu.memory_space<vmem>>, vector<1x128xf32>
    %c0_1 = arith.constant 0 : index
    %c0_2 = arith.constant 0 : index
    %2 = vector.load %arg4[%c0_1, %c0_2] : memref<1x128xf32, #tpu.memory_space<vmem>>, vector<1x128xf32>
    %cst = arith.constant 0.000000e+00 : bf16
    %3 = vector.broadcast %cst : bf16 to vector<1x18x128xbf16>
    %cst_3 = arith.constant 0.000000e+00 : bf16
    %4 = vector.broadcast %cst_3 : bf16 to vector<10x1x128xbf16>
    %c0_4 = arith.constant 0 : index
    %c0_5 = arith.constant 0 : index
    %c0_6 = arith.constant 0 : index
    %5 = vector.load %arg9[%c0_4, %c0_5, %c0_6] : memref<10x18x128xbf16, #tpu.memory_space<vmem>>, vector<1x18x128xbf16>
    tpu.vector_store %arg9[%c0_4, %c0_5, %c0_6], %3 {strides = array<i32>} : memref<10x18x128xbf16, #tpu.memory_space<vmem>>, vector<1x18x128xbf16>,
    %c9 = arith.constant 9 : index
    %c0_7 = arith.constant 0 : index
    %c0_8 = arith.constant 0 : index
    %6 = vector.load %arg9[%c9, %c0_7, %c0_8] : memref<10x18x128xbf16, #tpu.memory_space<vmem>>, vector<1x18x128xbf16>
    tpu.vector_store %arg9[%c9, %c0_7, %c0_8], %3 {strides = array<i32>} : memref<10x18x128xbf16, #tpu.memory_space<vmem>>, vector<1x18x128xbf16>,
    %c0_9 = arith.constant 0 : index
    %c0_10 = arith.constant 0 : index
    %c0_11 = arith.constant 0 : index
    %7 = vector.load %arg9[%c0_9, %c0_10, %c0_11] : memref<10x18x128xbf16, #tpu.memory_space<vmem>>, vector<10x1x128xbf16>
    tpu.vector_store %arg9[%c0_9, %c0_10, %c0_11], %4 {strides = array<i32>} : memref<10x18x128xbf16, #tpu.memory_space<vmem>>, vector<10x1x128xbf16>,
    %c0_12 = arith.constant 0 : index
    %c17 = arith.constant 17 : index
    %c0_13 = arith.constant 0 : index
    %8 = vector.load %arg9[%c0_12, %c17, %c0_13] : memref<10x18x128xbf16, #tpu.memory_space<vmem>>, vector<10x1x128xbf16>
    tpu.vector_store %arg9[%c0_12, %c17, %c0_13], %4 {strides = array<i32>} : memref<10x18x128xbf16, #tpu.memory_space<vmem>>, vector<10x1x128xbf16>,
    %c0_14 = arith.constant 0 : index
    %9 = arith.index_cast %0 : i32 to index
    %c0_15 = arith.constant 0 : index
    %c0_16 = arith.constant 0 : index
    %10 = vector.load %arg2[%c0_14, %9, %c0_15, %c0_16] : memref<1x16x16x128xbf16, #tpu.memory_space<vmem>>, vector<1x8x16x128xbf16>
    %11 = vector.shape_cast %10 : vector<1x8x16x128xbf16> to vector<8x16x128xbf16>
    %12 = arith.extf %11 : vector<8x16x128xbf16> to vector<8x16x128xf32>
    %13 = vector.shape_cast %1 : vector<1x128xf32> to vector<1x1x128xf32>
    %14 = vector.broadcast %13 : vector<1x1x128xf32> to vector<8x16x128xf32>
    %15 = arith.mulf %12, %14 : vector<8x16x128xf32>
    %16 = vector.shape_cast %2 : vector<1x128xf32> to vector<1x1x128xf32>
    %17 = vector.broadcast %16 : vector<1x1x128xf32> to vector<8x16x128xf32>
    %18 = arith.addf %15, %17 : vector<8x16x128xf32>
    %cst_17 = arith.constant 0.000000e+00 : f32
    %19 = vector.broadcast %cst_17 : f32 to vector<8x16x128xf32>
    %20 = arith.maximumf %18, %19 : vector<8x16x128xf32>
    %21 = arith.truncf %20 : vector<8x16x128xf32> to vector<8x16x128xbf16>
    %c1 = arith.constant 1 : index
    %c1_18 = arith.constant 1 : index
    %c0_19 = arith.constant 0 : index
    %22 = vector.load %arg9[%c1, %c1_18, %c0_19] : memref<10x18x128xbf16, #tpu.memory_space<vmem>>, vector<8x16x128xbf16>
    tpu.vector_store %arg9[%c1, %c1_18, %c0_19], %21 {strides = array<i32>} : memref<10x18x128xbf16, #tpu.memory_space<vmem>>, vector<8x16x128xbf16>,
    %c0_i32 = arith.constant 0 : i32
    %23 = arith.cmpi sgt, %arg1, %c0_i32 : i32
    %24 = arith.extui %23 : i1 to i32
    %c0_i32_20 = arith.constant 0 : i32
    %25 = arith.cmpi ne, %24, %c0_i32_20 : i32
    scf.if %25 {
      %c1_i32_75 = arith.constant 1 : i32
      %75 = arith.subi %0, %c1_i32_75 : i32
      %c0_76 = arith.constant 0 : index
      %76 = arith.index_cast %75 : i32 to index
      %c0_77 = arith.constant 0 : index
      %c0_78 = arith.constant 0 : index
      %77 = vector.load %arg2[%c0_76, %76, %c0_77, %c0_78] : memref<1x16x16x128xbf16, #tpu.memory_space<vmem>>, vector<1x1x16x128xbf16>
      %78 = vector.shape_cast %77 : vector<1x1x16x128xbf16> to vector<1x16x128xbf16>
      %79 = arith.extf %78 : vector<1x16x128xbf16> to vector<1x16x128xf32>
      %80 = vector.shape_cast %1 : vector<1x128xf32> to vector<1x1x128xf32>
      %81 = vector.broadcast %80 : vector<1x1x128xf32> to vector<1x16x128xf32>
      %82 = arith.mulf %79, %81 : vector<1x16x128xf32>
      %83 = vector.shape_cast %2 : vector<1x128xf32> to vector<1x1x128xf32>
      %84 = vector.broadcast %83 : vector<1x1x128xf32> to vector<1x16x128xf32>
      %85 = arith.addf %82, %84 : vector<1x16x128xf32>
      %cst_79 = arith.constant 0.000000e+00 : f32
      %86 = vector.broadcast %cst_79 : f32 to vector<1x16x128xf32>
      %87 = arith.maximumf %85, %86 : vector<1x16x128xf32>
      %88 = arith.truncf %87 : vector<1x16x128xf32> to vector<1x16x128xbf16>
      %c0_80 = arith.constant 0 : index
      %c1_81 = arith.constant 1 : index
      %c0_82 = arith.constant 0 : index
      %89 = vector.load %arg9[%c0_80, %c1_81, %c0_82] : memref<10x18x128xbf16, #tpu.memory_space<vmem>>, vector<1x16x128xbf16>
      tpu.vector_store %arg9[%c0_80, %c1_81, %c0_82], %88 {strides = array<i32>} : memref<10x18x128xbf16, #tpu.memory_space<vmem>>, vector<1x16x128xbf16>,
    } else {
    }
    %c1_i32 = arith.constant 1 : i32
    %26 = arith.cmpi slt, %arg1, %c1_i32 : i32
    %27 = arith.extui %26 : i1 to i32
    %c0_i32_21 = arith.constant 0 : i32
    %28 = arith.cmpi ne, %27, %c0_i32_21 : i32
    scf.if %28 {
      %c8_i32_75 = arith.constant 8 : i32
      %75 = arith.addi %0, %c8_i32_75 : i32
      %c0_76 = arith.constant 0 : index
      %76 = arith.index_cast %75 : i32 to index
      %c0_77 = arith.constant 0 : index
      %c0_78 = arith.constant 0 : index
      %77 = vector.load %arg2[%c0_76, %76, %c0_77, %c0_78] : memref<1x16x16x128xbf16, #tpu.memory_space<vmem>>, vector<1x1x16x128xbf16>
      %78 = vector.shape_cast %77 : vector<1x1x16x128xbf16> to vector<1x16x128xbf16>
      %79 = arith.extf %78 : vector<1x16x128xbf16> to vector<1x16x128xf32>
      %80 = vector.shape_cast %1 : vector<1x128xf32> to vector<1x1x128xf32>
      %81 = vector.broadcast %80 : vector<1x1x128xf32> to vector<1x16x128xf32>
      %82 = arith.mulf %79, %81 : vector<1x16x128xf32>
      %83 = vector.shape_cast %2 : vector<1x128xf32> to vector<1x1x128xf32>
      %84 = vector.broadcast %83 : vector<1x1x128xf32> to vector<1x16x128xf32>
      %85 = arith.addf %82, %84 : vector<1x16x128xf32>
      %cst_79 = arith.constant 0.000000e+00 : f32
      %86 = vector.broadcast %cst_79 : f32 to vector<1x16x128xf32>
      %87 = arith.maximumf %85, %86 : vector<1x16x128xf32>
      %88 = arith.truncf %87 : vector<1x16x128xf32> to vector<1x16x128xbf16>
      %c9_80 = arith.constant 9 : index
      %c1_81 = arith.constant 1 : index
      %c0_82 = arith.constant 0 : index
      %89 = vector.load %arg9[%c9_80, %c1_81, %c0_82] : memref<10x18x128xbf16, #tpu.memory_space<vmem>>, vector<1x16x128xbf16>
      tpu.vector_store %arg9[%c9_80, %c1_81, %c0_82], %88 {strides = array<i32>} : memref<10x18x128xbf16, #tpu.memory_space<vmem>>, vector<1x16x128xbf16>,
    } else {
    }
    %c0_22 = arith.constant 0 : index
    %c0_23 = arith.constant 0 : index
    %c0_24 = arith.constant 0 : index
    %29 = vector.load %arg9[%c0_22, %c0_23, %c0_24] : memref<10x18x128xbf16, #tpu.memory_space<vmem>>, vector<8x16x128xbf16>
    %30 = vector.shape_cast %29 : vector<8x16x128xbf16> to vector<128x128xbf16>
    %c0_25 = arith.constant 0 : index
    %c0_26 = arith.constant 0 : index
    %31 = vector.load %arg10[%c0_25, %c0_26] : memref<128x1152xbf16, #tpu.memory_space<vmem>>, vector<128x128xbf16>
    tpu.vector_store %arg10[%c0_25, %c0_26], %30 {strides = array<i32>} : memref<128x1152xbf16, #tpu.memory_space<vmem>>, vector<128x128xbf16>,
    %c0_27 = arith.constant 0 : index
    %c1_28 = arith.constant 1 : index
    %c0_29 = arith.constant 0 : index
    %32 = vector.load %arg9[%c0_27, %c1_28, %c0_29] : memref<10x18x128xbf16, #tpu.memory_space<vmem>>, vector<8x16x128xbf16>
    %33 = vector.shape_cast %32 : vector<8x16x128xbf16> to vector<128x128xbf16>
    %c0_30 = arith.constant 0 : index
    %c128 = arith.constant 128 : index
    %34 = vector.load %arg10[%c0_30, %c128] : memref<128x1152xbf16, #tpu.memory_space<vmem>>, vector<128x128xbf16>
    tpu.vector_store %arg10[%c0_30, %c128], %33 {strides = array<i32>} : memref<128x1152xbf16, #tpu.memory_space<vmem>>, vector<128x128xbf16>,
    %c0_31 = arith.constant 0 : index
    %c2 = arith.constant 2 : index
    %c0_32 = arith.constant 0 : index
    %35 = vector.load %arg9[%c0_31, %c2, %c0_32] : memref<10x18x128xbf16, #tpu.memory_space<vmem>>, vector<8x16x128xbf16>
    %36 = vector.shape_cast %35 : vector<8x16x128xbf16> to vector<128x128xbf16>
    %c0_33 = arith.constant 0 : index
    %c256 = arith.constant 256 : index
    %37 = vector.load %arg10[%c0_33, %c256] : memref<128x1152xbf16, #tpu.memory_space<vmem>>, vector<128x128xbf16>
    tpu.vector_store %arg10[%c0_33, %c256], %36 {strides = array<i32>} : memref<128x1152xbf16, #tpu.memory_space<vmem>>, vector<128x128xbf16>,
    %c1_34 = arith.constant 1 : index
    %c0_35 = arith.constant 0 : index
    %c0_36 = arith.constant 0 : index
    %38 = vector.load %arg9[%c1_34, %c0_35, %c0_36] : memref<10x18x128xbf16, #tpu.memory_space<vmem>>, vector<8x16x128xbf16>
    %39 = vector.shape_cast %38 : vector<8x16x128xbf16> to vector<128x128xbf16>
    %c0_37 = arith.constant 0 : index
    %c384 = arith.constant 384 : index
    %40 = vector.load %arg10[%c0_37, %c384] : memref<128x1152xbf16, #tpu.memory_space<vmem>>, vector<128x128xbf16>
    tpu.vector_store %arg10[%c0_37, %c384], %39 {strides = array<i32>} : memref<128x1152xbf16, #tpu.memory_space<vmem>>, vector<128x128xbf16>,
    %c1_38 = arith.constant 1 : index
    %c1_39 = arith.constant 1 : index
    %c0_40 = arith.constant 0 : index
    %41 = vector.load %arg9[%c1_38, %c1_39, %c0_40] : memref<10x18x128xbf16, #tpu.memory_space<vmem>>, vector<8x16x128xbf16>
    %42 = vector.shape_cast %41 : vector<8x16x128xbf16> to vector<128x128xbf16>
    %c0_41 = arith.constant 0 : index
    %c512 = arith.constant 512 : index
    %43 = vector.load %arg10[%c0_41, %c512] : memref<128x1152xbf16, #tpu.memory_space<vmem>>, vector<128x128xbf16>
    tpu.vector_store %arg10[%c0_41, %c512], %42 {strides = array<i32>} : memref<128x1152xbf16, #tpu.memory_space<vmem>>, vector<128x128xbf16>,
    %c1_42 = arith.constant 1 : index
    %c2_43 = arith.constant 2 : index
    %c0_44 = arith.constant 0 : index
    %44 = vector.load %arg9[%c1_42, %c2_43, %c0_44] : memref<10x18x128xbf16, #tpu.memory_space<vmem>>, vector<8x16x128xbf16>
    %45 = vector.shape_cast %44 : vector<8x16x128xbf16> to vector<128x128xbf16>
    %c0_45 = arith.constant 0 : index
    %c640 = arith.constant 640 : index
    %46 = vector.load %arg10[%c0_45, %c640] : memref<128x1152xbf16, #tpu.memory_space<vmem>>, vector<128x128xbf16>
    tpu.vector_store %arg10[%c0_45, %c640], %45 {strides = array<i32>} : memref<128x1152xbf16, #tpu.memory_space<vmem>>, vector<128x128xbf16>,
    %c2_46 = arith.constant 2 : index
    %c0_47 = arith.constant 0 : index
    %c0_48 = arith.constant 0 : index
    %47 = vector.load %arg9[%c2_46, %c0_47, %c0_48] : memref<10x18x128xbf16, #tpu.memory_space<vmem>>, vector<8x16x128xbf16>
    %48 = vector.shape_cast %47 : vector<8x16x128xbf16> to vector<128x128xbf16>
    %c0_49 = arith.constant 0 : index
    %c768 = arith.constant 768 : index
    %49 = vector.load %arg10[%c0_49, %c768] : memref<128x1152xbf16, #tpu.memory_space<vmem>>, vector<128x128xbf16>
    tpu.vector_store %arg10[%c0_49, %c768], %48 {strides = array<i32>} : memref<128x1152xbf16, #tpu.memory_space<vmem>>, vector<128x128xbf16>,
    %c2_50 = arith.constant 2 : index
    %c1_51 = arith.constant 1 : index
    %c0_52 = arith.constant 0 : index
    %50 = vector.load %arg9[%c2_50, %c1_51, %c0_52] : memref<10x18x128xbf16, #tpu.memory_space<vmem>>, vector<8x16x128xbf16>
    %51 = vector.shape_cast %50 : vector<8x16x128xbf16> to vector<128x128xbf16>
    %c0_53 = arith.constant 0 : index
    %c896 = arith.constant 896 : index
    %52 = vector.load %arg10[%c0_53, %c896] : memref<128x1152xbf16, #tpu.memory_space<vmem>>, vector<128x128xbf16>
    tpu.vector_store %arg10[%c0_53, %c896], %51 {strides = array<i32>} : memref<128x1152xbf16, #tpu.memory_space<vmem>>, vector<128x128xbf16>,
    %c2_54 = arith.constant 2 : index
    %c2_55 = arith.constant 2 : index
    %c0_56 = arith.constant 0 : index
    %53 = vector.load %arg9[%c2_54, %c2_55, %c0_56] : memref<10x18x128xbf16, #tpu.memory_space<vmem>>, vector<8x16x128xbf16>
    %54 = vector.shape_cast %53 : vector<8x16x128xbf16> to vector<128x128xbf16>
    %c0_57 = arith.constant 0 : index
    %c1024 = arith.constant 1024 : index
    %55 = vector.load %arg10[%c0_57, %c1024] : memref<128x1152xbf16, #tpu.memory_space<vmem>>, vector<128x128xbf16>
    tpu.vector_store %arg10[%c0_57, %c1024], %54 {strides = array<i32>} : memref<128x1152xbf16, #tpu.memory_space<vmem>>, vector<128x128xbf16>,
    %c0_58 = arith.constant 0 : index
    %c0_59 = arith.constant 0 : index
    %56 = vector.load %arg10[%c0_58, %c0_59] : memref<128x1152xbf16, #tpu.memory_space<vmem>>, vector<128x1152xbf16>
    %c0_60 = arith.constant 0 : index
    %c0_61 = arith.constant 0 : index
    %57 = vector.load %arg5[%c0_60, %c0_61] : memref<1152x128xbf16, #tpu.memory_space<vmem>>, vector<1152x128xbf16>
    %cst_62 = arith.constant dense<0.000000e+00> : vector<128x128xf32>
    %58 = tpu.matmul %56, %57, %cst_62 {dimension_numbers = #tpu.dot_dimension_numbers<[1], [0], [0], [1], [0, 0, 1, 1], [], []>} : vector<128x1152xbf16>, vector<1152x128xbf16>, vector<128x128xf32> -> vector<128x128xf32>
    %59 = vector.shape_cast %58 : vector<128x128xf32> to vector<8x16x128xf32>
    %60 = arith.truncf %59 : vector<8x16x128xf32> to vector<8x16x128xbf16>
    %c0_63 = arith.constant 0 : index
    %c0_64 = arith.constant 0 : index
    %c0_65 = arith.constant 0 : index
    %c0_66 = arith.constant 0 : index
    %61 = vector.load %arg6[%c0_63, %c0_64, %c0_65, %c0_66] : memref<1x8x16x128xbf16, #tpu.memory_space<vmem>>, vector<1x8x16x128xbf16>
    %62 = vector.shape_cast %61 : vector<1x8x16x128xbf16> to vector<8x16x128xbf16>
    %63 = vector.shape_cast %60 : vector<8x16x128xbf16> to vector<1x8x16x128xbf16>
    tpu.vector_store %arg6[%c0_63, %c0_64, %c0_65, %c0_66], %63 {strides = array<i32>} : memref<1x8x16x128xbf16, #tpu.memory_space<vmem>>, vector<1x8x16x128xbf16>,
    %cst_67 = arith.constant dense<0.000000e+00> : vector<128xf32>
    %64 = vector.multi_reduction <add>, %58, %cst_67 [0] : vector<128x128xf32> to vector<128xf32>
    %65 = vector.shape_cast %64 : vector<128xf32> to vector<1x128xf32>
    %c0_68 = arith.constant 0 : index
    %c0_69 = arith.constant 0 : index
    %c0_70 = arith.constant 0 : index
    %66 = vector.load %arg7[%c0_68, %c0_69, %c0_70] : memref<1x1x128xf32, #tpu.memory_space<vmem>>, vector<1x1x128xf32>
    %67 = vector.shape_cast %66 : vector<1x1x128xf32> to vector<1x128xf32>
    %68 = vector.shape_cast %65 : vector<1x128xf32> to vector<1x1x128xf32>
    tpu.vector_store %arg7[%c0_68, %c0_69, %c0_70], %68 {strides = array<i32>} : memref<1x1x128xf32, #tpu.memory_space<vmem>>, vector<1x1x128xf32>,
    %69 = arith.mulf %58, %58 : vector<128x128xf32>
    %cst_71 = arith.constant dense<0.000000e+00> : vector<128xf32>
    %70 = vector.multi_reduction <add>, %69, %cst_71 [0] : vector<128x128xf32> to vector<128xf32>
    %71 = vector.shape_cast %70 : vector<128xf32> to vector<1x128xf32>
    %c0_72 = arith.constant 0 : index
    %c0_73 = arith.constant 0 : index
    %c0_74 = arith.constant 0 : index
    %72 = vector.load %arg8[%c0_72, %c0_73, %c0_74] : memref<1x1x128xf32, #tpu.memory_space<vmem>>, vector<1x1x128xf32>
    %73 = vector.shape_cast %72 : vector<1x1x128xf32> to vector<1x128xf32>
    %74 = vector.shape_cast %71 : vector<1x128xf32> to vector<1x1x128xf32>
    tpu.vector_store %arg8[%c0_72, %c0_73, %c0_74], %74 {strides = array<i32>} : memref<1x1x128xf32, #tpu.memory_space<vmem>>, vector<1x1x128xf32>,
    return
  }
  func.func @transform_0(%arg0: i32, %arg1: i32) -> (i32, i32, i32, i32) {
    %c0_i32 = arith.constant 0 : i32
    %c0_i32_0 = arith.constant 0 : i32
    %c0_i32_1 = arith.constant 0 : i32
    %c0_i32_2 = arith.constant 0 : i32
    return %arg0, %c0_i32, %c0_i32_0, %c0_i32_1 : i32, i32, i32, i32
  }
  func.func @transform_1(%arg0: i32, %arg1: i32) -> (i32, i32) {
    %c0_i32 = arith.constant 0 : i32
    %c0_i32_0 = arith.constant 0 : i32
    %c0_i32_1 = arith.constant 0 : i32
    return %c0_i32, %c0_i32_0 : i32, i32
  }
  func.func @transform_2(%arg0: i32, %arg1: i32) -> (i32, i32) {
    %c0_i32 = arith.constant 0 : i32
    %c0_i32_0 = arith.constant 0 : i32
    %c0_i32_1 = arith.constant 0 : i32
    return %c0_i32, %c0_i32_0 : i32, i32
  }
  func.func @transform_3(%arg0: i32, %arg1: i32) -> (i32, i32) {
    %c0_i32 = arith.constant 0 : i32
    %c0_i32_0 = arith.constant 0 : i32
    %c0_i32_1 = arith.constant 0 : i32
    return %c0_i32, %c0_i32_0 : i32, i32
  }
  func.func @transform_4(%arg0: i32, %arg1: i32) -> (i32, i32, i32, i32) {
    %c0_i32 = arith.constant 0 : i32
    %c0_i32_0 = arith.constant 0 : i32
    %c0_i32_1 = arith.constant 0 : i32
    return %arg0, %arg1, %c0_i32, %c0_i32_0 : i32, i32, i32, i32
  }
  func.func @transform_5(%arg0: i32, %arg1: i32) -> (i32, i32, i32) {
    %c2_i32 = arith.constant 2 : i32
    %0 = arith.muli %arg0, %c2_i32 : i32
    %1 = arith.addi %0, %arg1 : i32
    %c0_i32 = arith.constant 0 : i32
    %c0_i32_0 = arith.constant 0 : i32
    %c0_i32_1 = arith.constant 0 : i32
    return %1, %c0_i32, %c0_i32_0 : i32, i32, i32
  }
  func.func @transform_6(%arg0: i32, %arg1: i32) -> (i32, i32, i32) {
    %c2_i32 = arith.constant 2 : i32
    %0 = arith.muli %arg0, %c2_i32 : i32
    %1 = arith.addi %0, %arg1 : i32
    %c0_i32 = arith.constant 0 : i32
    %c0_i32_0 = arith.constant 0 : i32
    %c0_i32_1 = arith.constant 0 : i32
    return %1, %c0_i32, %c0_i32_0 : i32, i32, i32
  }
}

module attributes {stable_mosaic.version = 11 : i64} {
  func.func @_conv3_kernel(%arg0: i32, %arg1: memref<128x128xbf16, #tpu.memory_space<vmem>>, %arg2: memref<1x128xf32, #tpu.memory_space<vmem>>, %arg3: memref<1x128xf32, #tpu.memory_space<vmem>>, %arg4: memref<128x128xbf16, #tpu.memory_space<vmem>>, %arg5: memref<128x128xbf16, #tpu.memory_space<vmem>>, %arg6: memref<1x1x128xf32, #tpu.memory_space<vmem>>, %arg7: memref<1x1x128xf32, #tpu.memory_space<vmem>>) attributes {dimension_semantics = [#tpu.dimension_semantics<parallel>], iteration_bounds = array<i64: 4>, scalar_prefetch = 0 : i64, scratch_operands = 0 : i64, tpu.core_type = #tpu.core_type<tc>, window_params = [{transform_indices = @transform_0, window_bounds = array<i64: 128, 128>}, {pipeline_mode = #tpu.pipeline_mode<synchronous>, transform_indices = @transform_1, window_bounds = array<i64: 1, 128>}, {pipeline_mode = #tpu.pipeline_mode<synchronous>, transform_indices = @transform_2, window_bounds = array<i64: 1, 128>}, {pipeline_mode = #tpu.pipeline_mode<synchronous>, transform_indices = @transform_3, window_bounds = array<i64: 128, 128>}, {transform_indices = @transform_4, window_bounds = array<i64: 128, 128>}, {transform_indices = @transform_5, window_bounds = array<i64: 1, 1, 128>}, {transform_indices = @transform_6, window_bounds = array<i64: 1, 1, 128>}]} {
    %c0 = arith.constant 0 : index
    %c0_0 = arith.constant 0 : index
    %0 = vector.load %arg1[%c0, %c0_0] : memref<128x128xbf16, #tpu.memory_space<vmem>>, vector<128x128xbf16>
    %1 = arith.extf %0 : vector<128x128xbf16> to vector<128x128xf32>
    %c0_1 = arith.constant 0 : index
    %c0_2 = arith.constant 0 : index
    %2 = vector.load %arg2[%c0_1, %c0_2] : memref<1x128xf32, #tpu.memory_space<vmem>>, vector<1x128xf32>
    %3 = vector.broadcast %2 : vector<1x128xf32> to vector<128x128xf32>
    %4 = arith.mulf %1, %3 : vector<128x128xf32>
    %c0_3 = arith.constant 0 : index
    %c0_4 = arith.constant 0 : index
    %5 = vector.load %arg3[%c0_3, %c0_4] : memref<1x128xf32, #tpu.memory_space<vmem>>, vector<1x128xf32>
    %6 = vector.broadcast %5 : vector<1x128xf32> to vector<128x128xf32>
    %7 = arith.addf %4, %6 : vector<128x128xf32>
    %cst = arith.constant 0.000000e+00 : f32
    %8 = vector.broadcast %cst : f32 to vector<128x128xf32>
    %9 = arith.maximumf %7, %8 : vector<128x128xf32>
    %10 = arith.truncf %9 : vector<128x128xf32> to vector<128x128xbf16>
    %c0_5 = arith.constant 0 : index
    %c0_6 = arith.constant 0 : index
    %11 = vector.load %arg4[%c0_5, %c0_6] : memref<128x128xbf16, #tpu.memory_space<vmem>>, vector<128x128xbf16>
    %cst_7 = arith.constant dense<0.000000e+00> : vector<128x128xf32>
    %12 = tpu.matmul %10, %11, %cst_7 {dimension_numbers = #tpu.dot_dimension_numbers<[1], [0], [0], [1], [0, 0, 1, 1], [], []>} : vector<128x128xbf16>, vector<128x128xbf16>, vector<128x128xf32> -> vector<128x128xf32>
    %13 = arith.truncf %12 : vector<128x128xf32> to vector<128x128xbf16>
    %c0_8 = arith.constant 0 : index
    %c0_9 = arith.constant 0 : index
    %14 = vector.load %arg5[%c0_8, %c0_9] : memref<128x128xbf16, #tpu.memory_space<vmem>>, vector<128x128xbf16>
    tpu.vector_store %arg5[%c0_8, %c0_9], %13 {strides = array<i32>} : memref<128x128xbf16, #tpu.memory_space<vmem>>, vector<128x128xbf16>,
    %cst_10 = arith.constant dense<0.000000e+00> : vector<128xf32>
    %15 = vector.multi_reduction <add>, %12, %cst_10 [0] : vector<128x128xf32> to vector<128xf32>
    %16 = vector.shape_cast %15 : vector<128xf32> to vector<1x128xf32>
    %c0_11 = arith.constant 0 : index
    %c0_12 = arith.constant 0 : index
    %c0_13 = arith.constant 0 : index
    %17 = vector.load %arg6[%c0_11, %c0_12, %c0_13] : memref<1x1x128xf32, #tpu.memory_space<vmem>>, vector<1x1x128xf32>
    %18 = vector.shape_cast %17 : vector<1x1x128xf32> to vector<1x128xf32>
    %19 = vector.shape_cast %16 : vector<1x128xf32> to vector<1x1x128xf32>
    tpu.vector_store %arg6[%c0_11, %c0_12, %c0_13], %19 {strides = array<i32>} : memref<1x1x128xf32, #tpu.memory_space<vmem>>, vector<1x1x128xf32>,
    %20 = arith.mulf %12, %12 : vector<128x128xf32>
    %cst_14 = arith.constant dense<0.000000e+00> : vector<128xf32>
    %21 = vector.multi_reduction <add>, %20, %cst_14 [0] : vector<128x128xf32> to vector<128xf32>
    %22 = vector.shape_cast %21 : vector<128xf32> to vector<1x128xf32>
    %c0_15 = arith.constant 0 : index
    %c0_16 = arith.constant 0 : index
    %c0_17 = arith.constant 0 : index
    %23 = vector.load %arg7[%c0_15, %c0_16, %c0_17] : memref<1x1x128xf32, #tpu.memory_space<vmem>>, vector<1x1x128xf32>
    %24 = vector.shape_cast %23 : vector<1x1x128xf32> to vector<1x128xf32>
    %25 = vector.shape_cast %22 : vector<1x128xf32> to vector<1x1x128xf32>
    tpu.vector_store %arg7[%c0_15, %c0_16, %c0_17], %25 {strides = array<i32>} : memref<1x1x128xf32, #tpu.memory_space<vmem>>, vector<1x1x128xf32>,
    return
  }
  func.func @transform_0(%arg0: i32) -> (i32, i32) {
    %c0_i32 = arith.constant 0 : i32
    %c0_i32_0 = arith.constant 0 : i32
    return %arg0, %c0_i32 : i32, i32
  }
  func.func @transform_1(%arg0: i32) -> (i32, i32) {
    %c0_i32 = arith.constant 0 : i32
    %c0_i32_0 = arith.constant 0 : i32
    %c0_i32_1 = arith.constant 0 : i32
    return %c0_i32, %c0_i32_0 : i32, i32
  }
  func.func @transform_2(%arg0: i32) -> (i32, i32) {
    %c0_i32 = arith.constant 0 : i32
    %c0_i32_0 = arith.constant 0 : i32
    %c0_i32_1 = arith.constant 0 : i32
    return %c0_i32, %c0_i32_0 : i32, i32
  }
  func.func @transform_3(%arg0: i32) -> (i32, i32) {
    %c0_i32 = arith.constant 0 : i32
    %c0_i32_0 = arith.constant 0 : i32
    %c0_i32_1 = arith.constant 0 : i32
    return %c0_i32, %c0_i32_0 : i32, i32
  }
  func.func @transform_4(%arg0: i32) -> (i32, i32) {
    %c0_i32 = arith.constant 0 : i32
    %c0_i32_0 = arith.constant 0 : i32
    return %arg0, %c0_i32 : i32, i32
  }
  func.func @transform_5(%arg0: i32) -> (i32, i32, i32) {
    %c0_i32 = arith.constant 0 : i32
    %c0_i32_0 = arith.constant 0 : i32
    %c0_i32_1 = arith.constant 0 : i32
    return %arg0, %c0_i32, %c0_i32_0 : i32, i32, i32
  }
  func.func @transform_6(%arg0: i32) -> (i32, i32, i32) {
    %c0_i32 = arith.constant 0 : i32
    %c0_i32_0 = arith.constant 0 : i32
    %c0_i32_1 = arith.constant 0 : i32
    return %arg0, %c0_i32, %c0_i32_0 : i32, i32, i32
  }
}

module attributes {stable_mosaic.version = 11 : i64} {
  func.func @_finalize_kernel(%arg0: i32, %arg1: memref<128x128xbf16, #tpu.memory_space<vmem>>, %arg2: memref<128x128xbf16, #tpu.memory_space<vmem>>, %arg3: memref<1x128xf32, #tpu.memory_space<vmem>>, %arg4: memref<1x128xf32, #tpu.memory_space<vmem>>, %arg5: memref<1x128xf32, #tpu.memory_space<vmem>>, %arg6: memref<1x128xf32, #tpu.memory_space<vmem>>, %arg7: memref<128x128xf32, #tpu.memory_space<vmem>>) attributes {dimension_semantics = [#tpu.dimension_semantics<parallel>], iteration_bounds = array<i64: 4>, scalar_prefetch = 0 : i64, scratch_operands = 0 : i64, tpu.core_type = #tpu.core_type<tc>, window_params = [{transform_indices = @transform_0, window_bounds = array<i64: 128, 128>}, {transform_indices = @transform_1, window_bounds = array<i64: 128, 128>}, {pipeline_mode = #tpu.pipeline_mode<synchronous>, transform_indices = @transform_2, window_bounds = array<i64: 1, 128>}, {pipeline_mode = #tpu.pipeline_mode<synchronous>, transform_indices = @transform_3, window_bounds = array<i64: 1, 128>}, {pipeline_mode = #tpu.pipeline_mode<synchronous>, transform_indices = @transform_4, window_bounds = array<i64: 1, 128>}, {pipeline_mode = #tpu.pipeline_mode<synchronous>, transform_indices = @transform_5, window_bounds = array<i64: 1, 128>}, {transform_indices = @transform_6, window_bounds = array<i64: 128, 128>}]} {
    %c0 = arith.constant 0 : index
    %c0_0 = arith.constant 0 : index
    %0 = vector.load %arg1[%c0, %c0_0] : memref<128x128xbf16, #tpu.memory_space<vmem>>, vector<128x128xbf16>
    %1 = arith.extf %0 : vector<128x128xbf16> to vector<128x128xf32>
    %c0_1 = arith.constant 0 : index
    %c0_2 = arith.constant 0 : index
    %2 = vector.load %arg3[%c0_1, %c0_2] : memref<1x128xf32, #tpu.memory_space<vmem>>, vector<1x128xf32>
    %3 = vector.broadcast %2 : vector<1x128xf32> to vector<128x128xf32>
    %4 = arith.mulf %1, %3 : vector<128x128xf32>
    %c0_3 = arith.constant 0 : index
    %c0_4 = arith.constant 0 : index
    %5 = vector.load %arg4[%c0_3, %c0_4] : memref<1x128xf32, #tpu.memory_space<vmem>>, vector<1x128xf32>
    %6 = vector.broadcast %5 : vector<1x128xf32> to vector<128x128xf32>
    %7 = arith.addf %4, %6 : vector<128x128xf32>
    %c0_5 = arith.constant 0 : index
    %c0_6 = arith.constant 0 : index
    %8 = vector.load %arg2[%c0_5, %c0_6] : memref<128x128xbf16, #tpu.memory_space<vmem>>, vector<128x128xbf16>
    %9 = arith.extf %8 : vector<128x128xbf16> to vector<128x128xf32>
    %c0_7 = arith.constant 0 : index
    %c0_8 = arith.constant 0 : index
    %10 = vector.load %arg5[%c0_7, %c0_8] : memref<1x128xf32, #tpu.memory_space<vmem>>, vector<1x128xf32>
    %11 = vector.broadcast %10 : vector<1x128xf32> to vector<128x128xf32>
    %12 = arith.mulf %9, %11 : vector<128x128xf32>
    %c0_9 = arith.constant 0 : index
    %c0_10 = arith.constant 0 : index
    %13 = vector.load %arg6[%c0_9, %c0_10] : memref<1x128xf32, #tpu.memory_space<vmem>>, vector<1x128xf32>
    %14 = vector.broadcast %13 : vector<1x128xf32> to vector<128x128xf32>
    %15 = arith.addf %12, %14 : vector<128x128xf32>
    %16 = arith.addf %7, %15 : vector<128x128xf32>
    %cst = arith.constant 0.000000e+00 : f32
    %17 = vector.broadcast %cst : f32 to vector<128x128xf32>
    %18 = arith.maximumf %16, %17 : vector<128x128xf32>
    %c0_11 = arith.constant 0 : index
    %c0_12 = arith.constant 0 : index
    %19 = vector.load %arg7[%c0_11, %c0_12] : memref<128x128xf32, #tpu.memory_space<vmem>>, vector<128x128xf32>
    tpu.vector_store %arg7[%c0_11, %c0_12], %18 {strides = array<i32>} : memref<128x128xf32, #tpu.memory_space<vmem>>, vector<128x128xf32>,
    return
  }
  func.func @transform_0(%arg0: i32) -> (i32, i32) {
    %c0_i32 = arith.constant 0 : i32
    %c0_i32_0 = arith.constant 0 : i32
    return %arg0, %c0_i32 : i32, i32
  }
  func.func @transform_1(%arg0: i32) -> (i32, i32) {
    %c0_i32 = arith.constant 0 : i32
    %c0_i32_0 = arith.constant 0 : i32
    return %arg0, %c0_i32 : i32, i32
  }
  func.func @transform_2(%arg0: i32) -> (i32, i32) {
    %c0_i32 = arith.constant 0 : i32
    %c0_i32_0 = arith.constant 0 : i32
    %c0_i32_1 = arith.constant 0 : i32
    return %c0_i32, %c0_i32_0 : i32, i32
  }
  func.func @transform_3(%arg0: i32) -> (i32, i32) {
    %c0_i32 = arith.constant 0 : i32
    %c0_i32_0 = arith.constant 0 : i32
    %c0_i32_1 = arith.constant 0 : i32
    return %c0_i32, %c0_i32_0 : i32, i32
  }
  func.func @transform_4(%arg0: i32) -> (i32, i32) {
    %c0_i32 = arith.constant 0 : i32
    %c0_i32_0 = arith.constant 0 : i32
    %c0_i32_1 = arith.constant 0 : i32
    return %c0_i32, %c0_i32_0 : i32, i32
  }
  func.func @transform_5(%arg0: i32) -> (i32, i32) {
    %c0_i32 = arith.constant 0 : i32
    %c0_i32_0 = arith.constant 0 : i32
    %c0_i32_1 = arith.constant 0 : i32
    return %c0_i32, %c0_i32_0 : i32, i32
  }
  func.func @transform_6(%arg0: i32) -> (i32, i32) {
    %c0_i32 = arith.constant 0 : i32
    %c0_i32_0 = arith.constant 0 : i32
    return %arg0, %c0_i32 : i32, i32
  }
}

</mosaic_0001>

<llo_original>
// kernel: residual_bottleneck_block.6
$region0: #{residual_bottleneck_block.6}
  #allocation0 [shape = 'u32[]', space=smem, size = 0x4, offset = 0x4, fixed_abs, tag = 'smem constant byte address 0x4 - core index']
  #allocation1 [shape = 'u32[144,128]{1,0:T(1,128)}', space=vmem, size = 0x12000, scoped, tag = 'internal scratch']
  %s0 = inlined_call_operand.vmem [shape: bf16[512,128], index: 0, kind: input, shape index: {}]
  %s1 = inlined_call_operand.vmem [shape: f32[1,128], index: 1, kind: input, shape index: {}]
  %s2 = inlined_call_operand.vmem [shape: f32[1,128], index: 2, kind: input, shape index: {}]
  %s3 = inlined_call_operand.vmem [shape: bf16[128,128], index: 3, kind: input, shape index: {}]
  %s4 = inlined_call_operand.vmem [shape: bf16[512,128], index: 4, kind: output, shape index: {0}]
  %s5 = inlined_call_operand.vmem [shape: f32[4,1,128], index: 5, kind: output, shape index: {1}]
  %s6 = inlined_call_operand.vmem [shape: f32[4,1,128], index: 6, kind: output, shape index: {2}]
  %7 = xla_tuple %s4, %s5, %s6
  %s8 = sld [smem:[#allocation0]]
  $region65: #{residual_bottleneck_block.6} parent=0
    _
  %s10 = ssub.s32 1, %s8
  %s11 = scalar_select 0, %s10, %s8
  loop: start=0, step=1, limit=6
  $region2: #{residual_bottleneck_block.6} parent=0 // loop_pre_header
    _
  $region3: #{residual_bottleneck_block.6} parent=0 // loop_header
    %s13 = sphi 0, %s17
    %p14 = scmp.ge.s32.totalorder %s13, 6
    %s23 = sphi 0, %s25
    %s26 = sphi 0, %s23
    %s27 = sphi 0, %s26
    %s43 = sphi 0, %s27
    %s47 = sphi 0, %s47
    %s49 = sphi 0, %s47
    %s50 = sphi 0, %s49
    %s64 = sphi 0, %s50
    %s68 = sphi 0, %s68
    %s70 = sphi 0, %s68
    %s71 = sphi 0, %s70
    %s85 = sphi 0, %s71
    %s89 = sphi 0, %s89
    %s91 = sphi 0, %s89
    %s92 = sphi 0, %s91
    %s106 = sphi 0, %s92
    %s112 = sphi 0, %s114
    %s115 = sphi 0, %s112
    %s116 = sphi 0, %s115
    %s132 = sphi 0, %s116
    %s138 = sphi 0, %s140
    %s141 = sphi 0, %s138
    %s142 = sphi 0, %s141
    %s158 = sphi 0, %s142
    %s164 = sphi 0, %s166
    %s167 = sphi 0, %s164
    %s168 = sphi 0, %s167
    %s184 = sphi 0, %s168
  $region4: #{residual_bottleneck_block.6} parent=0 // loop_header_branch
    %16 = sbr.rel (%p14) target = $region8
  $region5: #{residual_bottleneck_block.6} parent=0 // loop_body
    %s18 = ssub.s32 %s13, 1
    %s19 = ssub.s32 %s13, 2
    %s20 = sadd.s32 %s13, 1
    %s21 = ssub.s32 %s13, %s20
    %p22 = scmp.eq.s32.totalorder %s21, 0
    %s24 = sadd.s32 %s23, 1
    %s25 = scalar_select %p22, %s23, %s24
    %p28 = pneg %p22
    %p29 = scmp.eq.s32.totalorder %s13, 3
    %p30 = por %p28, %p29
    %p31 = scmp.ne.s32.totalorder %s23, %s26
    %p32 = scmp.eq.s32.totalorder %s13, 0
    %p33 = por %p31, %p32
    %p34 = scmp.ne.s32.totalorder %s23, %s26
    %p35 = scmp.eq.s32.totalorder %s18, 3
    %p36 = por %p34, %p35
    %p37 = scmp.ne.s32.totalorder %s26, %s27
    %p38 = scmp.eq.s32.totalorder %s18, 0
    %p39 = por %p37, %p38
    %p40 = scmp.ne.s32.totalorder %s26, %s27
    %p41 = scmp.eq.s32.totalorder %s19, 3
    %p42 = por %p40, %p41
    %p44 = scmp.ne.s32.totalorder %s27, %s43
    %p45 = scmp.eq.s32.totalorder %s19, 0
    %p46 = por %p44, %p45
    %s48 = sadd.s32 %s47, 1
    %p51 = scmp.eq.s32.totalorder %s13, 3
    %p52 = scmp.ne.s32.totalorder %s47, %s49
    %p53 = scmp.eq.s32.totalorder %s13, 0
    %p54 = por %p52, %p53
    %p55 = scmp.ne.s32.totalorder %s47, %s49
    %p56 = scmp.eq.s32.totalorder %s18, 3
    %p57 = por %p55, %p56
    %p58 = scmp.ne.s32.totalorder %s49, %s50
    %p59 = scmp.eq.s32.totalorder %s18, 0
    %p60 = por %p58, %p59
    %p61 = scmp.ne.s32.totalorder %s49, %s50
    %p62 = scmp.eq.s32.totalorder %s19, 3
    %p63 = por %p61, %p62
    %p65 = scmp.ne.s32.totalorder %s50, %s64
    %p66 = scmp.eq.s32.totalorder %s19, 0
    %p67 = por %p65, %p66
    %s69 = sadd.s32 %s68, 1
    %p72 = scmp.eq.s32.totalorder %s13, 3
    %p73 = scmp.ne.s32.totalorder %s68, %s70
    %p74 = scmp.eq.s32.totalorder %s13, 0
    %p75 = por %p73, %p74
    %p76 = scmp.ne.s32.totalorder %s68, %s70
    %p77 = scmp.eq.s32.totalorder %s18, 3
    %p78 = por %p76, %p77
    %p79 = scmp.ne.s32.totalorder %s70, %s71
    %p80 = scmp.eq.s32.totalorder %s18, 0
    %p81 = por %p79, %p80
    %p82 = scmp.ne.s32.totalorder %s70, %s71
    %p83 = scmp.eq.s32.totalorder %s19, 3
    %p84 = por %p82, %p83
    %p86 = scmp.ne.s32.totalorder %s71, %s85
    %p87 = scmp.eq.s32.totalorder %s19, 0
    %p88 = por %p86, %p87
    %s90 = sadd.s32 %s89, 1
    %p93 = scmp.eq.s32.totalorder %s13, 3
    %p94 = scmp.ne.s32.totalorder %s89, %s91
    %p95 = scmp.eq.s32.totalorder %s13, 0
    %p96 = por %p94, %p95
    %p97 = scmp.ne.s32.totalorder %s89, %s91
    %p98 = scmp.eq.s32.totalorder %s18, 3
    %p99 = por %p97, %p98
    %p100 = scmp.ne.s32.totalorder %s91, %s92
    %p101 = scmp.eq.s32.totalorder %s18, 0
    %p102 = por %p100, %p101
    %p103 = scmp.ne.s32.totalorder %s91, %s92
    %p104 = scmp.eq.s32.totalorder %s19, 3
    %p105 = por %p103, %p104
    %p107 = scmp.ne.s32.totalorder %s92, %s106
    %p108 = scmp.eq.s32.totalorder %s19, 0
    %p109 = por %p107, %p108
    %s110 = ssub.s32 %s13, %s20
    %p111 = scmp.eq.s32.totalorder %s110, 0
    %s113 = sadd.s32 %s112, 1
    %s114 = scalar_select %p111, %s112, %s113
    %p117 = pneg %p111
    %p118 = scmp.eq.s32.totalorder %s13, 3
    %p119 = por %p117, %p118
    %p120 = scmp.ne.s32.totalorder %s112, %s115
    %p121 = scmp.eq.s32.totalorder %s13, 0
    %p122 = por %p120, %p121
    %p123 = scmp.ne.s32.totalorder %s112, %s115
    %p124 = scmp.eq.s32.totalorder %s18, 3
    %p125 = por %p123, %p124
    %p126 = scmp.ne.s32.totalorder %s115, %s116
    %p127 = scmp.eq.s32.totalorder %s18, 0
    %p128 = por %p126, %p127
    %p129 = scmp.ne.s32.totalorder %s115, %s116
    %p130 = scmp.eq.s32.totalorder %s19, 3
    %p131 = por %p129, %p130
    %p133 = scmp.ne.s32.totalorder %s116, %s132
    %p134 = scmp.eq.s32.totalorder %s19, 0
    %p135 = por %p133, %p134
    %s136 = ssub.s32 %s13, %s20
    %p137 = scmp.eq.s32.totalorder %s136, 0
    %s139 = sadd.s32 %s138, 1
    %s140 = scalar_select %p137, %s138, %s139
    %p143 = pneg %p137
    %p144 = scmp.eq.s32.totalorder %s13, 3
    %p145 = por %p143, %p144
    %p146 = scmp.ne.s32.totalorder %s138, %s141
    %p147 = scmp.eq.s32.totalorder %s13, 0
    %p148 = por %p146, %p147
    %p149 = scmp.ne.s32.totalorder %s138, %s141
    %p150 = scmp.eq.s32.totalorder %s18, 3
    %p151 = por %p149, %p150
    %p152 = scmp.ne.s32.totalorder %s141, %s142
    %p153 = scmp.eq.s32.totalorder %s18, 0
    %p154 = por %p152, %p153
    %p155 = scmp.ne.s32.totalorder %s141, %s142
    %p156 = scmp.eq.s32.totalorder %s19, 3
    %p157 = por %p155, %p156
    %p159 = scmp.ne.s32.totalorder %s142, %s158
    %p160 = scmp.eq.s32.totalorder %s19, 0
    %p161 = por %p159, %p160
    %s162 = ssub.s32 %s13, %s20
    %p163 = scmp.eq.s32.totalorder %s162, 0
    %s165 = sadd.s32 %s164, 1
    %s166 = scalar_select %p163, %s164, %s165
    %p169 = pneg %p163
    %p170 = scmp.eq.s32.totalorder %s13, 3
    %p171 = por %p169, %p170
    %p172 = scmp.ne.s32.totalorder %s164, %s167
    %p173 = scmp.eq.s32.totalorder %s13, 0
    %p174 = por %p172, %p173
    %p175 = scmp.ne.s32.totalorder %s164, %s167
    %p176 = scmp.eq.s32.totalorder %s18, 3
    %p177 = por %p175, %p176
    %p178 = scmp.ne.s32.totalorder %s167, %s168
    %p179 = scmp.eq.s32.totalorder %s18, 0
    %p180 = por %p178, %p179
    %p181 = scmp.ne.s32.totalorder %s167, %s168
    %p182 = scmp.eq.s32.totalorder %s19, 3
    %p183 = por %p181, %p182
    %p185 = scmp.ne.s32.totalorder %s168, %s184
    %p186 = scmp.eq.s32.totalorder %s19, 0
    %p187 = por %p185, %p186
    %p188 = scmp.le.s32.totalorder 1, %s13
    %p189 = scmp.lt.s32.totalorder %s13, 5
    %p190 = pnand %p188, %p189
    %p191 = pneg %p190
    // Predicated region
    $region9: #{residual_bottleneck_block.6} parent=5 // pred_check
      _
    $region10: #{residual_bottleneck_block.6} parent=5 // pred_check_branch
      %193 = sbr.rel (%p190) target = $region12
    $region11: #{residual_bottleneck_block.6} parent=5 // pred_region
      %s194 = ssub.s32 %s13, 1
      // Predicated region
      $region13: #{residual_bottleneck_block.6} parent=11 // pred_check
        %p195 = pneg %p60
      $region14: #{residual_bottleneck_block.6} parent=11 // pred_check_branch
        %197 = sbr.rel (%p195) target = $region16
      $region15: #{residual_bottleneck_block.6} parent=11 // pred_region
        _
      $region16: #{residual_bottleneck_block.6} parent=11 // pred_fallthru
        _
      // Predicated region
      $region17: #{residual_bottleneck_block.6} parent=11 // pred_check
        %p198 = pneg %p81
      $region18: #{residual_bottleneck_block.6} parent=11 // pred_check_branch
        %200 = sbr.rel (%p198) target = $region20
      $region19: #{residual_bottleneck_block.6} parent=11 // pred_region
        _
      $region20: #{residual_bottleneck_block.6} parent=11 // pred_fallthru
        _
      // Predicated region
      $region21: #{residual_bottleneck_block.6} parent=11 // pred_check
        %p201 = pneg %p102
      $region22: #{residual_bottleneck_block.6} parent=11 // pred_check_branch
        %203 = sbr.rel (%p201) target = $region24
      $region23: #{residual_bottleneck_block.6} parent=11 // pred_region
        _
      $region24: #{residual_bottleneck_block.6} parent=11 // pred_fallthru
        _
    $region12: #{residual_bottleneck_block.6} parent=5 // pred_fallthru
      _
    %p204 = scmp.lt.s32.totalorder %s13, 4
    // Predicated region
    $region25: #{residual_bottleneck_block.6} parent=5 // pred_check
      %p205 = pneg %p204
    $region26: #{residual_bottleneck_block.6} parent=5 // pred_check_branch
      %207 = sbr.rel (%p205) target = $region28
    $region27: #{residual_bottleneck_block.6} parent=5 // pred_region
      // Predicated region
      $region29: #{residual_bottleneck_block.6} parent=27 // pred_check
        %p208 = pneg %p33
      $region30: #{residual_bottleneck_block.6} parent=27 // pred_check_branch
        %210 = sbr.rel (%p208) target = $region32
      $region31: #{residual_bottleneck_block.6} parent=27 // pred_region
        %s211 = smul.u32 16, %s13
        %p212 = scmp.lt.s32.totalorder %s211, 63
        %s213 = scalar_select %p212, %s211, 63
        %s214 = smul.addr %s213, 4
        %s215 = scalar_lea.vmem %s0, %s214
        %s216 = smul.u32 16, %s13
      $region32: #{residual_bottleneck_block.6} parent=27 // pred_fallthru
        _
    $region28: #{residual_bottleneck_block.6} parent=5 // pred_fallthru
      _
    %p217 = scmp.le.s32.totalorder 1, %s13
    %p218 = scmp.lt.s32.totalorder %s13, 5
    %p219 = pnand %p217, %p218
    %p220 = pneg %p219
    // Predicated region
    $region33: #{residual_bottleneck_block.6} parent=5 // pred_check
      _
    $region34: #{residual_bottleneck_block.6} parent=5 // pred_check_branch
      %222 = sbr.rel (%p219) target = $region36
    $region35: #{residual_bottleneck_block.6} parent=5 // pred_region
      %s223 = ssub.s32 %s13, 1
      %s224 = smul.u32 16, %s18
      %p225 = scmp.lt.s32.totalorder %s224, 63
      %s226 = scalar_select %p225, %s224, 63
      %s227 = smul.addr %s226, 4
      %s228 = scalar_lea.vmem %s0, %s227
      %p229 = pneg %p39
      %p230 = pneg %p36
      %p231 = pneg %p60
      %p232 = pneg %p57
      %p233 = pneg %p81
      %p234 = pneg %p78
      %p235 = pneg %p102
      %p236 = pneg %p99
      %p237 = pneg %p128
      %p238 = pneg %p125
      %s239 = smul.u32 16, %s18
      %p240 = scmp.lt.s32.totalorder %s239, 63
      %s241 = scalar_select %p240, %s239, 63
      %s242 = smul.addr %s241, 4
      %s243 = scalar_lea.vmem %s4, %s242
      %p244 = pneg %p154
      %p245 = pneg %p151
      %p246 = scmp.lt.s32.totalorder %s18, 3
      %s247 = scalar_select %p246, %s18, 3
      %s248 = scalar_lea.vmem %s5, %s247
      %p249 = pneg %p180
      %p250 = pneg %p177
      %p251 = scmp.lt.s32.totalorder %s18, 3
      %s252 = scalar_select %p251, %s18, 3
      %s253 = scalar_lea.vmem %s6, %s252
      %s254 = smul.u32 16, %s18
      %p255 = scmp.lt.s32.totalorder %s254, 63
      %s256 = scalar_select %p255, %s254, 63
      %s257 = smul.addr %s256, 4
      %s258 = scalar_lea.vmem %s0, %s257
      %s259 = smul.u32 16, %s18
      %s260 = smul.u32 16, %s18
      %p261 = scmp.lt.s32.totalorder %s260, 63
      %s262 = scalar_select %p261, %s260, 63
      %s263 = smul.addr %s262, 4
      %s264 = scalar_lea.vmem %s4, %s263
      %s265 = smul.u32 16, %s18
      %p266 = scmp.lt.s32.totalorder %s18, 3
      %s267 = scalar_select %p266, %s18, 3
      %s268 = scalar_lea.vmem %s5, %s267
      %p269 = scmp.lt.s32.totalorder %s18, 3
      %s270 = scalar_select %p269, %s18, 3
      %s271 = scalar_lea.vmem %s6, %s270
      %v273 = vld [vmem:[%s258] sm:$0xf]
      %v274 = vld [vmem:[%s258 + $0x4] sm:$0xf]
      %v275 = vld [vmem:[%s258 + $0x8] sm:$0xf]
      %v276 = vld [vmem:[%s258 + $0xc] sm:$0xf]
      %v277 = vld [vmem:[%s258 + $0x10] sm:$0xf]
      %v278 = vld [vmem:[%s258 + $0x14] sm:$0xf]
      %v279 = vld [vmem:[%s258 + $0x18] sm:$0xf]
      %v280 = vld [vmem:[%s258 + $0x1c] sm:$0xf]
      %v281 = vld [vmem:[%s258 + $0x20] sm:$0xf]
      %v282 = vld [vmem:[%s258 + $0x24] sm:$0xf]
      %v283 = vld [vmem:[%s258 + $0x28] sm:$0xf]
      %v284 = vld [vmem:[%s258 + $0x2c] sm:$0xf]
      %v285 = vld [vmem:[%s258 + $0x30] sm:$0xf]
      %v286 = vld [vmem:[%s258 + $0x34] sm:$0xf]
      %v287 = vld [vmem:[%s258 + $0x38] sm:$0xf]
      %v288 = vld [vmem:[%s258 + $0x3c] sm:$0xf]
      %v289 = vunpack.c.l.bf16 %v273
      %v290 = vunpack.c.l.bf16 %v274
      %v291 = vunpack.c.l.bf16 %v275
      %v292 = vunpack.c.l.bf16 %v276
      %v293 = vunpack.c.l.bf16 %v277
      %v294 = vunpack.c.l.bf16 %v278
      %v295 = vunpack.c.l.bf16 %v279
      %v296 = vunpack.c.l.bf16 %v280
      %v297 = vunpack.c.l.bf16 %v281
      %v298 = vunpack.c.l.bf16 %v282
      %v299 = vunpack.c.l.bf16 %v283
      %v300 = vunpack.c.l.bf16 %v284
      %v301 = vunpack.c.l.bf16 %v285
      %v302 = vunpack.c.l.bf16 %v286
      %v303 = vunpack.c.l.bf16 %v287
      %v304 = vunpack.c.l.bf16 %v288
      %v305 = vld [vmem:[%s1] sm:$0x1]
      %v307 = vlaneseq
      %v308 = vshrl.u32 %v307, 7
      %v309 = vsub.s32 0, %v308
      %v310 = vrot.slane %v305, %v309
      %v312 = vmul.f32 %v289, %v310
      %v313 = vmul.f32 %v290, %v310
      %v314 = vmul.f32 %v291, %v310
      %v315 = vmul.f32 %v292, %v310
      %v316 = vmul.f32 %v293, %v310
      %v317 = vmul.f32 %v294, %v310
      %v318 = vmul.f32 %v295, %v310
      %v319 = vmul.f32 %v296, %v310
      %v320 = vmul.f32 %v297, %v310
      %v321 = vmul.f32 %v298, %v310
      %v322 = vmul.f32 %v299, %v310
      %v323 = vmul.f32 %v300, %v310
      %v324 = vmul.f32 %v301, %v310
      %v325 = vmul.f32 %v302, %v310
      %v326 = vmul.f32 %v303, %v310
      %v327 = vmul.f32 %v304, %v310
      %v328 = vld [vmem:[%s2] sm:$0x1]
      %v330 = vlaneseq
      %v331 = vshrl.u32 %v330, 7
      %v332 = vsub.s32 0, %v331
      %v333 = vrot.slane %v328, %v332
      %v335 = vadd.f32 %v312, %v333
      %v336 = vadd.f32 %v313, %v333
      %v337 = vadd.f32 %v314, %v333
      %v338 = vadd.f32 %v315, %v333
      %v339 = vadd.f32 %v316, %v333
      %v340 = vadd.f32 %v317, %v333
      %v341 = vadd.f32 %v318, %v333
      %v342 = vadd.f32 %v319, %v333
      %v343 = vadd.f32 %v320, %v333
      %v344 = vadd.f32 %v321, %v333
      %v345 = vadd.f32 %v322, %v333
      %v346 = vadd.f32 %v323, %v333
      %v347 = vadd.f32 %v324, %v333
      %v348 = vadd.f32 %v325, %v333
      %v349 = vadd.f32 %v326, %v333
      %v350 = vadd.f32 %v327, %v333
      %v351 = vmax.f32 %v335, 0.0
      %v352 = vmax.f32 %v336, 0.0
      %v353 = vmax.f32 %v337, 0.0
      %v354 = vmax.f32 %v338, 0.0
      %v355 = vmax.f32 %v339, 0.0
      %v356 = vmax.f32 %v340, 0.0
      %v357 = vmax.f32 %v341, 0.0
      %v358 = vmax.f32 %v342, 0.0
      %v359 = vmax.f32 %v343, 0.0
      %v360 = vmax.f32 %v344, 0.0
      %v361 = vmax.f32 %v345, 0.0
      %v362 = vmax.f32 %v346, 0.0
      %v363 = vmax.f32 %v347, 0.0
      %v364 = vmax.f32 %v348, 0.0
      %v365 = vmax.f32 %v349, 0.0
      %v366 = vmax.f32 %v350, 0.0
      %v367 = vpack.c.bf16 %v352, %v351
      %v368 = vpack.c.bf16 %v354, %v353
      %v369 = vpack.c.bf16 %v356, %v355
      %v370 = vpack.c.bf16 %v358, %v357
      %v371 = vpack.c.bf16 %v360, %v359
      %v372 = vpack.c.bf16 %v362, %v361
      %v373 = vpack.c.bf16 %v364, %v363
      %v374 = vpack.c.bf16 %v366, %v365
      %v375 = vld [vmem:[%s3] sm:$0xf]
      %v376 = vld [vmem:[%s3 + $0x4] sm:$0xf]
      %v377 = vld [vmem:[%s3 + $0x8] sm:$0xf]
      %v378 = vld [vmem:[%s3 + $0xc] sm:$0xf]
      %v379 = vld [vmem:[%s3 + $0x10] sm:$0xf]
      %v380 = vld [vmem:[%s3 + $0x14] sm:$0xf]
      %v381 = vld [vmem:[%s3 + $0x18] sm:$0xf]
      %v382 = vld [vmem:[%s3 + $0x1c] sm:$0xf]
      %v383 = vld [vmem:[%s3 + $0x20] sm:$0xf]
      %v384 = vld [vmem:[%s3 + $0x24] sm:$0xf]
      %v385 = vld [vmem:[%s3 + $0x28] sm:$0xf]
      %v386 = vld [vmem:[%s3 + $0x2c] sm:$0xf]
      %v387 = vld [vmem:[%s3 + $0x30] sm:$0xf]
      %v388 = vld [vmem:[%s3 + $0x34] sm:$0xf]
      %v389 = vld [vmem:[%s3 + $0x38] sm:$0xf]
      %v390 = vld [vmem:[%s3 + $0x3c] sm:$0xf]
      %v407 = vunpack.c.l.b16 %v375
      %v408 = vunpack.c.l.b16 %v376
      %v409 = vunpack.c.l.b16 %v377
      %v410 = vunpack.c.l.b16 %v378
      %v411 = vunpack.c.l.b16 %v379
      %v412 = vunpack.c.l.b16 %v380
      %v413 = vunpack.c.l.b16 %v381
      %v414 = vunpack.c.l.b16 %v382
      %v415 = vunpack.c.l.b16 %v383
      %v416 = vunpack.c.l.b16 %v384
      %v417 = vunpack.c.l.b16 %v385
      %v418 = vunpack.c.l.b16 %v386
      %v419 = vunpack.c.l.b16 %v387
      %v420 = vunpack.c.l.b16 %v388
      %v421 = vunpack.c.l.b16 %v389
      %v422 = vunpack.c.l.b16 %v390
      %v423 = vpack.c.b16 %v408, %v407
      %v424 = vpack.c.b16 %v410, %v409
      %v425 = vpack.c.b16 %v412, %v411
      %v426 = vpack.c.b16 %v414, %v413
      %v427 = vpack.c.b16 %v416, %v415
      %v428 = vpack.c.b16 %v418, %v417
      %v429 = vpack.c.b16 %v420, %v419
      %v430 = vpack.c.b16 %v422, %v421
      %439 = vmatprep.subr.bf16.mxu0 0
      %440 = vmatpush1.bf16.msra.mxu0 %v423
      %441 = vmatprep.subr.bf16.mxu0 0
      %442 = vmatpush1.bf16.msra.mxu0 %v424
      %443 = vmatprep.subr.bf16.mxu0 0
      %444 = vmatpush1.bf16.msra.mxu0 %v425
      %445 = vmatprep.subr.bf16.mxu0 0
      %446 = vmatpush1.bf16.msra.mxu0 %v426
      %447 = vmatprep.subr.bf16.mxu0 0
      %448 = vmatpush1.bf16.msra.mxu0 %v427
      %449 = vmatprep.subr.bf16.mxu0 0
      %450 = vmatpush1.bf16.msra.mxu0 %v428
      %451 = vmatprep.subr.bf16.mxu0 0
      %452 = vmatpush1.bf16.msra.mxu0 %v429
      %453 = vmatprep.subr.bf16.mxu0 0
      %454 = vmatpush1.bf16.msra.mxu0 %v430
      %455 = vmatprep.subr.bf16.mxu0 0
      %456 = vmatpush1.bf16.msra.mxu0 0
      %457 = vmatprep.subr.bf16.mxu0 0
      %458 = vmatpush1.bf16.msra.mxu0 0
      %459 = vmatprep.subr.bf16.mxu0 0
      %460 = vmatpush1.bf16.msra.mxu0 0
      %461 = vmatprep.subr.bf16.mxu0 0
      %462 = vmatpush1.bf16.msra.mxu0 0
      %463 = vmatprep.subr.bf16.mxu0 0
      %464 = vmatpush1.bf16.msra.mxu0 0
      %465 = vmatprep.subr.bf16.mxu0 0
      %466 = vmatpush1.bf16.msra.mxu0 0
      %467 = vmatprep.subr.bf16.mxu0 0
      %468 = vmatpush1.bf16.msra.mxu0 0
      %469 = vmatprep.subr.bf16.mxu0 0
      %470 = vmatpush1.bf16.msra.mxu0 0
      %471 = vmatprep.mubr.bf16.mxu0 0
      %472 = vmatmul.mubr.bf16.gmra.mrb[0].mxu0 %v367
      %v473 = vpop.f32.mrb[0].mxu0
      %v474 = vadd.f32 0.0, %v473
      %v475 = vpop.f32.mrb[0].mxu0
      %v476 = vpop.f32.mrb[0].mxu0
      %v477 = vadd.f32 0.0, %v476
      %v478 = vpop.f32.mrb[0].mxu0
      %479 = vmatprep.mubr.bf16.mxu0 0
      %480 = vmatmul.mubr.bf16.gmra.mrb[0].mxu0 %v368
      %v481 = vpop.f32.mrb[0].mxu0
      %v482 = vadd.f32 0.0, %v481
      %v483 = vpop.f32.mrb[0].mxu0
      %v484 = vpop.f32.mrb[0].mxu0
      %v485 = vadd.f32 0.0, %v484
      %v486 = vpop.f32.mrb[0].mxu0
      %487 = vmatprep.mubr.bf16.mxu0 0
      %488 = vmatmul.mubr.bf16.gmra.mrb[0].mxu0 %v369
      %v489 = vpop.f32.mrb[0].mxu0
      %v490 = vadd.f32 0.0, %v489
      %v491 = vpop.f32.mrb[0].mxu0
      %v492 = vpop.f32.mrb[0].mxu0
      %v493 = vadd.f32 0.0, %v492
      %v494 = vpop.f32.mrb[0].mxu0
      %495 = vmatprep.mubr.bf16.mxu0 0
      %496 = vmatmul.mubr.bf16.gmra.mrb[0].mxu0 %v370
      %v497 = vpop.f32.mrb[0].mxu0
      %v498 = vadd.f32 0.0, %v497
      %v499 = vpop.f32.mrb[0].mxu0
      %v500 = vpop.f32.mrb[0].mxu0
      %v501 = vadd.f32 0.0, %v500
      %v502 = vpop.f32.mrb[0].mxu0
      %503 = vmatprep.mubr.bf16.mxu0 0
      %504 = vmatmul.mubr.bf16.gmra.mrb[0].mxu0 %v371
      %v505 = vpop.f32.mrb[0].mxu0
      %v506 = vadd.f32 0.0, %v505
      %v507 = vpop.f32.mrb[0].mxu0
      %v508 = vpop.f32.mrb[0].mxu0
      %v509 = vadd.f32 0.0, %v508
      %v510 = vpop.f32.mrb[0].mxu0
      %511 = vmatprep.mubr.bf16.mxu0 0
      %512 = vmatmul.mubr.bf16.gmra.mrb[0].mxu0 %v372
      %v513 = vpop.f32.mrb[0].mxu0
      %v514 = vadd.f32 0.0, %v513
      %v515 = vpop.f32.mrb[0].mxu0
      %v516 = vpop.f32.mrb[0].mxu0
      %v517 = vadd.f32 0.0, %v516
      %v518 = vpop.f32.mrb[0].mxu0
      %519 = vmatprep.mubr.bf16.mxu0 0
      %520 = vmatmul.mubr.bf16.gmra.mrb[0].mxu0 %v373
      %v521 = vpop.f32.mrb[0].mxu0
      %v522 = vadd.f32 0.0, %v521
      %v523 = vpop.f32.mrb[0].mxu0
      %v524 = vpop.f32.mrb[0].mxu0
      %v525 = vadd.f32 0.0, %v524
      %v526 = vpop.f32.mrb[0].mxu0
      %527 = vmatprep.mubr.bf16.mxu0 0
      %528 = vmatmul.mubr.bf16.gmra.mrb[0].mxu0 %v374
      %v529 = vpop.f32.mrb[0].mxu0
      %v530 = vadd.f32 0.0, %v529
      %v531 = vpop.f32.mrb[0].mxu0
      %v532 = vpop.f32.mrb[0].mxu0
      %v533 = vadd.f32 0.0, %v532
      %v534 = vpop.f32.mrb[0].mxu0
      %535 = vdwg.mxu0
      %v536 = vpack.c.bf16 %v477, %v474
      %v537 = vpack.c.bf16 %v485, %v482
      %v538 = vpack.c.bf16 %v493, %v490
      %v539 = vpack.c.bf16 %v501, %v498
      %v540 = vpack.c.bf16 %v509, %v506
      %v541 = vpack.c.bf16 %v517, %v514
      %v542 = vpack.c.bf16 %v525, %v522
      %v543 = vpack.c.bf16 %v533, %v530
      %v552 = vunpack.c.l.b16 %v536
      %v553 = vunpack.c.h.b16 %v536
      %v554 = vunpack.c.l.b16 %v537
      %v555 = vunpack.c.h.b16 %v537
      %v556 = vunpack.c.l.b16 %v538
      %v557 = vunpack.c.h.b16 %v538
      %v558 = vunpack.c.l.b16 %v539
      %v559 = vunpack.c.h.b16 %v539
      %v560 = vunpack.c.l.b16 %v540
      %v561 = vunpack.c.h.b16 %v540
      %v562 = vunpack.c.l.b16 %v541
      %v563 = vunpack.c.h.b16 %v541
      %v564 = vunpack.c.l.b16 %v542
      %v565 = vunpack.c.h.b16 %v542
      %v566 = vunpack.c.l.b16 %v543
      %v567 = vunpack.c.h.b16 %v543
      %v568 = vpack.c.b16 %v552, %v552
      %v569 = vpack.c.b16 %v553, %v553
      %v570 = vpack.c.b16 %v554, %v554
      %v571 = vpack.c.b16 %v555, %v555
      %v572 = vpack.c.b16 %v556, %v556
      %v573 = vpack.c.b16 %v557, %v557
      %v574 = vpack.c.b16 %v558, %v558
      %v575 = vpack.c.b16 %v559, %v559
      %v576 = vpack.c.b16 %v560, %v560
      %v577 = vpack.c.b16 %v561, %v561
      %v578 = vpack.c.b16 %v562, %v562
      %v579 = vpack.c.b16 %v563, %v563
      %v580 = vpack.c.b16 %v564, %v564
      %v581 = vpack.c.b16 %v565, %v565
      %v582 = vpack.c.b16 %v566, %v566
      %v583 = vpack.c.b16 %v567, %v567
      %600 = vst [vmem:[%s264] sm:$0xf] %v568
      %601 = vst [vmem:[%s264 + $0x4] sm:$0xf] %v569
      %602 = vst [vmem:[%s264 + $0x8] sm:$0xf] %v570
      %603 = vst [vmem:[%s264 + $0xc] sm:$0xf] %v571
      %604 = vst [vmem:[%s264 + $0x10] sm:$0xf] %v572
      %605 = vst [vmem:[%s264 + $0x14] sm:$0xf] %v573
      %606 = vst [vmem:[%s264 + $0x18] sm:$0xf] %v574
      %607 = vst [vmem:[%s264 + $0x1c] sm:$0xf] %v575
      %608 = vst [vmem:[%s264 + $0x20] sm:$0xf] %v576
      %609 = vst [vmem:[%s264 + $0x24] sm:$0xf] %v577
      %610 = vst [vmem:[%s264 + $0x28] sm:$0xf] %v578
      %611 = vst [vmem:[%s264 + $0x2c] sm:$0xf] %v579
      %612 = vst [vmem:[%s264 + $0x30] sm:$0xf] %v580
      %613 = vst [vmem:[%s264 + $0x34] sm:$0xf] %v581
      %614 = vst [vmem:[%s264 + $0x38] sm:$0xf] %v582
      %615 = vst [vmem:[%s264 + $0x3c] sm:$0xf] %v583
      %v616 = vadd.f32 %v474, %v477
      %v617 = vadd.f32 %v616, %v482
      %v618 = vadd.f32 %v617, %v485
      %v619 = vadd.f32 %v618, %v490
      %v620 = vadd.f32 %v619, %v493
      %v621 = vadd.f32 %v620, %v498
      %v622 = vadd.f32 %v621, %v501
      %v623 = vadd.f32 %v622, %v506
      %v624 = vadd.f32 %v623, %v509
      %v625 = vadd.f32 %v624, %v514
      %v626 = vadd.f32 %v625, %v517
      %v627 = vadd.f32 %v626, %v522
      %v628 = vadd.f32 %v627, %v525
      %v629 = vadd.f32 %v628, %v530
      %v630 = vadd.f32 %v629, %v533
      %v631 = vrot.slane %v630, 4
      %v632 = vadd.f32 %v630, %v631
      %v633 = vrot.slane %v632, 2
      %v634 = vadd.f32 %v632, %v633
      %v635 = vrot.slane %v634, 1
      %v636 = vadd.f32 %v634, %v635
      %637 = vst [vmem:[%s268] sm:$0x1] %v636
      %v638 = vmul.f32 %v474, %v474
      %v639 = vmul.f32 %v477, %v477
      %v640 = vmul.f32 %v482, %v482
      %v641 = vmul.f32 %v485, %v485
      %v642 = vmul.f32 %v490, %v490
      %v643 = vmul.f32 %v493, %v493
      %v644 = vmul.f32 %v498, %v498
      %v645 = vmul.f32 %v501, %v501
      %v646 = vmul.f32 %v506, %v506
      %v647 = vmul.f32 %v509, %v509
      %v648 = vmul.f32 %v514, %v514
      %v649 = vmul.f32 %v517, %v517
      %v650 = vmul.f32 %v522, %v522
      %v651 = vmul.f32 %v525, %v525
      %v652 = vmul.f32 %v530, %v530
      %v653 = vmul.f32 %v533, %v533
      %v654 = vadd.f32 %v638, %v639
      %v655 = vadd.f32 %v654, %v640
      %v656 = vadd.f32 %v655, %v641
      %v657 = vadd.f32 %v656, %v642
      %v658 = vadd.f32 %v657, %v643
      %v659 = vadd.f32 %v658, %v644
      %v660 = vadd.f32 %v659, %v645
      %v661 = vadd.f32 %v660, %v646
      %v662 = vadd.f32 %v661, %v647
      %v663 = vadd.f32 %v662, %v648
      %v664 = vadd.f32 %v663, %v649
      %v665 = vadd.f32 %v664, %v650
      %v666 = vadd.f32 %v665, %v651
      %v667 = vadd.f32 %v666, %v652
      %v668 = vadd.f32 %v667, %v653
      %v669 = vrot.slane %v668, 4
      %v670 = vadd.f32 %v668, %v669
      %v671 = vrot.slane %v670, 2
      %v672 = vadd.f32 %v670, %v671
      %v673 = vrot.slane %v672, 1
      %v674 = vadd.f32 %v672, %v673
      %675 = vst [vmem:[%s271] sm:$0x1] %v674
      %s676 = smul.u32 16, %s18
      %p677 = scmp.lt.s32.totalorder %s676, 63
      %s678 = scalar_select %p677, %s676, 63
      %s679 = smul.addr %s678, 4
      %s680 = scalar_lea.vmem %s4, %s679
      %p681 = scmp.lt.s32.totalorder %s18, 3
      %s682 = scalar_select %p681, %s18, 3
      %s683 = scalar_lea.vmem %s5, %s682
      %p684 = scmp.lt.s32.totalorder %s18, 3
      %s685 = scalar_select %p684, %s18, 3
      %s686 = scalar_lea.vmem %s6, %s685
      // Predicated region
      $region37: #{residual_bottleneck_block.6} parent=35 // pred_check
        %p687 = pneg %p125
      $region38: #{residual_bottleneck_block.6} parent=35 // pred_check_branch
        %689 = sbr.rel (%p687) target = $region40
      $region39: #{residual_bottleneck_block.6} parent=35 // pred_region
        %s690 = smul.u32 16, %s18
      $region40: #{residual_bottleneck_block.6} parent=35 // pred_fallthru
        _
      // Predicated region
      $region41: #{residual_bottleneck_block.6} parent=35 // pred_check
        %p691 = pneg %p151
      $region42: #{residual_bottleneck_block.6} parent=35 // pred_check_branch
        %693 = sbr.rel (%p691) target = $region44
      $region43: #{residual_bottleneck_block.6} parent=35 // pred_region
        _
      $region44: #{residual_bottleneck_block.6} parent=35 // pred_fallthru
        _
      // Predicated region
      $region45: #{residual_bottleneck_block.6} parent=35 // pred_check
        %p694 = pneg %p177
      $region46: #{residual_bottleneck_block.6} parent=35 // pred_check_branch
        %696 = sbr.rel (%p694) target = $region48
      $region47: #{residual_bottleneck_block.6} parent=35 // pred_region
        _
      $region48: #{residual_bottleneck_block.6} parent=35 // pred_fallthru
        _
    $region36: #{residual_bottleneck_block.6} parent=5 // pred_fallthru
      _
    %p697 = scmp.le.s32.totalorder 2, %s13
    // Predicated region
    $region49: #{residual_bottleneck_block.6} parent=5 // pred_check
      %p698 = pneg %p697
    $region50: #{residual_bottleneck_block.6} parent=5 // pred_check_branch
      %700 = sbr.rel (%p698) target = $region52
    $region51: #{residual_bottleneck_block.6} parent=5 // pred_region
      %s701 = ssub.s32 %s13, 2
      // Predicated region
      $region53: #{residual_bottleneck_block.6} parent=51 // pred_check
        %p702 = pneg %p131
      $region54: #{residual_bottleneck_block.6} parent=51 // pred_check_branch
        %704 = sbr.rel (%p702) target = $region56
      $region55: #{residual_bottleneck_block.6} parent=51 // pred_region
        %s705 = smul.u32 16, %s19
        %p706 = scmp.lt.s32.totalorder %s705, 63
        %s707 = scalar_select %p706, %s705, 63
        %s708 = smul.addr %s707, 4
        %s709 = scalar_lea.vmem %s4, %s708
      $region56: #{residual_bottleneck_block.6} parent=51 // pred_fallthru
        _
      // Predicated region
      $region57: #{residual_bottleneck_block.6} parent=51 // pred_check
        %p710 = pneg %p157
      $region58: #{residual_bottleneck_block.6} parent=51 // pred_check_branch
        %712 = sbr.rel (%p710) target = $region60
      $region59: #{residual_bottleneck_block.6} parent=51 // pred_region
        %p713 = scmp.lt.s32.totalorder %s19, 3
        %s714 = scalar_select %p713, %s19, 3
        %s715 = scalar_lea.vmem %s5, %s714
      $region60: #{residual_bottleneck_block.6} parent=51 // pred_fallthru
        _
      // Predicated region
      $region61: #{residual_bottleneck_block.6} parent=51 // pred_check
        %p716 = pneg %p183
      $region62: #{residual_bottleneck_block.6} parent=51 // pred_check_branch
        %718 = sbr.rel (%p716) target = $region64
      $region63: #{residual_bottleneck_block.6} parent=51 // pred_region
        %p719 = scmp.lt.s32.totalorder %s19, 3
        %s720 = scalar_select %p719, %s19, 3
        %s721 = scalar_lea.vmem %s6, %s720
      $region64: #{residual_bottleneck_block.6} parent=51 // pred_fallthru
        _
    $region52: #{residual_bottleneck_block.6} parent=5 // pred_fallthru
      _
  $region6: #{residual_bottleneck_block.6} parent=0 // loop_footer
    %s17 = sadd.s32 1, %s13
  $region7: #{residual_bottleneck_block.6} parent=0 // loop_footer_branch
    %12 = sbr.rel target = $region3
  $region8: #{residual_bottleneck_block.6} parent=0 // loop_exit
    _

// kernel: residual_bottleneck_block.7
$region0: #{residual_bottleneck_block.7}
  #allocation0 [shape = 'u32[]', space=smem, size = 0x4, offset = 0x4, fixed_abs, tag = 'smem constant byte address 0x4 - core index']
  #allocation1 [shape = 'u32[144,128]{1,0:T(1,128)}', space=vmem, size = 0x12000, scoped, tag = 'internal scratch']
  %s0 = inlined_call_operand.vmem [shape: bf16[512,128], index: 0, kind: input, shape index: {}]
  %s1 = inlined_call_operand.vmem [shape: bf16[512,128], index: 1, kind: input, shape index: {}]
  %s2 = inlined_call_operand.vmem [shape: f32[1,128], index: 2, kind: input, shape index: {}]
  %s3 = inlined_call_operand.vmem [shape: f32[1,128], index: 3, kind: input, shape index: {}]
  %s4 = inlined_call_operand.vmem [shape: f32[1,128], index: 4, kind: input, shape index: {}]
  %s5 = inlined_call_operand.vmem [shape: f32[1,128], index: 5, kind: input, shape index: {}]
  %s6 = inlined_call_operand.vmem [shape: f32[512,128], index: 6, kind: output, shape index: {}]
  %s7 = sld [smem:[#allocation0]]
  $region57: #{residual_bottleneck_block.7} parent=0
    _
  %s9 = ssub.s32 1, %s7
  %s10 = scalar_select 0, %s9, %s7
  loop: start=0, step=1, limit=6
  $region2: #{residual_bottleneck_block.7} parent=0 // loop_pre_header
    _
  $region3: #{residual_bottleneck_block.7} parent=0 // loop_header
    %s12 = sphi 0, %s16
    %p13 = scmp.ge.s32.totalorder %s12, 6
    %s22 = sphi 0, %s24
    %s25 = sphi 0, %s22
    %s26 = sphi 0, %s25
    %s42 = sphi 0, %s26
    %s48 = sphi 0, %s50
    %s51 = sphi 0, %s48
    %s52 = sphi 0, %s51
    %s68 = sphi 0, %s52
    %s72 = sphi 0, %s72
    %s74 = sphi 0, %s72
    %s75 = sphi 0, %s74
    %s89 = sphi 0, %s75
    %s93 = sphi 0, %s93
    %s95 = sphi 0, %s93
    %s96 = sphi 0, %s95
    %s110 = sphi 0, %s96
    %s114 = sphi 0, %s114
    %s116 = sphi 0, %s114
    %s117 = sphi 0, %s116
    %s131 = sphi 0, %s117
    %s135 = sphi 0, %s135
    %s137 = sphi 0, %s135
    %s138 = sphi 0, %s137
    %s152 = sphi 0, %s138
    %s158 = sphi 0, %s160
    %s161 = sphi 0, %s158
    %s162 = sphi 0, %s161
    %s178 = sphi 0, %s162
  $region4: #{residual_bottleneck_block.7} parent=0 // loop_header_branch
    %15 = sbr.rel (%p13) target = $region8
  $region5: #{residual_bottleneck_block.7} parent=0 // loop_body
    %s17 = ssub.s32 %s12, 1
    %s18 = ssub.s32 %s12, 2
    %s19 = sadd.s32 %s12, 1
    %s20 = ssub.s32 %s12, %s19
    %p21 = scmp.eq.s32.totalorder %s20, 0
    %s23 = sadd.s32 %s22, 1
    %s24 = scalar_select %p21, %s22, %s23
    %p27 = pneg %p21
    %p28 = scmp.eq.s32.totalorder %s12, 3
    %p29 = por %p27, %p28
    %p30 = scmp.ne.s32.totalorder %s22, %s25
    %p31 = scmp.eq.s32.totalorder %s12, 0
    %p32 = por %p30, %p31
    %p33 = scmp.ne.s32.totalorder %s22, %s25
    %p34 = scmp.eq.s32.totalorder %s17, 3
    %p35 = por %p33, %p34
    %p36 = scmp.ne.s32.totalorder %s25, %s26
    %p37 = scmp.eq.s32.totalorder %s17, 0
    %p38 = por %p36, %p37
    %p39 = scmp.ne.s32.totalorder %s25, %s26
    %p40 = scmp.eq.s32.totalorder %s18, 3
    %p41 = por %p39, %p40
    %p43 = scmp.ne.s32.totalorder %s26, %s42
    %p44 = scmp.eq.s32.totalorder %s18, 0
    %p45 = por %p43, %p44
    %s46 = ssub.s32 %s12, %s19
    %p47 = scmp.eq.s32.totalorder %s46, 0
    %s49 = sadd.s32 %s48, 1
    %s50 = scalar_select %p47, %s48, %s49
    %p53 = pneg %p47
    %p54 = scmp.eq.s32.totalorder %s12, 3
    %p55 = por %p53, %p54
    %p56 = scmp.ne.s32.totalorder %s48, %s51
    %p57 = scmp.eq.s32.totalorder %s12, 0
    %p58 = por %p56, %p57
    %p59 = scmp.ne.s32.totalorder %s48, %s51
    %p60 = scmp.eq.s32.totalorder %s17, 3
    %p61 = por %p59, %p60
    %p62 = scmp.ne.s32.totalorder %s51, %s52
    %p63 = scmp.eq.s32.totalorder %s17, 0
    %p64 = por %p62, %p63
    %p65 = scmp.ne.s32.totalorder %s51, %s52
    %p66 = scmp.eq.s32.totalorder %s18, 3
    %p67 = por %p65, %p66
    %p69 = scmp.ne.s32.totalorder %s52, %s68
    %p70 = scmp.eq.s32.totalorder %s18, 0
    %p71 = por %p69, %p70
    %s73 = sadd.s32 %s72, 1
    %p76 = scmp.eq.s32.totalorder %s12, 3
    %p77 = scmp.ne.s32.totalorder %s72, %s74
    %p78 = scmp.eq.s32.totalorder %s12, 0
    %p79 = por %p77, %p78
    %p80 = scmp.ne.s32.totalorder %s72, %s74
    %p81 = scmp.eq.s32.totalorder %s17, 3
    %p82 = por %p80, %p81
    %p83 = scmp.ne.s32.totalorder %s74, %s75
    %p84 = scmp.eq.s32.totalorder %s17, 0
    %p85 = por %p83, %p84
    %p86 = scmp.ne.s32.totalorder %s74, %s75
    %p87 = scmp.eq.s32.totalorder %s18, 3
    %p88 = por %p86, %p87
    %p90 = scmp.ne.s32.totalorder %s75, %s89
    %p91 = scmp.eq.s32.totalorder %s18, 0
    %p92 = por %p90, %p91
    %s94 = sadd.s32 %s93, 1
    %p97 = scmp.eq.s32.totalorder %s12, 3
    %p98 = scmp.ne.s32.totalorder %s93, %s95
    %p99 = scmp.eq.s32.totalorder %s12, 0
    %p100 = por %p98, %p99
    %p101 = scmp.ne.s32.totalorder %s93, %s95
    %p102 = scmp.eq.s32.totalorder %s17, 3
    %p103 = por %p101, %p102
    %p104 = scmp.ne.s32.totalorder %s95, %s96
    %p105 = scmp.eq.s32.totalorder %s17, 0
    %p106 = por %p104, %p105
    %p107 = scmp.ne.s32.totalorder %s95, %s96
    %p108 = scmp.eq.s32.totalorder %s18, 3
    %p109 = por %p107, %p108
    %p111 = scmp.ne.s32.totalorder %s96, %s110
    %p112 = scmp.eq.s32.totalorder %s18, 0
    %p113 = por %p111, %p112
    %s115 = sadd.s32 %s114, 1
    %p118 = scmp.eq.s32.totalorder %s12, 3
    %p119 = scmp.ne.s32.totalorder %s114, %s116
    %p120 = scmp.eq.s32.totalorder %s12, 0
    %p121 = por %p119, %p120
    %p122 = scmp.ne.s32.totalorder %s114, %s116
    %p123 = scmp.eq.s32.totalorder %s17, 3
    %p124 = por %p122, %p123
    %p125 = scmp.ne.s32.totalorder %s116, %s117
    %p126 = scmp.eq.s32.totalorder %s17, 0
    %p127 = por %p125, %p126
    %p128 = scmp.ne.s32.totalorder %s116, %s117
    %p129 = scmp.eq.s32.totalorder %s18, 3
    %p130 = por %p128, %p129
    %p132 = scmp.ne.s32.totalorder %s117, %s131
    %p133 = scmp.eq.s32.totalorder %s18, 0
    %p134 = por %p132, %p133
    %s136 = sadd.s32 %s135, 1
    %p139 = scmp.eq.s32.totalorder %s12, 3
    %p140 = scmp.ne.s32.totalorder %s135, %s137
    %p141 = scmp.eq.s32.totalorder %s12, 0
    %p142 = por %p140, %p141
    %p143 = scmp.ne.s32.totalorder %s135, %s137
    %p144 = scmp.eq.s32.totalorder %s17, 3
    %p145 = por %p143, %p144
    %p146 = scmp.ne.s32.totalorder %s137, %s138
    %p147 = scmp.eq.s32.totalorder %s17, 0
    %p148 = por %p146, %p147
    %p149 = scmp.ne.s32.totalorder %s137, %s138
    %p150 = scmp.eq.s32.totalorder %s18, 3
    %p151 = por %p149, %p150
    %p153 = scmp.ne.s32.totalorder %s138, %s152
    %p154 = scmp.eq.s32.totalorder %s18, 0
    %p155 = por %p153, %p154
    %s156 = ssub.s32 %s12, %s19
    %p157 = scmp.eq.s32.totalorder %s156, 0
    %s159 = sadd.s32 %s158, 1
    %s160 = scalar_select %p157, %s158, %s159
    %p163 = pneg %p157
    %p164 = scmp.eq.s32.totalorder %s12, 3
    %p165 = por %p163, %p164
    %p166 = scmp.ne.s32.totalorder %s158, %s161
    %p167 = scmp.eq.s32.totalorder %s12, 0
    %p168 = por %p166, %p167
    %p169 = scmp.ne.s32.totalorder %s158, %s161
    %p170 = scmp.eq.s32.totalorder %s17, 3
    %p171 = por %p169, %p170
    %p172 = scmp.ne.s32.totalorder %s161, %s162
    %p173 = scmp.eq.s32.totalorder %s17, 0
    %p174 = por %p172, %p173
    %p175 = scmp.ne.s32.totalorder %s161, %s162
    %p176 = scmp.eq.s32.totalorder %s18, 3
    %p177 = por %p175, %p176
    %p179 = scmp.ne.s32.totalorder %s162, %s178
    %p180 = scmp.eq.s32.totalorder %s18, 0
    %p181 = por %p179, %p180
    %p182 = scmp.le.s32.totalorder 1, %s12
    %p183 = scmp.lt.s32.totalorder %s12, 5
    %p184 = pnand %p182, %p183
    %p185 = pneg %p184
    // Predicated region
    $region9: #{residual_bottleneck_block.7} parent=5 // pred_check
      _
    $region10: #{residual_bottleneck_block.7} parent=5 // pred_check_branch
      %187 = sbr.rel (%p184) target = $region12
    $region11: #{residual_bottleneck_block.7} parent=5 // pred_region
      %s188 = ssub.s32 %s12, 1
      // Predicated region
      $region13: #{residual_bottleneck_block.7} parent=11 // pred_check
        %p189 = pneg %p85
      $region14: #{residual_bottleneck_block.7} parent=11 // pred_check_branch
        %191 = sbr.rel (%p189) target = $region16
      $region15: #{residual_bottleneck_block.7} parent=11 // pred_region
        _
      $region16: #{residual_bottleneck_block.7} parent=11 // pred_fallthru
        _
      // Predicated region
      $region17: #{residual_bottleneck_block.7} parent=11 // pred_check
        %p192 = pneg %p106
      $region18: #{residual_bottleneck_block.7} parent=11 // pred_check_branch
        %194 = sbr.rel (%p192) target = $region20
      $region19: #{residual_bottleneck_block.7} parent=11 // pred_region
        _
      $region20: #{residual_bottleneck_block.7} parent=11 // pred_fallthru
        _
      // Predicated region
      $region21: #{residual_bottleneck_block.7} parent=11 // pred_check
        %p195 = pneg %p127
      $region22: #{residual_bottleneck_block.7} parent=11 // pred_check_branch
        %197 = sbr.rel (%p195) target = $region24
      $region23: #{residual_bottleneck_block.7} parent=11 // pred_region
        _
      $region24: #{residual_bottleneck_block.7} parent=11 // pred_fallthru
        _
      // Predicated region
      $region25: #{residual_bottleneck_block.7} parent=11 // pred_check
        %p198 = pneg %p148
      $region26: #{residual_bottleneck_block.7} parent=11 // pred_check_branch
        %200 = sbr.rel (%p198) target = $region28
      $region27: #{residual_bottleneck_block.7} parent=11 // pred_region
        _
      $region28: #{residual_bottleneck_block.7} parent=11 // pred_fallthru
        _
    $region12: #{residual_bottleneck_block.7} parent=5 // pred_fallthru
      _
    %p201 = scmp.lt.s32.totalorder %s12, 4
    // Predicated region
    $region29: #{residual_bottleneck_block.7} parent=5 // pred_check
      %p202 = pneg %p201
    $region30: #{residual_bottleneck_block.7} parent=5 // pred_check_branch
      %204 = sbr.rel (%p202) target = $region32
    $region31: #{residual_bottleneck_block.7} parent=5 // pred_region
      // Predicated region
      $region33: #{residual_bottleneck_block.7} parent=31 // pred_check
        %p205 = pneg %p32
      $region34: #{residual_bottleneck_block.7} parent=31 // pred_check_branch
        %207 = sbr.rel (%p205) target = $region36
      $region35: #{residual_bottleneck_block.7} parent=31 // pred_region
        %s208 = smul.u32 16, %s12
        %p209 = scmp.lt.s32.totalorder %s208, 63
        %s210 = scalar_select %p209, %s208, 63
        %s211 = smul.addr %s210, 4
        %s212 = scalar_lea.vmem %s0, %s211
        %s213 = smul.u32 16, %s12
      $region36: #{residual_bottleneck_block.7} parent=31 // pred_fallthru
        _
      // Predicated region
      $region37: #{residual_bottleneck_block.7} parent=31 // pred_check
        %p214 = pneg %p58
      $region38: #{residual_bottleneck_block.7} parent=31 // pred_check_branch
        %216 = sbr.rel (%p214) target = $region40
      $region39: #{residual_bottleneck_block.7} parent=31 // pred_region
        %s217 = smul.u32 16, %s12
        %p218 = scmp.lt.s32.totalorder %s217, 63
        %s219 = scalar_select %p218, %s217, 63
        %s220 = smul.addr %s219, 4
        %s221 = scalar_lea.vmem %s1, %s220
        %s222 = smul.u32 16, %s12
      $region40: #{residual_bottleneck_block.7} parent=31 // pred_fallthru
        _
    $region32: #{residual_bottleneck_block.7} parent=5 // pred_fallthru
      _
    %p223 = scmp.le.s32.totalorder 1, %s12
    %p224 = scmp.lt.s32.totalorder %s12, 5
    %p225 = pnand %p223, %p224
    %p226 = pneg %p225
    // Predicated region
    $region41: #{residual_bottleneck_block.7} parent=5 // pred_check
      _
    $region42: #{residual_bottleneck_block.7} parent=5 // pred_check_branch
      %228 = sbr.rel (%p225) target = $region44
    $region43: #{residual_bottleneck_block.7} parent=5 // pred_region
      %s229 = ssub.s32 %s12, 1
      %s230 = smul.u32 16, %s17
      %p231 = scmp.lt.s32.totalorder %s230, 63
      %s232 = scalar_select %p231, %s230, 63
      %s233 = smul.addr %s232, 4
      %s234 = scalar_lea.vmem %s0, %s233
      %p235 = pneg %p38
      %p236 = pneg %p35
      %s237 = smul.u32 16, %s17
      %p238 = scmp.lt.s32.totalorder %s237, 63
      %s239 = scalar_select %p238, %s237, 63
      %s240 = smul.addr %s239, 4
      %s241 = scalar_lea.vmem %s1, %s240
      %p242 = pneg %p64
      %p243 = pneg %p61
      %p244 = pneg %p85
      %p245 = pneg %p82
      %p246 = pneg %p106
      %p247 = pneg %p103
      %p248 = pneg %p127
      %p249 = pneg %p124
      %p250 = pneg %p148
      %p251 = pneg %p145
      %p252 = pneg %p174
      %p253 = pneg %p171
      %s254 = smul.u32 16, %s17
      %p255 = scmp.lt.s32.totalorder %s254, 63
      %s256 = scalar_select %p255, %s254, 63
      %s257 = smul.addr %s256, 8
      %s258 = scalar_lea.vmem %s6, %s257
      %s259 = smul.u32 16, %s17
      %p260 = scmp.lt.s32.totalorder %s259, 63
      %s261 = scalar_select %p260, %s259, 63
      %s262 = smul.addr %s261, 4
      %s263 = scalar_lea.vmem %s0, %s262
      %s264 = smul.u32 16, %s17
      %s265 = smul.u32 16, %s17
      %p266 = scmp.lt.s32.totalorder %s265, 63
      %s267 = scalar_select %p266, %s265, 63
      %s268 = smul.addr %s267, 4
      %s269 = scalar_lea.vmem %s1, %s268
      %s270 = smul.u32 16, %s17
      %s271 = smul.u32 16, %s17
      %p272 = scmp.lt.s32.totalorder %s271, 63
      %s273 = scalar_select %p272, %s271, 63
      %s274 = smul.addr %s273, 8
      %s275 = scalar_lea.vmem %s6, %s274
      %s276 = smul.u32 16, %s17
      %v277 = vld [vmem:[%s263] sm:$0xf]
      %v278 = vld [vmem:[%s263 + $0x4] sm:$0xf]
      %v279 = vld [vmem:[%s263 + $0x8] sm:$0xf]
      %v280 = vld [vmem:[%s263 + $0xc] sm:$0xf]
      %v281 = vld [vmem:[%s263 + $0x10] sm:$0xf]
      %v282 = vld [vmem:[%s263 + $0x14] sm:$0xf]
      %v283 = vld [vmem:[%s263 + $0x18] sm:$0xf]
      %v284 = vld [vmem:[%s263 + $0x1c] sm:$0xf]
      %v285 = vld [vmem:[%s263 + $0x20] sm:$0xf]
      %v286 = vld [vmem:[%s263 + $0x24] sm:$0xf]
      %v287 = vld [vmem:[%s263 + $0x28] sm:$0xf]
      %v288 = vld [vmem:[%s263 + $0x2c] sm:$0xf]
      %v289 = vld [vmem:[%s263 + $0x30] sm:$0xf]
      %v290 = vld [vmem:[%s263 + $0x34] sm:$0xf]
      %v291 = vld [vmem:[%s263 + $0x38] sm:$0xf]
      %v292 = vld [vmem:[%s263 + $0x3c] sm:$0xf]
      %v293 = vunpack.c.l.bf16 %v277
      %v294 = vunpack.c.l.bf16 %v278
      %v295 = vunpack.c.l.bf16 %v279
      %v296 = vunpack.c.l.bf16 %v280
      %v297 = vunpack.c.l.bf16 %v281
      %v298 = vunpack.c.l.bf16 %v282
      %v299 = vunpack.c.l.bf16 %v283
      %v300 = vunpack.c.l.bf16 %v284
      %v301 = vunpack.c.l.bf16 %v285
      %v302 = vunpack.c.l.bf16 %v286
      %v303 = vunpack.c.l.bf16 %v287
      %v304 = vunpack.c.l.bf16 %v288
      %v305 = vunpack.c.l.bf16 %v289
      %v306 = vunpack.c.l.bf16 %v290
      %v307 = vunpack.c.l.bf16 %v291
      %v308 = vunpack.c.l.bf16 %v292
      %v309 = vld [vmem:[%s2] sm:$0x1]
      %v311 = vlaneseq
      %v312 = vshrl.u32 %v311, 7
      %v313 = vsub.s32 0, %v312
      %v314 = vrot.slane %v309, %v313
      %v316 = vmul.f32 %v293, %v314
      %v317 = vmul.f32 %v294, %v314
      %v318 = vmul.f32 %v295, %v314
      %v319 = vmul.f32 %v296, %v314
      %v320 = vmul.f32 %v297, %v314
      %v321 = vmul.f32 %v298, %v314
      %v322 = vmul.f32 %v299, %v314
      %v323 = vmul.f32 %v300, %v314
      %v324 = vmul.f32 %v301, %v314
      %v325 = vmul.f32 %v302, %v314
      %v326 = vmul.f32 %v303, %v314
      %v327 = vmul.f32 %v304, %v314
      %v328 = vmul.f32 %v305, %v314
      %v329 = vmul.f32 %v306, %v314
      %v330 = vmul.f32 %v307, %v314
      %v331 = vmul.f32 %v308, %v314
      %v332 = vld [vmem:[%s3] sm:$0x1]
      %v334 = vlaneseq
      %v335 = vshrl.u32 %v334, 7
      %v336 = vsub.s32 0, %v335
      %v337 = vrot.slane %v332, %v336
      %v339 = vadd.f32 %v316, %v337
      %v340 = vadd.f32 %v317, %v337
      %v341 = vadd.f32 %v318, %v337
      %v342 = vadd.f32 %v319, %v337
      %v343 = vadd.f32 %v320, %v337
      %v344 = vadd.f32 %v321, %v337
      %v345 = vadd.f32 %v322, %v337
      %v346 = vadd.f32 %v323, %v337
      %v347 = vadd.f32 %v324, %v337
      %v348 = vadd.f32 %v325, %v337
      %v349 = vadd.f32 %v326, %v337
      %v350 = vadd.f32 %v327, %v337
      %v351 = vadd.f32 %v328, %v337
      %v352 = vadd.f32 %v329, %v337
      %v353 = vadd.f32 %v330, %v337
      %v354 = vadd.f32 %v331, %v337
      %v355 = vld [vmem:[%s269] sm:$0xf]
      %v356 = vld [vmem:[%s269 + $0x4] sm:$0xf]
      %v357 = vld [vmem:[%s269 + $0x8] sm:$0xf]
      %v358 = vld [vmem:[%s269 + $0xc] sm:$0xf]
      %v359 = vld [vmem:[%s269 + $0x10] sm:$0xf]
      %v360 = vld [vmem:[%s269 + $0x14] sm:$0xf]
      %v361 = vld [vmem:[%s269 + $0x18] sm:$0xf]
      %v362 = vld [vmem:[%s269 + $0x1c] sm:$0xf]
      %v363 = vld [vmem:[%s269 + $0x20] sm:$0xf]
      %v364 = vld [vmem:[%s269 + $0x24] sm:$0xf]
      %v365 = vld [vmem:[%s269 + $0x28] sm:$0xf]
      %v366 = vld [vmem:[%s269 + $0x2c] sm:$0xf]
      %v367 = vld [vmem:[%s269 + $0x30] sm:$0xf]
      %v368 = vld [vmem:[%s269 + $0x34] sm:$0xf]
      %v369 = vld [vmem:[%s269 + $0x38] sm:$0xf]
      %v370 = vld [vmem:[%s269 + $0x3c] sm:$0xf]
      %v371 = vunpack.c.l.bf16 %v355
      %v372 = vunpack.c.l.bf16 %v356
      %v373 = vunpack.c.l.bf16 %v357
      %v374 = vunpack.c.l.bf16 %v358
      %v375 = vunpack.c.l.bf16 %v359
      %v376 = vunpack.c.l.bf16 %v360
      %v377 = vunpack.c.l.bf16 %v361
      %v378 = vunpack.c.l.bf16 %v362
      %v379 = vunpack.c.l.bf16 %v363
      %v380 = vunpack.c.l.bf16 %v364
      %v381 = vunpack.c.l.bf16 %v365
      %v382 = vunpack.c.l.bf16 %v366
      %v383 = vunpack.c.l.bf16 %v367
      %v384 = vunpack.c.l.bf16 %v368
      %v385 = vunpack.c.l.bf16 %v369
      %v386 = vunpack.c.l.bf16 %v370
      %v387 = vld [vmem:[%s4] sm:$0x1]
      %v389 = vlaneseq
      %v390 = vshrl.u32 %v389, 7
      %v391 = vsub.s32 0, %v390
      %v392 = vrot.slane %v387, %v391
      %v394 = vmul.f32 %v371, %v392
      %v395 = vmul.f32 %v372, %v392
      %v396 = vmul.f32 %v373, %v392
      %v397 = vmul.f32 %v374, %v392
      %v398 = vmul.f32 %v375, %v392
      %v399 = vmul.f32 %v376, %v392
      %v400 = vmul.f32 %v377, %v392
      %v401 = vmul.f32 %v378, %v392
      %v402 = vmul.f32 %v379, %v392
      %v403 = vmul.f32 %v380, %v392
      %v404 = vmul.f32 %v381, %v392
      %v405 = vmul.f32 %v382, %v392
      %v406 = vmul.f32 %v383, %v392
      %v407 = vmul.f32 %v384, %v392
      %v408 = vmul.f32 %v385, %v392
      %v409 = vmul.f32 %v386, %v392
      %v410 = vld [vmem:[%s5] sm:$0x1]
      %v412 = vlaneseq
      %v413 = vshrl.u32 %v412, 7
      %v414 = vsub.s32 0, %v413
      %v415 = vrot.slane %v410, %v414
      %v417 = vadd.f32 %v394, %v415
      %v418 = vadd.f32 %v395, %v415
      %v419 = vadd.f32 %v396, %v415
      %v420 = vadd.f32 %v397, %v415
      %v421 = vadd.f32 %v398, %v415
      %v422 = vadd.f32 %v399, %v415
      %v423 = vadd.f32 %v400, %v415
      %v424 = vadd.f32 %v401, %v415
      %v425 = vadd.f32 %v402, %v415
      %v426 = vadd.f32 %v403, %v415
      %v427 = vadd.f32 %v404, %v415
      %v428 = vadd.f32 %v405, %v415
      %v429 = vadd.f32 %v406, %v415
      %v430 = vadd.f32 %v407, %v415
      %v431 = vadd.f32 %v408, %v415
      %v432 = vadd.f32 %v409, %v415
      %v433 = vadd.f32 %v339, %v417
      %v434 = vadd.f32 %v340, %v418
      %v435 = vadd.f32 %v341, %v419
      %v436 = vadd.f32 %v342, %v420
      %v437 = vadd.f32 %v343, %v421
      %v438 = vadd.f32 %v344, %v422
      %v439 = vadd.f32 %v345, %v423
      %v440 = vadd.f32 %v346, %v424
      %v441 = vadd.f32 %v347, %v425
      %v442 = vadd.f32 %v348, %v426
      %v443 = vadd.f32 %v349, %v427
      %v444 = vadd.f32 %v350, %v428
      %v445 = vadd.f32 %v351, %v429
      %v446 = vadd.f32 %v352, %v430
      %v447 = vadd.f32 %v353, %v431
      %v448 = vadd.f32 %v354, %v432
      %v449 = vmax.f32 %v433, 0.0
      %v450 = vmax.f32 %v434, 0.0
      %v451 = vmax.f32 %v435, 0.0
      %v452 = vmax.f32 %v436, 0.0
      %v453 = vmax.f32 %v437, 0.0
      %v454 = vmax.f32 %v438, 0.0
      %v455 = vmax.f32 %v439, 0.0
      %v456 = vmax.f32 %v440, 0.0
      %v457 = vmax.f32 %v441, 0.0
      %v458 = vmax.f32 %v442, 0.0
      %v459 = vmax.f32 %v443, 0.0
      %v460 = vmax.f32 %v444, 0.0
      %v461 = vmax.f32 %v445, 0.0
      %v462 = vmax.f32 %v446, 0.0
      %v463 = vmax.f32 %v447, 0.0
      %v464 = vmax.f32 %v448, 0.0
      %465 = vst [vmem:[%s275] sm:$0xff] %v449
      %466 = vst [vmem:[%s275 + $0x8] sm:$0xff] %v450
      %467 = vst [vmem:[%s275 + $0x10] sm:$0xff] %v451
      %468 = vst [vmem:[%s275 + $0x18] sm:$0xff] %v452
      %469 = vst [vmem:[%s275 + $0x20] sm:$0xff] %v453
      %470 = vst [vmem:[%s275 + $0x28] sm:$0xff] %v454
      %471 = vst [vmem:[%s275 + $0x30] sm:$0xff] %v455
      %472 = vst [vmem:[%s275 + $0x38] sm:$0xff] %v456
      %473 = vst [vmem:[%s275 + $0x40] sm:$0xff] %v457
      %474 = vst [vmem:[%s275 + $0x48] sm:$0xff] %v458
      %475 = vst [vmem:[%s275 + $0x50] sm:$0xff] %v459
      %476 = vst [vmem:[%s275 + $0x58] sm:$0xff] %v460
      %477 = vst [vmem:[%s275 + $0x60] sm:$0xff] %v461
      %478 = vst [vmem:[%s275 + $0x68] sm:$0xff] %v462
      %479 = vst [vmem:[%s275 + $0x70] sm:$0xff] %v463
      %480 = vst [vmem:[%s275 + $0x78] sm:$0xff] %v464
      %s481 = smul.u32 16, %s17
      %p482 = scmp.lt.s32.totalorder %s481, 63
      %s483 = scalar_select %p482, %s481, 63
      %s484 = smul.addr %s483, 8
      %s485 = scalar_lea.vmem %s6, %s484
      // Predicated region
      $region45: #{residual_bottleneck_block.7} parent=43 // pred_check
        %p486 = pneg %p171
      $region46: #{residual_bottleneck_block.7} parent=43 // pred_check_branch
        %488 = sbr.rel (%p486) target = $region48
      $region47: #{residual_bottleneck_block.7} parent=43 // pred_region
        %s489 = smul.u32 16, %s17
      $region48: #{residual_bottleneck_block.7} parent=43 // pred_fallthru
        _
    $region44: #{residual_bottleneck_block.7} parent=5 // pred_fallthru
      _
    %p490 = scmp.le.s32.totalorder 2, %s12
    // Predicated region
    $region49: #{residual_bottleneck_block.7} parent=5 // pred_check
      %p491 = pneg %p490
    $region50: #{residual_bottleneck_block.7} parent=5 // pred_check_branch
      %493 = sbr.rel (%p491) target = $region52
    $region51: #{residual_bottleneck_block.7} parent=5 // pred_region
      %s494 = ssub.s32 %s12, 2
      // Predicated region
      $region53: #{residual_bottleneck_block.7} parent=51 // pred_check
        %p495 = pneg %p177
      $region54: #{residual_bottleneck_block.7} parent=51 // pred_check_branch
        %497 = sbr.rel (%p495) target = $region56
      $region55: #{residual_bottleneck_block.7} parent=51 // pred_region
        %s498 = smul.u32 16, %s18
        %p499 = scmp.lt.s32.totalorder %s498, 63
        %s500 = scalar_select %p499, %s498, 63
        %s501 = smul.addr %s500, 8
        %s502 = scalar_lea.vmem %s6, %s501
      $region56: #{residual_bottleneck_block.7} parent=51 // pred_fallthru
        _
    $region52: #{residual_bottleneck_block.7} parent=5 // pred_fallthru
      _
  $region6: #{residual_bottleneck_block.7} parent=0 // loop_footer
    %s16 = sadd.s32 1, %s12
  $region7: #{residual_bottleneck_block.7} parent=0 // loop_footer_branch
    %11 = sbr.rel target = $region3
  $region8: #{residual_bottleneck_block.7} parent=0 // loop_exit
    _

// kernel: residual_bottleneck_block.4
$region0: #{residual_bottleneck_block.4}
  #allocation0 [shape = 'u32[]', space=smem, size = 0x4, offset = 0x4, fixed_abs, tag = 'smem constant byte address 0x4 - core index']
  #allocation1 [shape = 'u32[144,128]{1,0:T(1,128)}', space=vmem, size = 0x12000, scoped, tag = 'internal scratch']
  %s0 = inlined_call_operand.vmem [shape: bf16[512,128], index: 0, kind: input, shape index: {}]
  %s1 = inlined_call_operand.vmem [shape: bf16[128,128], index: 1, kind: input, shape index: {}]
  %s2 = inlined_call_operand.vmem [shape: bf16[128,128], index: 2, kind: input, shape index: {}]
  %s3 = inlined_call_operand.vmem [shape: bf16[512,128], index: 3, kind: output, shape index: {0}]
  %s4 = inlined_call_operand.vmem [shape: bf16[512,128], index: 4, kind: output, shape index: {1}]
  %s5 = inlined_call_operand.vmem [shape: f32[4,1,128], index: 5, kind: output, shape index: {2}]
  %s6 = inlined_call_operand.vmem [shape: f32[4,1,128], index: 6, kind: output, shape index: {3}]
  %s7 = inlined_call_operand.vmem [shape: f32[4,1,128], index: 7, kind: output, shape index: {4}]
  %s8 = inlined_call_operand.vmem [shape: f32[4,1,128], index: 8, kind: output, shape index: {5}]
  %9 = xla_tuple %s3, %s4, %s5, %s6, %s7, %s8
  %s10 = sld [smem:[#allocation0]]
  $region85: #{residual_bottleneck_block.4} parent=0
    _
  %s12 = ssub.s32 1, %s10
  %s13 = scalar_select 0, %s12, %s10
  loop: start=0, step=1, limit=6
  $region2: #{residual_bottleneck_block.4} parent=0 // loop_pre_header
    _
  $region3: #{residual_bottleneck_block.4} parent=0 // loop_header
    %s15 = sphi 0, %s19
    %p16 = scmp.ge.s32.totalorder %s15, 6
    %s25 = sphi 0, %s27
    %s28 = sphi 0, %s25
    %s29 = sphi 0, %s28
    %s45 = sphi 0, %s29
    %s49 = sphi 0, %s49
    %s51 = sphi 0, %s49
    %s52 = sphi 0, %s51
    %s66 = sphi 0, %s52
    %s70 = sphi 0, %s70
    %s72 = sphi 0, %s70
    %s73 = sphi 0, %s72
    %s87 = sphi 0, %s73
    %s93 = sphi 0, %s95
    %s96 = sphi 0, %s93
    %s97 = sphi 0, %s96
    %s113 = sphi 0, %s97
    %s119 = sphi 0, %s121
    %s122 = sphi 0, %s119
    %s123 = sphi 0, %s122
    %s139 = sphi 0, %s123
    %s145 = sphi 0, %s147
    %s148 = sphi 0, %s145
    %s149 = sphi 0, %s148
    %s165 = sphi 0, %s149
    %s171 = sphi 0, %s173
    %s174 = sphi 0, %s171
    %s175 = sphi 0, %s174
    %s191 = sphi 0, %s175
    %s197 = sphi 0, %s199
    %s200 = sphi 0, %s197
    %s201 = sphi 0, %s200
    %s217 = sphi 0, %s201
    %s223 = sphi 0, %s225
    %s226 = sphi 0, %s223
    %s227 = sphi 0, %s226
    %s243 = sphi 0, %s227
  $region4: #{residual_bottleneck_block.4} parent=0 // loop_header_branch
    %18 = sbr.rel (%p16) target = $region8
  $region5: #{residual_bottleneck_block.4} parent=0 // loop_body
    %s20 = ssub.s32 %s15, 1
    %s21 = ssub.s32 %s15, 2
    %s22 = sadd.s32 %s15, 1
    %s23 = ssub.s32 %s15, %s22
    %p24 = scmp.eq.s32.totalorder %s23, 0
    %s26 = sadd.s32 %s25, 1
    %s27 = scalar_select %p24, %s25, %s26
    %p30 = pneg %p24
    %p31 = scmp.eq.s32.totalorder %s15, 3
    %p32 = por %p30, %p31
    %p33 = scmp.ne.s32.totalorder %s25, %s28
    %p34 = scmp.eq.s32.totalorder %s15, 0
    %p35 = por %p33, %p34
    %p36 = scmp.ne.s32.totalorder %s25, %s28
    %p37 = scmp.eq.s32.totalorder %s20, 3
    %p38 = por %p36, %p37
    %p39 = scmp.ne.s32.totalorder %s28, %s29
    %p40 = scmp.eq.s32.totalorder %s20, 0
    %p41 = por %p39, %p40
    %p42 = scmp.ne.s32.totalorder %s28, %s29
    %p43 = scmp.eq.s32.totalorder %s21, 3
    %p44 = por %p42, %p43
    %p46 = scmp.ne.s32.totalorder %s29, %s45
    %p47 = scmp.eq.s32.totalorder %s21, 0
    %p48 = por %p46, %p47
    %s50 = sadd.s32 %s49, 1
    %p53 = scmp.eq.s32.totalorder %s15, 3
    %p54 = scmp.ne.s32.totalorder %s49, %s51
    %p55 = scmp.eq.s32.totalorder %s15, 0
    %p56 = por %p54, %p55
    %p57 = scmp.ne.s32.totalorder %s49, %s51
    %p58 = scmp.eq.s32.totalorder %s20, 3
    %p59 = por %p57, %p58
    %p60 = scmp.ne.s32.totalorder %s51, %s52
    %p61 = scmp.eq.s32.totalorder %s20, 0
    %p62 = por %p60, %p61
    %p63 = scmp.ne.s32.totalorder %s51, %s52
    %p64 = scmp.eq.s32.totalorder %s21, 3
    %p65 = por %p63, %p64
    %p67 = scmp.ne.s32.totalorder %s52, %s66
    %p68 = scmp.eq.s32.totalorder %s21, 0
    %p69 = por %p67, %p68
    %s71 = sadd.s32 %s70, 1
    %p74 = scmp.eq.s32.totalorder %s15, 3
    %p75 = scmp.ne.s32.totalorder %s70, %s72
    %p76 = scmp.eq.s32.totalorder %s15, 0
    %p77 = por %p75, %p76
    %p78 = scmp.ne.s32.totalorder %s70, %s72
    %p79 = scmp.eq.s32.totalorder %s20, 3
    %p80 = por %p78, %p79
    %p81 = scmp.ne.s32.totalorder %s72, %s73
    %p82 = scmp.eq.s32.totalorder %s20, 0
    %p83 = por %p81, %p82
    %p84 = scmp.ne.s32.totalorder %s72, %s73
    %p85 = scmp.eq.s32.totalorder %s21, 3
    %p86 = por %p84, %p85
    %p88 = scmp.ne.s32.totalorder %s73, %s87
    %p89 = scmp.eq.s32.totalorder %s21, 0
    %p90 = por %p88, %p89
    %s91 = ssub.s32 %s15, %s22
    %p92 = scmp.eq.s32.totalorder %s91, 0
    %s94 = sadd.s32 %s93, 1
    %s95 = scalar_select %p92, %s93, %s94
    %p98 = pneg %p92
    %p99 = scmp.eq.s32.totalorder %s15, 3
    %p100 = por %p98, %p99
    %p101 = scmp.ne.s32.totalorder %s93, %s96
    %p102 = scmp.eq.s32.totalorder %s15, 0
    %p103 = por %p101, %p102
    %p104 = scmp.ne.s32.totalorder %s93, %s96
    %p105 = scmp.eq.s32.totalorder %s20, 3
    %p106 = por %p104, %p105
    %p107 = scmp.ne.s32.totalorder %s96, %s97
    %p108 = scmp.eq.s32.totalorder %s20, 0
    %p109 = por %p107, %p108
    %p110 = scmp.ne.s32.totalorder %s96, %s97
    %p111 = scmp.eq.s32.totalorder %s21, 3
    %p112 = por %p110, %p111
    %p114 = scmp.ne.s32.totalorder %s97, %s113
    %p115 = scmp.eq.s32.totalorder %s21, 0
    %p116 = por %p114, %p115
    %s117 = ssub.s32 %s15, %s22
    %p118 = scmp.eq.s32.totalorder %s117, 0
    %s120 = sadd.s32 %s119, 1
    %s121 = scalar_select %p118, %s119, %s120
    %p124 = pneg %p118
    %p125 = scmp.eq.s32.totalorder %s15, 3
    %p126 = por %p124, %p125
    %p127 = scmp.ne.s32.totalorder %s119, %s122
    %p128 = scmp.eq.s32.totalorder %s15, 0
    %p129 = por %p127, %p128
    %p130 = scmp.ne.s32.totalorder %s119, %s122
    %p131 = scmp.eq.s32.totalorder %s20, 3
    %p132 = por %p130, %p131
    %p133 = scmp.ne.s32.totalorder %s122, %s123
    %p134 = scmp.eq.s32.totalorder %s20, 0
    %p135 = por %p133, %p134
    %p136 = scmp.ne.s32.totalorder %s122, %s123
    %p137 = scmp.eq.s32.totalorder %s21, 3
    %p138 = por %p136, %p137
    %p140 = scmp.ne.s32.totalorder %s123, %s139
    %p141 = scmp.eq.s32.totalorder %s21, 0
    %p142 = por %p140, %p141
    %s143 = ssub.s32 %s15, %s22
    %p144 = scmp.eq.s32.totalorder %s143, 0
    %s146 = sadd.s32 %s145, 1
    %s147 = scalar_select %p144, %s145, %s146
    %p150 = pneg %p144
    %p151 = scmp.eq.s32.totalorder %s15, 3
    %p152 = por %p150, %p151
    %p153 = scmp.ne.s32.totalorder %s145, %s148
    %p154 = scmp.eq.s32.totalorder %s15, 0
    %p155 = por %p153, %p154
    %p156 = scmp.ne.s32.totalorder %s145, %s148
    %p157 = scmp.eq.s32.totalorder %s20, 3
    %p158 = por %p156, %p157
    %p159 = scmp.ne.s32.totalorder %s148, %s149
    %p160 = scmp.eq.s32.totalorder %s20, 0
    %p161 = por %p159, %p160
    %p162 = scmp.ne.s32.totalorder %s148, %s149
    %p163 = scmp.eq.s32.totalorder %s21, 3
    %p164 = por %p162, %p163
    %p166 = scmp.ne.s32.totalorder %s149, %s165
    %p167 = scmp.eq.s32.totalorder %s21, 0
    %p168 = por %p166, %p167
    %s169 = ssub.s32 %s15, %s22
    %p170 = scmp.eq.s32.totalorder %s169, 0
    %s172 = sadd.s32 %s171, 1
    %s173 = scalar_select %p170, %s171, %s172
    %p176 = pneg %p170
    %p177 = scmp.eq.s32.totalorder %s15, 3
    %p178 = por %p176, %p177
    %p179 = scmp.ne.s32.totalorder %s171, %s174
    %p180 = scmp.eq.s32.totalorder %s15, 0
    %p181 = por %p179, %p180
    %p182 = scmp.ne.s32.totalorder %s171, %s174
    %p183 = scmp.eq.s32.totalorder %s20, 3
    %p184 = por %p182, %p183
    %p185 = scmp.ne.s32.totalorder %s174, %s175
    %p186 = scmp.eq.s32.totalorder %s20, 0
    %p187 = por %p185, %p186
    %p188 = scmp.ne.s32.totalorder %s174, %s175
    %p189 = scmp.eq.s32.totalorder %s21, 3
    %p190 = por %p188, %p189
    %p192 = scmp.ne.s32.totalorder %s175, %s191
    %p193 = scmp.eq.s32.totalorder %s21, 0
    %p194 = por %p192, %p193
    %s195 = ssub.s32 %s15, %s22
    %p196 = scmp.eq.s32.totalorder %s195, 0
    %s198 = sadd.s32 %s197, 1
    %s199 = scalar_select %p196, %s197, %s198
    %p202 = pneg %p196
    %p203 = scmp.eq.s32.totalorder %s15, 3
    %p204 = por %p202, %p203
    %p205 = scmp.ne.s32.totalorder %s197, %s200
    %p206 = scmp.eq.s32.totalorder %s15, 0
    %p207 = por %p205, %p206
    %p208 = scmp.ne.s32.totalorder %s197, %s200
    %p209 = scmp.eq.s32.totalorder %s20, 3
    %p210 = por %p208, %p209
    %p211 = scmp.ne.s32.totalorder %s200, %s201
    %p212 = scmp.eq.s32.totalorder %s20, 0
    %p213 = por %p211, %p212
    %p214 = scmp.ne.s32.totalorder %s200, %s201
    %p215 = scmp.eq.s32.totalorder %s21, 3
    %p216 = por %p214, %p215
    %p218 = scmp.ne.s32.totalorder %s201, %s217
    %p219 = scmp.eq.s32.totalorder %s21, 0
    %p220 = por %p218, %p219
    %s221 = ssub.s32 %s15, %s22
    %p222 = scmp.eq.s32.totalorder %s221, 0
    %s224 = sadd.s32 %s223, 1
    %s225 = scalar_select %p222, %s223, %s224
    %p228 = pneg %p222
    %p229 = scmp.eq.s32.totalorder %s15, 3
    %p230 = por %p228, %p229
    %p231 = scmp.ne.s32.totalorder %s223, %s226
    %p232 = scmp.eq.s32.totalorder %s15, 0
    %p233 = por %p231, %p232
    %p234 = scmp.ne.s32.totalorder %s223, %s226
    %p235 = scmp.eq.s32.totalorder %s20, 3
    %p236 = por %p234, %p235
    %p237 = scmp.ne.s32.totalorder %s226, %s227
    %p238 = scmp.eq.s32.totalorder %s20, 0
    %p239 = por %p237, %p238
    %p240 = scmp.ne.s32.totalorder %s226, %s227
    %p241 = scmp.eq.s32.totalorder %s21, 3
    %p242 = por %p240, %p241
    %p244 = scmp.ne.s32.totalorder %s227, %s243
    %p245 = scmp.eq.s32.totalorder %s21, 0
    %p246 = por %p244, %p245
    %p247 = scmp.le.s32.totalorder 1, %s15
    %p248 = scmp.lt.s32.totalorder %s15, 5
    %p249 = pnand %p247, %p248
    %p250 = pneg %p249
    // Predicated region
    $region9: #{residual_bottleneck_block.4} parent=5 // pred_check
      _
    $region10: #{residual_bottleneck_block.4} parent=5 // pred_check_branch
      %252 = sbr.rel (%p249) target = $region12
    $region11: #{residual_bottleneck_block.4} parent=5 // pred_region
      %s253 = ssub.s32 %s15, 1
      // Predicated region
      $region13: #{residual_bottleneck_block.4} parent=11 // pred_check
        %p254 = pneg %p62
      $region14: #{residual_bottleneck_block.4} parent=11 // pred_check_branch
        %256 = sbr.rel (%p254) target = $region16
      $region15: #{residual_bottleneck_block.4} parent=11 // pred_region
        _
      $region16: #{residual_bottleneck_block.4} parent=11 // pred_fallthru
        _
      // Predicated region
      $region17: #{residual_bottleneck_block.4} parent=11 // pred_check
        %p257 = pneg %p83
      $region18: #{residual_bottleneck_block.4} parent=11 // pred_check_branch
        %259 = sbr.rel (%p257) target = $region20
      $region19: #{residual_bottleneck_block.4} parent=11 // pred_region
        _
      $region20: #{residual_bottleneck_block.4} parent=11 // pred_fallthru
        _
    $region12: #{residual_bottleneck_block.4} parent=5 // pred_fallthru
      _
    %p260 = scmp.lt.s32.totalorder %s15, 4
    // Predicated region
    $region21: #{residual_bottleneck_block.4} parent=5 // pred_check
      %p261 = pneg %p260
    $region22: #{residual_bottleneck_block.4} parent=5 // pred_check_branch
      %263 = sbr.rel (%p261) target = $region24
    $region23: #{residual_bottleneck_block.4} parent=5 // pred_region
      // Predicated region
      $region25: #{residual_bottleneck_block.4} parent=23 // pred_check
        %p264 = pneg %p35
      $region26: #{residual_bottleneck_block.4} parent=23 // pred_check_branch
        %266 = sbr.rel (%p264) target = $region28
      $region27: #{residual_bottleneck_block.4} parent=23 // pred_region
        %s267 = smul.u32 16, %s15
        %p268 = scmp.lt.s32.totalorder %s267, 63
        %s269 = scalar_select %p268, %s267, 63
        %s270 = smul.addr %s269, 4
        %s271 = scalar_lea.vmem %s0, %s270
        %s272 = smul.u32 16, %s15
      $region28: #{residual_bottleneck_block.4} parent=23 // pred_fallthru
        _
    $region24: #{residual_bottleneck_block.4} parent=5 // pred_fallthru
      _
    %p273 = scmp.le.s32.totalorder 1, %s15
    %p274 = scmp.lt.s32.totalorder %s15, 5
    %p275 = pnand %p273, %p274
    %p276 = pneg %p275
    // Predicated region
    $region29: #{residual_bottleneck_block.4} parent=5 // pred_check
      _
    $region30: #{residual_bottleneck_block.4} parent=5 // pred_check_branch
      %278 = sbr.rel (%p275) target = $region32
    $region31: #{residual_bottleneck_block.4} parent=5 // pred_region
      %s279 = ssub.s32 %s15, 1
      %s280 = smul.u32 16, %s20
      %p281 = scmp.lt.s32.totalorder %s280, 63
      %s282 = scalar_select %p281, %s280, 63
      %s283 = smul.addr %s282, 4
      %s284 = scalar_lea.vmem %s0, %s283
      %p285 = pneg %p41
      %p286 = pneg %p38
      %p287 = pneg %p62
      %p288 = pneg %p59
      %p289 = pneg %p83
      %p290 = pneg %p80
      %p291 = pneg %p109
      %p292 = pneg %p106
      %s293 = smul.u32 16, %s20
      %p294 = scmp.lt.s32.totalorder %s293, 63
      %s295 = scalar_select %p294, %s293, 63
      %s296 = smul.addr %s295, 4
      %s297 = scalar_lea.vmem %s3, %s296
      %p298 = pneg %p135
      %p299 = pneg %p132
      %s300 = smul.u32 16, %s20
      %p301 = scmp.lt.s32.totalorder %s300, 63
      %s302 = scalar_select %p301, %s300, 63
      %s303 = smul.addr %s302, 4
      %s304 = scalar_lea.vmem %s4, %s303
      %p305 = pneg %p161
      %p306 = pneg %p158
      %p307 = scmp.lt.s32.totalorder %s20, 3
      %s308 = scalar_select %p307, %s20, 3
      %s309 = scalar_lea.vmem %s5, %s308
      %p310 = pneg %p187
      %p311 = pneg %p184
      %p312 = scmp.lt.s32.totalorder %s20, 3
      %s313 = scalar_select %p312, %s20, 3
      %s314 = scalar_lea.vmem %s6, %s313
      %p315 = pneg %p213
      %p316 = pneg %p210
      %p317 = scmp.lt.s32.totalorder %s20, 3
      %s318 = scalar_select %p317, %s20, 3
      %s319 = scalar_lea.vmem %s7, %s318
      %p320 = pneg %p239
      %p321 = pneg %p236
      %p322 = scmp.lt.s32.totalorder %s20, 3
      %s323 = scalar_select %p322, %s20, 3
      %s324 = scalar_lea.vmem %s8, %s323
      %s325 = smul.u32 16, %s20
      %p326 = scmp.lt.s32.totalorder %s325, 63
      %s327 = scalar_select %p326, %s325, 63
      %s328 = smul.addr %s327, 4
      %s329 = scalar_lea.vmem %s0, %s328
      %s330 = smul.u32 16, %s20
      %s331 = smul.u32 16, %s20
      %p332 = scmp.lt.s32.totalorder %s331, 63
      %s333 = scalar_select %p332, %s331, 63
      %s334 = smul.addr %s333, 4
      %s335 = scalar_lea.vmem %s3, %s334
      %s336 = smul.u32 16, %s20
      %s337 = smul.u32 16, %s20
      %p338 = scmp.lt.s32.totalorder %s337, 63
      %s339 = scalar_select %p338, %s337, 63
      %s340 = smul.addr %s339, 4
      %s341 = scalar_lea.vmem %s4, %s340
      %s342 = smul.u32 16, %s20
      %p343 = scmp.lt.s32.totalorder %s20, 3
      %s344 = scalar_select %p343, %s20, 3
      %s345 = scalar_lea.vmem %s5, %s344
      %p346 = scmp.lt.s32.totalorder %s20, 3
      %s347 = scalar_select %p346, %s20, 3
      %s348 = scalar_lea.vmem %s6, %s347
      %p349 = scmp.lt.s32.totalorder %s20, 3
      %s350 = scalar_select %p349, %s20, 3
      %s351 = scalar_lea.vmem %s7, %s350
      %p352 = scmp.lt.s32.totalorder %s20, 3
      %s353 = scalar_select %p352, %s20, 3
      %s354 = scalar_lea.vmem %s8, %s353
      %v356 = vld [vmem:[%s329] sm:$0xf]
      %v357 = vld [vmem:[%s329 + $0x4] sm:$0xf]
      %v358 = vld [vmem:[%s329 + $0x8] sm:$0xf]
      %v359 = vld [vmem:[%s329 + $0xc] sm:$0xf]
      %v360 = vld [vmem:[%s329 + $0x10] sm:$0xf]
      %v361 = vld [vmem:[%s329 + $0x14] sm:$0xf]
      %v362 = vld [vmem:[%s329 + $0x18] sm:$0xf]
      %v363 = vld [vmem:[%s329 + $0x1c] sm:$0xf]
      %v364 = vld [vmem:[%s329 + $0x20] sm:$0xf]
      %v365 = vld [vmem:[%s329 + $0x24] sm:$0xf]
      %v366 = vld [vmem:[%s329 + $0x28] sm:$0xf]
      %v367 = vld [vmem:[%s329 + $0x2c] sm:$0xf]
      %v368 = vld [vmem:[%s329 + $0x30] sm:$0xf]
      %v369 = vld [vmem:[%s329 + $0x34] sm:$0xf]
      %v370 = vld [vmem:[%s329 + $0x38] sm:$0xf]
      %v371 = vld [vmem:[%s329 + $0x3c] sm:$0xf]
      %v372 = vld [vmem:[%s1] sm:$0xf]
      %v373 = vld [vmem:[%s1 + $0x4] sm:$0xf]
      %v374 = vld [vmem:[%s1 + $0x8] sm:$0xf]
      %v375 = vld [vmem:[%s1 + $0xc] sm:$0xf]
      %v376 = vld [vmem:[%s1 + $0x10] sm:$0xf]
      %v377 = vld [vmem:[%s1 + $0x14] sm:$0xf]
      %v378 = vld [vmem:[%s1 + $0x18] sm:$0xf]
      %v379 = vld [vmem:[%s1 + $0x1c] sm:$0xf]
      %v380 = vld [vmem:[%s1 + $0x20] sm:$0xf]
      %v381 = vld [vmem:[%s1 + $0x24] sm:$0xf]
      %v382 = vld [vmem:[%s1 + $0x28] sm:$0xf]
      %v383 = vld [vmem:[%s1 + $0x2c] sm:$0xf]
      %v384 = vld [vmem:[%s1 + $0x30] sm:$0xf]
      %v385 = vld [vmem:[%s1 + $0x34] sm:$0xf]
      %v386 = vld [vmem:[%s1 + $0x38] sm:$0xf]
      %v387 = vld [vmem:[%s1 + $0x3c] sm:$0xf]
      %v404 = vunpack.c.l.b16 %v356
      %v405 = vunpack.c.l.b16 %v357
      %v406 = vunpack.c.l.b16 %v358
      %v407 = vunpack.c.l.b16 %v359
      %v408 = vunpack.c.l.b16 %v360
      %v409 = vunpack.c.l.b16 %v361
      %v410 = vunpack.c.l.b16 %v362
      %v411 = vunpack.c.l.b16 %v363
      %v412 = vunpack.c.l.b16 %v364
      %v413 = vunpack.c.l.b16 %v365
      %v414 = vunpack.c.l.b16 %v366
      %v415 = vunpack.c.l.b16 %v367
      %v416 = vunpack.c.l.b16 %v368
      %v417 = vunpack.c.l.b16 %v369
      %v418 = vunpack.c.l.b16 %v370
      %v419 = vunpack.c.l.b16 %v371
      %v420 = vpack.c.b16 %v405, %v404
      %v421 = vpack.c.b16 %v407, %v406
      %v422 = vpack.c.b16 %v409, %v408
      %v423 = vpack.c.b16 %v411, %v410
      %v424 = vpack.c.b16 %v413, %v412
      %v425 = vpack.c.b16 %v415, %v414
      %v426 = vpack.c.b16 %v417, %v416
      %v427 = vpack.c.b16 %v419, %v418
      %v452 = vunpack.c.l.b16 %v372
      %v453 = vunpack.c.l.b16 %v373
      %v454 = vunpack.c.l.b16 %v374
      %v455 = vunpack.c.l.b16 %v375
      %v456 = vunpack.c.l.b16 %v376
      %v457 = vunpack.c.l.b16 %v377
      %v458 = vunpack.c.l.b16 %v378
      %v459 = vunpack.c.l.b16 %v379
      %v460 = vunpack.c.l.b16 %v380
      %v461 = vunpack.c.l.b16 %v381
      %v462 = vunpack.c.l.b16 %v382
      %v463 = vunpack.c.l.b16 %v383
      %v464 = vunpack.c.l.b16 %v384
      %v465 = vunpack.c.l.b16 %v385
      %v466 = vunpack.c.l.b16 %v386
      %v467 = vunpack.c.l.b16 %v387
      %v468 = vpack.c.b16 %v453, %v452
      %v469 = vpack.c.b16 %v455, %v454
      %v470 = vpack.c.b16 %v457, %v456
      %v471 = vpack.c.b16 %v459, %v458
      %v472 = vpack.c.b16 %v461, %v460
      %v473 = vpack.c.b16 %v463, %v462
      %v474 = vpack.c.b16 %v465, %v464
      %v475 = vpack.c.b16 %v467, %v466
      %484 = vmatprep.subr.bf16.mxu0 0
      %485 = vmatpush1.bf16.msra.mxu0 %v468
      %486 = vmatprep.subr.bf16.mxu0 0
      %487 = vmatpush1.bf16.msra.mxu0 %v469
      %488 = vmatprep.subr.bf16.mxu0 0
      %489 = vmatpush1.bf16.msra.mxu0 %v470
      %490 = vmatprep.subr.bf16.mxu0 0
      %491 = vmatpush1.bf16.msra.mxu0 %v471
      %492 = vmatprep.subr.bf16.mxu0 0
      %493 = vmatpush1.bf16.msra.mxu0 %v472
      %494 = vmatprep.subr.bf16.mxu0 0
      %495 = vmatpush1.bf16.msra.mxu0 %v473
      %496 = vmatprep.subr.bf16.mxu0 0
      %497 = vmatpush1.bf16.msra.mxu0 %v474
      %498 = vmatprep.subr.bf16.mxu0 0
      %499 = vmatpush1.bf16.msra.mxu0 %v475
      %500 = vmatprep.subr.bf16.mxu0 0
      %501 = vmatpush1.bf16.msra.mxu0 0
      %502 = vmatprep.subr.bf16.mxu0 0
      %503 = vmatpush1.bf16.msra.mxu0 0
      %504 = vmatprep.subr.bf16.mxu0 0
      %505 = vmatpush1.bf16.msra.mxu0 0
      %506 = vmatprep.subr.bf16.mxu0 0
      %507 = vmatpush1.bf16.msra.mxu0 0
      %508 = vmatprep.subr.bf16.mxu0 0
      %509 = vmatpush1.bf16.msra.mxu0 0
      %510 = vmatprep.subr.bf16.mxu0 0
      %511 = vmatpush1.bf16.msra.mxu0 0
      %512 = vmatprep.subr.bf16.mxu0 0
      %513 = vmatpush1.bf16.msra.mxu0 0
      %514 = vmatprep.subr.bf16.mxu0 0
      %515 = vmatpush1.bf16.msra.mxu0 0
      %516 = vmatprep.mubr.bf16.mxu0 0
      %517 = vmatmul.mubr.bf16.gmra.mrb[0].mxu0 %v420
      %v518 = vpop.f32.mrb[0].mxu0
      %v519 = vadd.f32 0.0, %v518
      %v520 = vpop.f32.mrb[0].mxu0
      %v521 = vpop.f32.mrb[0].mxu0
      %v522 = vadd.f32 0.0, %v521
      %v523 = vpop.f32.mrb[0].mxu0
      %524 = vmatprep.mubr.bf16.mxu0 0
      %525 = vmatmul.mubr.bf16.gmra.mrb[0].mxu0 %v421
      %v526 = vpop.f32.mrb[0].mxu0
      %v527 = vadd.f32 0.0, %v526
      %v528 = vpop.f32.mrb[0].mxu0
      %v529 = vpop.f32.mrb[0].mxu0
      %v530 = vadd.f32 0.0, %v529
      %v531 = vpop.f32.mrb[0].mxu0
      %532 = vmatprep.mubr.bf16.mxu0 0
      %533 = vmatmul.mubr.bf16.gmra.mrb[0].mxu0 %v422
      %v534 = vpop.f32.mrb[0].mxu0
      %v535 = vadd.f32 0.0, %v534
      %v536 = vpop.f32.mrb[0].mxu0
      %v537 = vpop.f32.mrb[0].mxu0
      %v538 = vadd.f32 0.0, %v537
      %v539 = vpop.f32.mrb[0].mxu0
      %540 = vmatprep.mubr.bf16.mxu0 0
      %541 = vmatmul.mubr.bf16.gmra.mrb[0].mxu0 %v423
      %v542 = vpop.f32.mrb[0].mxu0
      %v543 = vadd.f32 0.0, %v542
      %v544 = vpop.f32.mrb[0].mxu0
      %v545 = vpop.f32.mrb[0].mxu0
      %v546 = vadd.f32 0.0, %v545
      %v547 = vpop.f32.mrb[0].mxu0
      %548 = vmatprep.mubr.bf16.mxu0 0
      %549 = vmatmul.mubr.bf16.gmra.mrb[0].mxu0 %v424
      %v550 = vpop.f32.mrb[0].mxu0
      %v551 = vadd.f32 0.0, %v550
      %v552 = vpop.f32.mrb[0].mxu0
      %v553 = vpop.f32.mrb[0].mxu0
      %v554 = vadd.f32 0.0, %v553
      %v555 = vpop.f32.mrb[0].mxu0
      %556 = vmatprep.mubr.bf16.mxu0 0
      %557 = vmatmul.mubr.bf16.gmra.mrb[0].mxu0 %v425
      %v558 = vpop.f32.mrb[0].mxu0
      %v559 = vadd.f32 0.0, %v558
      %v560 = vpop.f32.mrb[0].mxu0
      %v561 = vpop.f32.mrb[0].mxu0
      %v562 = vadd.f32 0.0, %v561
      %v563 = vpop.f32.mrb[0].mxu0
      %564 = vmatprep.mubr.bf16.mxu0 0
      %565 = vmatmul.mubr.bf16.gmra.mrb[0].mxu0 %v426
      %v566 = vpop.f32.mrb[0].mxu0
      %v567 = vadd.f32 0.0, %v566
      %v568 = vpop.f32.mrb[0].mxu0
      %v569 = vpop.f32.mrb[0].mxu0
      %v570 = vadd.f32 0.0, %v569
      %v571 = vpop.f32.mrb[0].mxu0
      %572 = vmatprep.mubr.bf16.mxu0 0
      %573 = vmatmul.mubr.bf16.gmra.mrb[0].mxu0 %v427
      %v574 = vpop.f32.mrb[0].mxu0
      %v575 = vadd.f32 0.0, %v574
      %v576 = vpop.f32.mrb[0].mxu0
      %v577 = vpop.f32.mrb[0].mxu0
      %v578 = vadd.f32 0.0, %v577
      %v579 = vpop.f32.mrb[0].mxu0
      %580 = vdwg.mxu0
      %v581 = vld [vmem:[%s2] sm:$0xf]
      %v582 = vld [vmem:[%s2 + $0x4] sm:$0xf]
      %v583 = vld [vmem:[%s2 + $0x8] sm:$0xf]
      %v584 = vld [vmem:[%s2 + $0xc] sm:$0xf]
      %v585 = vld [vmem:[%s2 + $0x10] sm:$0xf]
      %v586 = vld [vmem:[%s2 + $0x14] sm:$0xf]
      %v587 = vld [vmem:[%s2 + $0x18] sm:$0xf]
      %v588 = vld [vmem:[%s2 + $0x1c] sm:$0xf]
      %v589 = vld [vmem:[%s2 + $0x20] sm:$0xf]
      %v590 = vld [vmem:[%s2 + $0x24] sm:$0xf]
      %v591 = vld [vmem:[%s2 + $0x28] sm:$0xf]
      %v592 = vld [vmem:[%s2 + $0x2c] sm:$0xf]
      %v593 = vld [vmem:[%s2 + $0x30] sm:$0xf]
      %v594 = vld [vmem:[%s2 + $0x34] sm:$0xf]
      %v595 = vld [vmem:[%s2 + $0x38] sm:$0xf]
      %v596 = vld [vmem:[%s2 + $0x3c] sm:$0xf]
      %v613 = vunpack.c.l.b16 %v581
      %v614 = vunpack.c.l.b16 %v582
      %v615 = vunpack.c.l.b16 %v583
      %v616 = vunpack.c.l.b16 %v584
      %v617 = vunpack.c.l.b16 %v585
      %v618 = vunpack.c.l.b16 %v586
      %v619 = vunpack.c.l.b16 %v587
      %v620 = vunpack.c.l.b16 %v588
      %v621 = vunpack.c.l.b16 %v589
      %v622 = vunpack.c.l.b16 %v590
      %v623 = vunpack.c.l.b16 %v591
      %v624 = vunpack.c.l.b16 %v592
      %v625 = vunpack.c.l.b16 %v593
      %v626 = vunpack.c.l.b16 %v594
      %v627 = vunpack.c.l.b16 %v595
      %v628 = vunpack.c.l.b16 %v596
      %v629 = vpack.c.b16 %v614, %v613
      %v630 = vpack.c.b16 %v616, %v615
      %v631 = vpack.c.b16 %v618, %v617
      %v632 = vpack.c.b16 %v620, %v619
      %v633 = vpack.c.b16 %v622, %v621
      %v634 = vpack.c.b16 %v624, %v623
      %v635 = vpack.c.b16 %v626, %v625
      %v636 = vpack.c.b16 %v628, %v627
      %645 = vmatprep.subr.bf16.mxu0 0
      %646 = vmatpush1.bf16.msra.mxu0 %v629
      %647 = vmatprep.subr.bf16.mxu0 0
      %648 = vmatpush1.bf16.msra.mxu0 %v630
      %649 = vmatprep.subr.bf16.mxu0 0
      %650 = vmatpush1.bf16.msra.mxu0 %v631
      %651 = vmatprep.subr.bf16.mxu0 0
      %652 = vmatpush1.bf16.msra.mxu0 %v632
      %653 = vmatprep.subr.bf16.mxu0 0
      %654 = vmatpush1.bf16.msra.mxu0 %v633
      %655 = vmatprep.subr.bf16.mxu0 0
      %656 = vmatpush1.bf16.msra.mxu0 %v634
      %657 = vmatprep.subr.bf16.mxu0 0
      %658 = vmatpush1.bf16.msra.mxu0 %v635
      %659 = vmatprep.subr.bf16.mxu0 0
      %660 = vmatpush1.bf16.msra.mxu0 %v636
      %661 = vmatprep.subr.bf16.mxu0 0
      %662 = vmatpush1.bf16.msra.mxu0 0
      %663 = vmatprep.subr.bf16.mxu0 0
      %664 = vmatpush1.bf16.msra.mxu0 0
      %665 = vmatprep.subr.bf16.mxu0 0
      %666 = vmatpush1.bf16.msra.mxu0 0
      %667 = vmatprep.subr.bf16.mxu0 0
      %668 = vmatpush1.bf16.msra.mxu0 0
      %669 = vmatprep.subr.bf16.mxu0 0
      %670 = vmatpush1.bf16.msra.mxu0 0
      %671 = vmatprep.subr.bf16.mxu0 0
      %672 = vmatpush1.bf16.msra.mxu0 0
      %673 = vmatprep.subr.bf16.mxu0 0
      %674 = vmatpush1.bf16.msra.mxu0 0
      %675 = vmatprep.subr.bf16.mxu0 0
      %676 = vmatpush1.bf16.msra.mxu0 0
      %677 = vmatprep.mubr.bf16.mxu0 0
      %678 = vmatmul.mubr.bf16.gmra.mrb[0].mxu0 %v420
      %v679 = vpop.f32.mrb[0].mxu0
      %v680 = vadd.f32 0.0, %v679
      %v681 = vpop.f32.mrb[0].mxu0
      %v682 = vpop.f32.mrb[0].mxu0
      %v683 = vadd.f32 0.0, %v682
      %v684 = vpop.f32.mrb[0].mxu0
      %685 = vmatprep.mubr.bf16.mxu0 0
      %686 = vmatmul.mubr.bf16.gmra.mrb[0].mxu0 %v421
      %v687 = vpop.f32.mrb[0].mxu0
      %v688 = vadd.f32 0.0, %v687
      %v689 = vpop.f32.mrb[0].mxu0
      %v690 = vpop.f32.mrb[0].mxu0
      %v691 = vadd.f32 0.0, %v690
      %v692 = vpop.f32.mrb[0].mxu0
      %693 = vmatprep.mubr.bf16.mxu0 0
      %694 = vmatmul.mubr.bf16.gmra.mrb[0].mxu0 %v422
      %v695 = vpop.f32.mrb[0].mxu0
      %v696 = vadd.f32 0.0, %v695
      %v697 = vpop.f32.mrb[0].mxu0
      %v698 = vpop.f32.mrb[0].mxu0
      %v699 = vadd.f32 0.0, %v698
      %v700 = vpop.f32.mrb[0].mxu0
      %701 = vmatprep.mubr.bf16.mxu0 0
      %702 = vmatmul.mubr.bf16.gmra.mrb[0].mxu0 %v423
      %v703 = vpop.f32.mrb[0].mxu0
      %v704 = vadd.f32 0.0, %v703
      %v705 = vpop.f32.mrb[0].mxu0
      %v706 = vpop.f32.mrb[0].mxu0
      %v707 = vadd.f32 0.0, %v706
      %v708 = vpop.f32.mrb[0].mxu0
      %709 = vmatprep.mubr.bf16.mxu0 0
      %710 = vmatmul.mubr.bf16.gmra.mrb[0].mxu0 %v424
      %v711 = vpop.f32.mrb[0].mxu0
      %v712 = vadd.f32 0.0, %v711
      %v713 = vpop.f32.mrb[0].mxu0
      %v714 = vpop.f32.mrb[0].mxu0
      %v715 = vadd.f32 0.0, %v714
      %v716 = vpop.f32.mrb[0].mxu0
      %717 = vmatprep.mubr.bf16.mxu0 0
      %718 = vmatmul.mubr.bf16.gmra.mrb[0].mxu0 %v425
      %v719 = vpop.f32.mrb[0].mxu0
      %v720 = vadd.f32 0.0, %v719
      %v721 = vpop.f32.mrb[0].mxu0
      %v722 = vpop.f32.mrb[0].mxu0
      %v723 = vadd.f32 0.0, %v722
      %v724 = vpop.f32.mrb[0].mxu0
      %725 = vmatprep.mubr.bf16.mxu0 0
      %726 = vmatmul.mubr.bf16.gmra.mrb[0].mxu0 %v426
      %v727 = vpop.f32.mrb[0].mxu0
      %v728 = vadd.f32 0.0, %v727
      %v729 = vpop.f32.mrb[0].mxu0
      %v730 = vpop.f32.mrb[0].mxu0
      %v731 = vadd.f32 0.0, %v730
      %v732 = vpop.f32.mrb[0].mxu0
      %733 = vmatprep.mubr.bf16.mxu0 0
      %734 = vmatmul.mubr.bf16.gmra.mrb[0].mxu0 %v427
      %v735 = vpop.f32.mrb[0].mxu0
      %v736 = vadd.f32 0.0, %v735
      %v737 = vpop.f32.mrb[0].mxu0
      %v738 = vpop.f32.mrb[0].mxu0
      %v739 = vadd.f32 0.0, %v738
      %v740 = vpop.f32.mrb[0].mxu0
      %741 = vdwg.mxu0
      %v742 = vpack.c.bf16 %v522, %v519
      %v743 = vpack.c.bf16 %v530, %v527
      %v744 = vpack.c.bf16 %v538, %v535
      %v745 = vpack.c.bf16 %v546, %v543
      %v746 = vpack.c.bf16 %v554, %v551
      %v747 = vpack.c.bf16 %v562, %v559
      %v748 = vpack.c.bf16 %v570, %v567
      %v749 = vpack.c.bf16 %v578, %v575
      %v758 = vunpack.c.l.b16 %v742
      %v759 = vunpack.c.h.b16 %v742
      %v760 = vunpack.c.l.b16 %v743
      %v761 = vunpack.c.h.b16 %v743
      %v762 = vunpack.c.l.b16 %v744
      %v763 = vunpack.c.h.b16 %v744
      %v764 = vunpack.c.l.b16 %v745
      %v765 = vunpack.c.h.b16 %v745
      %v766 = vunpack.c.l.b16 %v746
      %v767 = vunpack.c.h.b16 %v746
      %v768 = vunpack.c.l.b16 %v747
      %v769 = vunpack.c.h.b16 %v747
      %v770 = vunpack.c.l.b16 %v748
      %v771 = vunpack.c.h.b16 %v748
      %v772 = vunpack.c.l.b16 %v749
      %v773 = vunpack.c.h.b16 %v749
      %v774 = vpack.c.b16 %v758, %v758
      %v775 = vpack.c.b16 %v759, %v759
      %v776 = vpack.c.b16 %v760, %v760
      %v777 = vpack.c.b16 %v761, %v761
      %v778 = vpack.c.b16 %v762, %v762
      %v779 = vpack.c.b16 %v763, %v763
      %v780 = vpack.c.b16 %v764, %v764
      %v781 = vpack.c.b16 %v765, %v765
      %v782 = vpack.c.b16 %v766, %v766
      %v783 = vpack.c.b16 %v767, %v767
      %v784 = vpack.c.b16 %v768, %v768
      %v785 = vpack.c.b16 %v769, %v769
      %v786 = vpack.c.b16 %v770, %v770
      %v787 = vpack.c.b16 %v771, %v771
      %v788 = vpack.c.b16 %v772, %v772
      %v789 = vpack.c.b16 %v773, %v773
      %806 = vst [vmem:[%s335] sm:$0xf] %v774
      %807 = vst [vmem:[%s335 + $0x4] sm:$0xf] %v775
      %808 = vst [vmem:[%s335 + $0x8] sm:$0xf] %v776
      %809 = vst [vmem:[%s335 + $0xc] sm:$0xf] %v777
      %810 = vst [vmem:[%s335 + $0x10] sm:$0xf] %v778
      %811 = vst [vmem:[%s335 + $0x14] sm:$0xf] %v779
      %812 = vst [vmem:[%s335 + $0x18] sm:$0xf] %v780
      %813 = vst [vmem:[%s335 + $0x1c] sm:$0xf] %v781
      %814 = vst [vmem:[%s335 + $0x20] sm:$0xf] %v782
      %815 = vst [vmem:[%s335 + $0x24] sm:$0xf] %v783
      %816 = vst [vmem:[%s335 + $0x28] sm:$0xf] %v784
      %817 = vst [vmem:[%s335 + $0x2c] sm:$0xf] %v785
      %818 = vst [vmem:[%s335 + $0x30] sm:$0xf] %v786
      %819 = vst [vmem:[%s335 + $0x34] sm:$0xf] %v787
      %820 = vst [vmem:[%s335 + $0x38] sm:$0xf] %v788
      %821 = vst [vmem:[%s335 + $0x3c] sm:$0xf] %v789
      %v822 = vpack.c.bf16 %v683, %v680
      %v823 = vpack.c.bf16 %v691, %v688
      %v824 = vpack.c.bf16 %v699, %v696
      %v825 = vpack.c.bf16 %v707, %v704
      %v826 = vpack.c.bf16 %v715, %v712
      %v827 = vpack.c.bf16 %v723, %v720
      %v828 = vpack.c.bf16 %v731, %v728
      %v829 = vpack.c.bf16 %v739, %v736
      %v838 = vunpack.c.l.b16 %v822
      %v839 = vunpack.c.h.b16 %v822
      %v840 = vunpack.c.l.b16 %v823
      %v841 = vunpack.c.h.b16 %v823
      %v842 = vunpack.c.l.b16 %v824
      %v843 = vunpack.c.h.b16 %v824
      %v844 = vunpack.c.l.b16 %v825
      %v845 = vunpack.c.h.b16 %v825
      %v846 = vunpack.c.l.b16 %v826
      %v847 = vunpack.c.h.b16 %v826
      %v848 = vunpack.c.l.b16 %v827
      %v849 = vunpack.c.h.b16 %v827
      %v850 = vunpack.c.l.b16 %v828
      %v851 = vunpack.c.h.b16 %v828
      %v852 = vunpack.c.l.b16 %v829
      %v853 = vunpack.c.h.b16 %v829
      %v854 = vpack.c.b16 %v838, %v838
      %v855 = vpack.c.b16 %v839, %v839
      %v856 = vpack.c.b16 %v840, %v840
      %v857 = vpack.c.b16 %v841, %v841
      %v858 = vpack.c.b16 %v842, %v842
      %v859 = vpack.c.b16 %v843, %v843
      %v860 = vpack.c.b16 %v844, %v844
      %v861 = vpack.c.b16 %v845, %v845
      %v862 = vpack.c.b16 %v846, %v846
      %v863 = vpack.c.b16 %v847, %v847
      %v864 = vpack.c.b16 %v848, %v848
      %v865 = vpack.c.b16 %v849, %v849
      %v866 = vpack.c.b16 %v850, %v850
      %v867 = vpack.c.b16 %v851, %v851
      %v868 = vpack.c.b16 %v852, %v852
      %v869 = vpack.c.b16 %v853, %v853
      %886 = vst [vmem:[%s341] sm:$0xf] %v854
      %887 = vst [vmem:[%s341 + $0x4] sm:$0xf] %v855
      %888 = vst [vmem:[%s341 + $0x8] sm:$0xf] %v856
      %889 = vst [vmem:[%s341 + $0xc] sm:$0xf] %v857
      %890 = vst [vmem:[%s341 + $0x10] sm:$0xf] %v858
      %891 = vst [vmem:[%s341 + $0x14] sm:$0xf] %v859
      %892 = vst [vmem:[%s341 + $0x18] sm:$0xf] %v860
      %893 = vst [vmem:[%s341 + $0x1c] sm:$0xf] %v861
      %894 = vst [vmem:[%s341 + $0x20] sm:$0xf] %v862
      %895 = vst [vmem:[%s341 + $0x24] sm:$0xf] %v863
      %896 = vst [vmem:[%s341 + $0x28] sm:$0xf] %v864
      %897 = vst [vmem:[%s341 + $0x2c] sm:$0xf] %v865
      %898 = vst [vmem:[%s341 + $0x30] sm:$0xf] %v866
      %899 = vst [vmem:[%s341 + $0x34] sm:$0xf] %v867
      %900 = vst [vmem:[%s341 + $0x38] sm:$0xf] %v868
      %901 = vst [vmem:[%s341 + $0x3c] sm:$0xf] %v869
      %v902 = vadd.f32 %v519, %v522
      %v903 = vadd.f32 %v902, %v527
      %v904 = vadd.f32 %v903, %v530
      %v905 = vadd.f32 %v904, %v535
      %v906 = vadd.f32 %v905, %v538
      %v907 = vadd.f32 %v906, %v543
      %v908 = vadd.f32 %v907, %v546
      %v909 = vadd.f32 %v908, %v551
      %v910 = vadd.f32 %v909, %v554
      %v911 = vadd.f32 %v910, %v559
      %v912 = vadd.f32 %v911, %v562
      %v913 = vadd.f32 %v912, %v567
      %v914 = vadd.f32 %v913, %v570
      %v915 = vadd.f32 %v914, %v575
      %v916 = vadd.f32 %v915, %v578
      %v917 = vrot.slane %v916, 4
      %v918 = vadd.f32 %v916, %v917
      %v919 = vrot.slane %v918, 2
      %v920 = vadd.f32 %v918, %v919
      %v921 = vrot.slane %v920, 1
      %v922 = vadd.f32 %v920, %v921
      %923 = vst [vmem:[%s345] sm:$0x1] %v922
      %v924 = vmul.f32 %v519, %v519
      %v925 = vmul.f32 %v522, %v522
      %v926 = vmul.f32 %v527, %v527
      %v927 = vmul.f32 %v530, %v530
      %v928 = vmul.f32 %v535, %v535
      %v929 = vmul.f32 %v538, %v538
      %v930 = vmul.f32 %v543, %v543
      %v931 = vmul.f32 %v546, %v546
      %v932 = vmul.f32 %v551, %v551
      %v933 = vmul.f32 %v554, %v554
      %v934 = vmul.f32 %v559, %v559
      %v935 = vmul.f32 %v562, %v562
      %v936 = vmul.f32 %v567, %v567
      %v937 = vmul.f32 %v570, %v570
      %v938 = vmul.f32 %v575, %v575
      %v939 = vmul.f32 %v578, %v578
      %v940 = vadd.f32 %v924, %v925
      %v941 = vadd.f32 %v940, %v926
      %v942 = vadd.f32 %v941, %v927
      %v943 = vadd.f32 %v942, %v928
      %v944 = vadd.f32 %v943, %v929
      %v945 = vadd.f32 %v944, %v930
      %v946 = vadd.f32 %v945, %v931
      %v947 = vadd.f32 %v946, %v932
      %v948 = vadd.f32 %v947, %v933
      %v949 = vadd.f32 %v948, %v934
      %v950 = vadd.f32 %v949, %v935
      %v951 = vadd.f32 %v950, %v936
      %v952 = vadd.f32 %v951, %v937
      %v953 = vadd.f32 %v952, %v938
      %v954 = vadd.f32 %v953, %v939
      %v955 = vrot.slane %v954, 4
      %v956 = vadd.f32 %v954, %v955
      %v957 = vrot.slane %v956, 2
      %v958 = vadd.f32 %v956, %v957
      %v959 = vrot.slane %v958, 1
      %v960 = vadd.f32 %v958, %v959
      %961 = vst [vmem:[%s348] sm:$0x1] %v960
      %v962 = vadd.f32 %v680, %v683
      %v963 = vadd.f32 %v962, %v688
      %v964 = vadd.f32 %v963, %v691
      %v965 = vadd.f32 %v964, %v696
      %v966 = vadd.f32 %v965, %v699
      %v967 = vadd.f32 %v966, %v704
      %v968 = vadd.f32 %v967, %v707
      %v969 = vadd.f32 %v968, %v712
      %v970 = vadd.f32 %v969, %v715
      %v971 = vadd.f32 %v970, %v720
      %v972 = vadd.f32 %v971, %v723
      %v973 = vadd.f32 %v972, %v728
      %v974 = vadd.f32 %v973, %v731
      %v975 = vadd.f32 %v974, %v736
      %v976 = vadd.f32 %v975, %v739
      %v977 = vrot.slane %v976, 4
      %v978 = vadd.f32 %v976, %v977
      %v979 = vrot.slane %v978, 2
      %v980 = vadd.f32 %v978, %v979
      %v981 = vrot.slane %v980, 1
      %v982 = vadd.f32 %v980, %v981
      %983 = vst [vmem:[%s351] sm:$0x1] %v982
      %v984 = vmul.f32 %v680, %v680
      %v985 = vmul.f32 %v683, %v683
      %v986 = vmul.f32 %v688, %v688
      %v987 = vmul.f32 %v691, %v691
      %v988 = vmul.f32 %v696, %v696
      %v989 = vmul.f32 %v699, %v699
      %v990 = vmul.f32 %v704, %v704
      %v991 = vmul.f32 %v707, %v707
      %v992 = vmul.f32 %v712, %v712
      %v993 = vmul.f32 %v715, %v715
      %v994 = vmul.f32 %v720, %v720
      %v995 = vmul.f32 %v723, %v723
      %v996 = vmul.f32 %v728, %v728
      %v997 = vmul.f32 %v731, %v731
      %v998 = vmul.f32 %v736, %v736
      %v999 = vmul.f32 %v739, %v739
      %v1000 = vadd.f32 %v984, %v985
      %v1001 = vadd.f32 %v1000, %v986
      %v1002 = vadd.f32 %v1001, %v987
      %v1003 = vadd.f32 %v1002, %v988
      %v1004 = vadd.f32 %v1003, %v989
      %v1005 = vadd.f32 %v1004, %v990
      %v1006 = vadd.f32 %v1005, %v991
      %v1007 = vadd.f32 %v1006, %v992
      %v1008 = vadd.f32 %v1007, %v993
      %v1009 = vadd.f32 %v1008, %v994
      %v1010 = vadd.f32 %v1009, %v995
      %v1011 = vadd.f32 %v1010, %v996
      %v1012 = vadd.f32 %v1011, %v997
      %v1013 = vadd.f32 %v1012, %v998
      %v1014 = vadd.f32 %v1013, %v999
      %v1015 = vrot.slane %v1014, 4
      %v1016 = vadd.f32 %v1014, %v1015
      %v1017 = vrot.slane %v1016, 2
      %v1018 = vadd.f32 %v1016, %v1017
      %v1019 = vrot.slane %v1018, 1
      %v1020 = vadd.f32 %v1018, %v1019
      %1021 = vst [vmem:[%s354] sm:$0x1] %v1020
      %s1022 = smul.u32 16, %s20
      %p1023 = scmp.lt.s32.totalorder %s1022, 63
      %s1024 = scalar_select %p1023, %s1022, 63
      %s1025 = smul.addr %s1024, 4
      %s1026 = scalar_lea.vmem %s3, %s1025
      %s1027 = smul.u32 16, %s20
      %p1028 = scmp.lt.s32.totalorder %s1027, 63
      %s1029 = scalar_select %p1028, %s1027, 63
      %s1030 = smul.addr %s1029, 4
      %s1031 = scalar_lea.vmem %s4, %s1030
      %p1032 = scmp.lt.s32.totalorder %s20, 3
      %s1033 = scalar_select %p1032, %s20, 3
      %s1034 = scalar_lea.vmem %s5, %s1033
      %p1035 = scmp.lt.s32.totalorder %s20, 3
      %s1036 = scalar_select %p1035, %s20, 3
      %s1037 = scalar_lea.vmem %s6, %s1036
      %p1038 = scmp.lt.s32.totalorder %s20, 3
      %s1039 = scalar_select %p1038, %s20, 3
      %s1040 = scalar_lea.vmem %s7, %s1039
      %p1041 = scmp.lt.s32.totalorder %s20, 3
      %s1042 = scalar_select %p1041, %s20, 3
      %s1043 = scalar_lea.vmem %s8, %s1042
      // Predicated region
      $region33: #{residual_bottleneck_block.4} parent=31 // pred_check
        %p1044 = pneg %p106
      $region34: #{residual_bottleneck_block.4} parent=31 // pred_check_branch
        %1046 = sbr.rel (%p1044) target = $region36
      $region35: #{residual_bottleneck_block.4} parent=31 // pred_region
        %s1047 = smul.u32 16, %s20
      $region36: #{residual_bottleneck_block.4} parent=31 // pred_fallthru
        _
      // Predicated region
      $region37: #{residual_bottleneck_block.4} parent=31 // pred_check
        %p1048 = pneg %p132
      $region38: #{residual_bottleneck_block.4} parent=31 // pred_check_branch
        %1050 = sbr.rel (%p1048) target = $region40
      $region39: #{residual_bottleneck_block.4} parent=31 // pred_region
        %s1051 = smul.u32 16, %s20
      $region40: #{residual_bottleneck_block.4} parent=31 // pred_fallthru
        _
      // Predicated region
      $region41: #{residual_bottleneck_block.4} parent=31 // pred_check
        %p1052 = pneg %p158
      $region42: #{residual_bottleneck_block.4} parent=31 // pred_check_branch
        %1054 = sbr.rel (%p1052) target = $region44
      $region43: #{residual_bottleneck_block.4} parent=31 // pred_region
        _
      $region44: #{residual_bottleneck_block.4} parent=31 // pred_fallthru
        _
      // Predicated region
      $region45: #{residual_bottleneck_block.4} parent=31 // pred_check
        %p1055 = pneg %p184
      $region46: #{residual_bottleneck_block.4} parent=31 // pred_check_branch
        %1057 = sbr.rel (%p1055) target = $region48
      $region47: #{residual_bottleneck_block.4} parent=31 // pred_region
        _
      $region48: #{residual_bottleneck_block.4} parent=31 // pred_fallthru
        _
      // Predicated region
      $region49: #{residual_bottleneck_block.4} parent=31 // pred_check
        %p1058 = pneg %p210
      $region50: #{residual_bottleneck_block.4} parent=31 // pred_check_branch
        %1060 = sbr.rel (%p1058) target = $region52
      $region51: #{residual_bottleneck_block.4} parent=31 // pred_region
        _
      $region52: #{residual_bottleneck_block.4} parent=31 // pred_fallthru
        _
      // Predicated region
      $region53: #{residual_bottleneck_block.4} parent=31 // pred_check
        %p1061 = pneg %p236
      $region54: #{residual_bottleneck_block.4} parent=31 // pred_check_branch
        %1063 = sbr.rel (%p1061) target = $region56
      $region55: #{residual_bottleneck_block.4} parent=31 // pred_region
        _
      $region56: #{residual_bottleneck_block.4} parent=31 // pred_fallthru
        _
    $region32: #{residual_bottleneck_block.4} parent=5 // pred_fallthru
      _
    %p1064 = scmp.le.s32.totalorder 2, %s15
    // Predicated region
    $region57: #{residual_bottleneck_block.4} parent=5 // pred_check
      %p1065 = pneg %p1064
    $region58: #{residual_bottleneck_block.4} parent=5 // pred_check_branch
      %1067 = sbr.rel (%p1065) target = $region60
    $region59: #{residual_bottleneck_block.4} parent=5 // pred_region
      %s1068 = ssub.s32 %s15, 2
      // Predicated region
      $region61: #{residual_bottleneck_block.4} parent=59 // pred_check
        %p1069 = pneg %p112
      $region62: #{residual_bottleneck_block.4} parent=59 // pred_check_branch
        %1071 = sbr.rel (%p1069) target = $region64
      $region63: #{residual_bottleneck_block.4} parent=59 // pred_region
        %s1072 = smul.u32 16, %s21
        %p1073 = scmp.lt.s32.totalorder %s1072, 63
        %s1074 = scalar_select %p1073, %s1072, 63
        %s1075 = smul.addr %s1074, 4
        %s1076 = scalar_lea.vmem %s3, %s1075
      $region64: #{residual_bottleneck_block.4} parent=59 // pred_fallthru
        _
      // Predicated region
      $region65: #{residual_bottleneck_block.4} parent=59 // pred_check
        %p1077 = pneg %p138
      $region66: #{residual_bottleneck_block.4} parent=59 // pred_check_branch
        %1079 = sbr.rel (%p1077) target = $region68
      $region67: #{residual_bottleneck_block.4} parent=59 // pred_region
        %s1080 = smul.u32 16, %s21
        %p1081 = scmp.lt.s32.totalorder %s1080, 63
        %s1082 = scalar_select %p1081, %s1080, 63
        %s1083 = smul.addr %s1082, 4
        %s1084 = scalar_lea.vmem %s4, %s1083
      $region68: #{residual_bottleneck_block.4} parent=59 // pred_fallthru
        _
      // Predicated region
      $region69: #{residual_bottleneck_block.4} parent=59 // pred_check
        %p1085 = pneg %p164
      $region70: #{residual_bottleneck_block.4} parent=59 // pred_check_branch
        %1087 = sbr.rel (%p1085) target = $region72
      $region71: #{residual_bottleneck_block.4} parent=59 // pred_region
        %p1088 = scmp.lt.s32.totalorder %s21, 3
        %s1089 = scalar_select %p1088, %s21, 3
        %s1090 = scalar_lea.vmem %s5, %s1089
      $region72: #{residual_bottleneck_block.4} parent=59 // pred_fallthru
        _
      // Predicated region
      $region73: #{residual_bottleneck_block.4} parent=59 // pred_check
        %p1091 = pneg %p190
      $region74: #{residual_bottleneck_block.4} parent=59 // pred_check_branch
        %1093 = sbr.rel (%p1091) target = $region76
      $region75: #{residual_bottleneck_block.4} parent=59 // pred_region
        %p1094 = scmp.lt.s32.totalorder %s21, 3
        %s1095 = scalar_select %p1094, %s21, 3
        %s1096 = scalar_lea.vmem %s6, %s1095
      $region76: #{residual_bottleneck_block.4} parent=59 // pred_fallthru
        _
      // Predicated region
      $region77: #{residual_bottleneck_block.4} parent=59 // pred_check
        %p1097 = pneg %p216
      $region78: #{residual_bottleneck_block.4} parent=59 // pred_check_branch
        %1099 = sbr.rel (%p1097) target = $region80
      $region79: #{residual_bottleneck_block.4} parent=59 // pred_region
        %p1100 = scmp.lt.s32.totalorder %s21, 3
        %s1101 = scalar_select %p1100, %s21, 3
        %s1102 = scalar_lea.vmem %s7, %s1101
      $region80: #{residual_bottleneck_block.4} parent=59 // pred_fallthru
        _
      // Predicated region
      $region81: #{residual_bottleneck_block.4} parent=59 // pred_check
        %p1103 = pneg %p242
      $region82: #{residual_bottleneck_block.4} parent=59 // pred_check_branch
        %1105 = sbr.rel (%p1103) target = $region84
      $region83: #{residual_bottleneck_block.4} parent=59 // pred_region
        %p1106 = scmp.lt.s32.totalorder %s21, 3
        %s1107 = scalar_select %p1106, %s21, 3
        %s1108 = scalar_lea.vmem %s8, %s1107
      $region84: #{residual_bottleneck_block.4} parent=59 // pred_fallthru
        _
    $region60: #{residual_bottleneck_block.4} parent=5 // pred_fallthru
      _
  $region6: #{residual_bottleneck_block.4} parent=0 // loop_footer
    %s19 = sadd.s32 1, %s15
  $region7: #{residual_bottleneck_block.4} parent=0 // loop_footer_branch
    %14 = sbr.rel target = $region3
  $region8: #{residual_bottleneck_block.4} parent=0 // loop_exit
    _

// kernel: residual_bottleneck_block.5
$region0: #{residual_bottleneck_block.5}
  #allocation0 [shape = 'u32[]', space=smem, size = 0x4, offset = 0x4, fixed_abs, tag = 'smem constant byte address 0x4 - core index']
  #allocation1 [shape = 'u32[144,128]{1,0:T(1,128)}', space=vmem, size = 0x12000, scoped, tag = 'internal scratch']
  #allocation2 [shape = 'bf16[10,18,128]{2,1,0:T(8,128)(2,1)}', space=vmem, size = 0xf000, scoped, tag = 'scratch operand']
  #allocation3 [shape = 'bf16[128,1152]{1,0:T(16,128)(2,1)}', space=vmem, size = 0x48000, scoped, tag = 'scratch operand']
  %s0 = inlined_call_operand.vmem [shape: bf16[2,16,16,128], index: 0, kind: input, shape index: {}]
  %s1 = inlined_call_operand.vmem [shape: f32[1,128], index: 1, kind: input, shape index: {}]
  %s2 = inlined_call_operand.vmem [shape: f32[1,128], index: 2, kind: input, shape index: {}]
  %s3 = inlined_call_operand.vmem [shape: bf16[1152,128], index: 3, kind: input, shape index: {}]
  %s4 = inlined_call_operand.vmem [shape: bf16[2,16,16,128], index: 4, kind: output, shape index: {0}]
  %s5 = inlined_call_operand.vmem [shape: f32[4,1,128], index: 5, kind: output, shape index: {1}]
  %s6 = inlined_call_operand.vmem [shape: f32[4,1,128], index: 6, kind: output, shape index: {2}]
  %7 = xla_tuple %s4, %s5, %s6
  %s8 = sld [smem:[#allocation0]]
  $region73: #{residual_bottleneck_block.5} parent=0
    _
  %s10 = ssub.s32 1, %s8
  %s11 = scalar_select 0, %s10, %s8
  loop: start=0, step=1, limit=6
  $region2: #{residual_bottleneck_block.5} parent=0 // loop_pre_header
    _
  $region3: #{residual_bottleneck_block.5} parent=0 // loop_header
    %s13 = sphi 0, %s17
    %p14 = scmp.ge.s32.totalorder %s13, 6
    %s20 = sphi 0, %s32
    %s21 = sphi 0, %s28
    %s22 = sphi 0, %s20
    %s23 = sphi 0, %s21
    %s24 = sphi 0, %s22
    %s25 = sphi 0, %s23
    %s35 = sphi 0, %s37
    %s38 = sphi 0, %s35
    %s39 = sphi 0, %s38
    %s55 = sphi 0, %s39
    %s59 = sphi 0, %s59
    %s61 = sphi 0, %s59
    %s62 = sphi 0, %s61
    %s76 = sphi 0, %s62
    %s80 = sphi 0, %s80
    %s82 = sphi 0, %s80
    %s83 = sphi 0, %s82
    %s97 = sphi 0, %s83
    %s101 = sphi 0, %s101
    %s103 = sphi 0, %s101
    %s104 = sphi 0, %s103
    %s118 = sphi 0, %s104
    %s126 = sphi 0, %s128
    %s129 = sphi 0, %s126
    %s130 = sphi 0, %s129
    %s146 = sphi 0, %s130
    %s156 = sphi 0, %s158
    %s159 = sphi 0, %s156
    %s160 = sphi 0, %s159
    %s176 = sphi 0, %s160
    %s186 = sphi 0, %s188
    %s189 = sphi 0, %s186
    %s190 = sphi 0, %s189
    %s206 = sphi 0, %s190
  $region4: #{residual_bottleneck_block.5} parent=0 // loop_header_branch
    %16 = sbr.rel (%p14) target = $region8
  $region5: #{residual_bottleneck_block.5} parent=0 // loop_body
    %s18 = ssub.s32 %s13, 1
    %s19 = ssub.s32 %s13, 2
    %s26 = sadd.s32 1, %s21
    %p27 = scmp.ge.s32.totalorder %s26, 2
    %s28 = scalar_select %p27, 0, %s26
    %s29 = sadd.s32 1, %s20
    %s30 = scalar_select %p27, %s29, %s20
    %p31 = scmp.ge.s32.totalorder %s30, 2
    %s32 = scalar_select %p31, 0, %s30
    %s33 = ssub.s32 %s20, %s32
    %p34 = scmp.eq.s32.totalorder %s33, 0
    %s36 = sadd.s32 %s35, 1
    %s37 = scalar_select %p34, %s35, %s36
    %p40 = pneg %p34
    %p41 = scmp.eq.s32.totalorder %s13, 3
    %p42 = por %p40, %p41
    %p43 = scmp.ne.s32.totalorder %s35, %s38
    %p44 = scmp.eq.s32.totalorder %s13, 0
    %p45 = por %p43, %p44
    %p46 = scmp.ne.s32.totalorder %s35, %s38
    %p47 = scmp.eq.s32.totalorder %s18, 3
    %p48 = por %p46, %p47
    %p49 = scmp.ne.s32.totalorder %s38, %s39
    %p50 = scmp.eq.s32.totalorder %s18, 0
    %p51 = por %p49, %p50
    %p52 = scmp.ne.s32.totalorder %s38, %s39
    %p53 = scmp.eq.s32.totalorder %s19, 3
    %p54 = por %p52, %p53
    %p56 = scmp.ne.s32.totalorder %s39, %s55
    %p57 = scmp.eq.s32.totalorder %s19, 0
    %p58 = por %p56, %p57
    %s60 = sadd.s32 %s59, 1
    %p63 = scmp.eq.s32.totalorder %s13, 3
    %p64 = scmp.ne.s32.totalorder %s59, %s61
    %p65 = scmp.eq.s32.totalorder %s13, 0
    %p66 = por %p64, %p65
    %p67 = scmp.ne.s32.totalorder %s59, %s61
    %p68 = scmp.eq.s32.totalorder %s18, 3
    %p69 = por %p67, %p68
    %p70 = scmp.ne.s32.totalorder %s61, %s62
    %p71 = scmp.eq.s32.totalorder %s18, 0
    %p72 = por %p70, %p71
    %p73 = scmp.ne.s32.totalorder %s61, %s62
    %p74 = scmp.eq.s32.totalorder %s19, 3
    %p75 = por %p73, %p74
    %p77 = scmp.ne.s32.totalorder %s62, %s76
    %p78 = scmp.eq.s32.totalorder %s19, 0
    %p79 = por %p77, %p78
    %s81 = sadd.s32 %s80, 1
    %p84 = scmp.eq.s32.totalorder %s13, 3
    %p85 = scmp.ne.s32.totalorder %s80, %s82
    %p86 = scmp.eq.s32.totalorder %s13, 0
    %p87 = por %p85, %p86
    %p88 = scmp.ne.s32.totalorder %s80, %s82
    %p89 = scmp.eq.s32.totalorder %s18, 3
    %p90 = por %p88, %p89
    %p91 = scmp.ne.s32.totalorder %s82, %s83
    %p92 = scmp.eq.s32.totalorder %s18, 0
    %p93 = por %p91, %p92
    %p94 = scmp.ne.s32.totalorder %s82, %s83
    %p95 = scmp.eq.s32.totalorder %s19, 3
    %p96 = por %p94, %p95
    %p98 = scmp.ne.s32.totalorder %s83, %s97
    %p99 = scmp.eq.s32.totalorder %s19, 0
    %p100 = por %p98, %p99
    %s102 = sadd.s32 %s101, 1
    %p105 = scmp.eq.s32.totalorder %s13, 3
    %p106 = scmp.ne.s32.totalorder %s101, %s103
    %p107 = scmp.eq.s32.totalorder %s13, 0
    %p108 = por %p106, %p107
    %p109 = scmp.ne.s32.totalorder %s101, %s103
    %p110 = scmp.eq.s32.totalorder %s18, 3
    %p111 = por %p109, %p110
    %p112 = scmp.ne.s32.totalorder %s103, %s104
    %p113 = scmp.eq.s32.totalorder %s18, 0
    %p114 = por %p112, %p113
    %p115 = scmp.ne.s32.totalorder %s103, %s104
    %p116 = scmp.eq.s32.totalorder %s19, 3
    %p117 = por %p115, %p116
    %p119 = scmp.ne.s32.totalorder %s104, %s118
    %p120 = scmp.eq.s32.totalorder %s19, 0
    %p121 = por %p119, %p120
    %s122 = ssub.s32 %s20, %s32
    %s123 = ssub.s32 %s21, %s28
    %s124 = sor.u32 %s122, %s123
    %p125 = scmp.eq.s32.totalorder %s124, 0
    %s127 = sadd.s32 %s126, 1
    %s128 = scalar_select %p125, %s126, %s127
    %p131 = pneg %p125
    %p132 = scmp.eq.s32.totalorder %s13, 3
    %p133 = por %p131, %p132
    %p134 = scmp.ne.s32.totalorder %s126, %s129
    %p135 = scmp.eq.s32.totalorder %s13, 0
    %p136 = por %p134, %p135
    %p137 = scmp.ne.s32.totalorder %s126, %s129
    %p138 = scmp.eq.s32.totalorder %s18, 3
    %p139 = por %p137, %p138
    %p140 = scmp.ne.s32.totalorder %s129, %s130
    %p141 = scmp.eq.s32.totalorder %s18, 0
    %p142 = por %p140, %p141
    %p143 = scmp.ne.s32.totalorder %s129, %s130
    %p144 = scmp.eq.s32.totalorder %s19, 3
    %p145 = por %p143, %p144
    %p147 = scmp.ne.s32.totalorder %s130, %s146
    %p148 = scmp.eq.s32.totalorder %s19, 0
    %p149 = por %p147, %p148
    %s150 = smul.u32 %s20, 2
    %s151 = sadd.s32 %s150, %s21
    %s152 = smul.u32 %s32, 2
    %s153 = sadd.s32 %s152, %s28
    %s154 = ssub.s32 %s151, %s153
    %p155 = scmp.eq.s32.totalorder %s154, 0
    %s157 = sadd.s32 %s156, 1
    %s158 = scalar_select %p155, %s156, %s157
    %p161 = pneg %p155
    %p162 = scmp.eq.s32.totalorder %s13, 3
    %p163 = por %p161, %p162
    %p164 = scmp.ne.s32.totalorder %s156, %s159
    %p165 = scmp.eq.s32.totalorder %s13, 0
    %p166 = por %p164, %p165
    %p167 = scmp.ne.s32.totalorder %s156, %s159
    %p168 = scmp.eq.s32.totalorder %s18, 3
    %p169 = por %p167, %p168
    %p170 = scmp.ne.s32.totalorder %s159, %s160
    %p171 = scmp.eq.s32.totalorder %s18, 0
    %p172 = por %p170, %p171
    %p173 = scmp.ne.s32.totalorder %s159, %s160
    %p174 = scmp.eq.s32.totalorder %s19, 3
    %p175 = por %p173, %p174
    %p177 = scmp.ne.s32.totalorder %s160, %s176
    %p178 = scmp.eq.s32.totalorder %s19, 0
    %p179 = por %p177, %p178
    %s180 = smul.u32 %s20, 2
    %s181 = sadd.s32 %s180, %s21
    %s182 = smul.u32 %s32, 2
    %s183 = sadd.s32 %s182, %s28
    %s184 = ssub.s32 %s181, %s183
    %p185 = scmp.eq.s32.totalorder %s184, 0
    %s187 = sadd.s32 %s186, 1
    %s188 = scalar_select %p185, %s186, %s187
    %p191 = pneg %p185
    %p192 = scmp.eq.s32.totalorder %s13, 3
    %p193 = por %p191, %p192
    %p194 = scmp.ne.s32.totalorder %s186, %s189
    %p195 = scmp.eq.s32.totalorder %s13, 0
    %p196 = por %p194, %p195
    %p197 = scmp.ne.s32.totalorder %s186, %s189
    %p198 = scmp.eq.s32.totalorder %s18, 3
    %p199 = por %p197, %p198
    %p200 = scmp.ne.s32.totalorder %s189, %s190
    %p201 = scmp.eq.s32.totalorder %s18, 0
    %p202 = por %p200, %p201
    %p203 = scmp.ne.s32.totalorder %s189, %s190
    %p204 = scmp.eq.s32.totalorder %s19, 3
    %p205 = por %p203, %p204
    %p207 = scmp.ne.s32.totalorder %s190, %s206
    %p208 = scmp.eq.s32.totalorder %s19, 0
    %p209 = por %p207, %p208
    %p210 = scmp.le.s32.totalorder 1, %s13
    %p211 = scmp.lt.s32.totalorder %s13, 5
    %p212 = pnand %p210, %p211
    %p213 = pneg %p212
    // Predicated region
    $region9: #{residual_bottleneck_block.5} parent=5 // pred_check
      _
    $region10: #{residual_bottleneck_block.5} parent=5 // pred_check_branch
      %215 = sbr.rel (%p212) target = $region12
    $region11: #{residual_bottleneck_block.5} parent=5 // pred_region
      %s216 = ssub.s32 %s13, 1
      // Predicated region
      $region13: #{residual_bottleneck_block.5} parent=11 // pred_check
        %p217 = pneg %p72
      $region14: #{residual_bottleneck_block.5} parent=11 // pred_check_branch
        %219 = sbr.rel (%p217) target = $region16
      $region15: #{residual_bottleneck_block.5} parent=11 // pred_region
        _
      $region16: #{residual_bottleneck_block.5} parent=11 // pred_fallthru
        _
      // Predicated region
      $region17: #{residual_bottleneck_block.5} parent=11 // pred_check
        %p220 = pneg %p93
      $region18: #{residual_bottleneck_block.5} parent=11 // pred_check_branch
        %222 = sbr.rel (%p220) target = $region20
      $region19: #{residual_bottleneck_block.5} parent=11 // pred_region
        _
      $region20: #{residual_bottleneck_block.5} parent=11 // pred_fallthru
        _
      // Predicated region
      $region21: #{residual_bottleneck_block.5} parent=11 // pred_check
        %p223 = pneg %p114
      $region22: #{residual_bottleneck_block.5} parent=11 // pred_check_branch
        %225 = sbr.rel (%p223) target = $region24
      $region23: #{residual_bottleneck_block.5} parent=11 // pred_region
        _
      $region24: #{residual_bottleneck_block.5} parent=11 // pred_fallthru
        _
    $region12: #{residual_bottleneck_block.5} parent=5 // pred_fallthru
      _
    %p226 = scmp.lt.s32.totalorder %s13, 4
    // Predicated region
    $region25: #{residual_bottleneck_block.5} parent=5 // pred_check
      %p227 = pneg %p226
    $region26: #{residual_bottleneck_block.5} parent=5 // pred_check_branch
      %229 = sbr.rel (%p227) target = $region28
    $region27: #{residual_bottleneck_block.5} parent=5 // pred_region
      // Predicated region
      $region29: #{residual_bottleneck_block.5} parent=27 // pred_check
        %p230 = pneg %p45
      $region30: #{residual_bottleneck_block.5} parent=27 // pred_check_branch
        %232 = sbr.rel (%p230) target = $region32
      $region31: #{residual_bottleneck_block.5} parent=27 // pred_region
        %p233 = scmp.lt.s32.totalorder %s20, 1
        %s234 = scalar_select %p233, %s20, 1
        %s235 = smul.addr %s234, 32
        %s236 = smul.addr %s235, 4
        %s237 = scalar_lea.vmem %s0, %s236
      $region32: #{residual_bottleneck_block.5} parent=27 // pred_fallthru
        _
    $region28: #{residual_bottleneck_block.5} parent=5 // pred_fallthru
      _
    %p238 = scmp.le.s32.totalorder 1, %s13
    %p239 = scmp.lt.s32.totalorder %s13, 5
    %p240 = pnand %p238, %p239
    %p241 = pneg %p240
    // Predicated region
    $region33: #{residual_bottleneck_block.5} parent=5 // pred_check
      _
    $region34: #{residual_bottleneck_block.5} parent=5 // pred_check_branch
      %243 = sbr.rel (%p240) target = $region36
    $region35: #{residual_bottleneck_block.5} parent=5 // pred_region
      %s244 = ssub.s32 %s13, 1
      %p245 = scmp.lt.s32.totalorder %s22, 1
      %s246 = scalar_select %p245, %s22, 1
      %s247 = smul.addr %s246, 32
      %s248 = smul.addr %s247, 4
      %s249 = scalar_lea.vmem %s0, %s248
      %p250 = pneg %p51
      %p251 = pneg %p48
      %p252 = pneg %p72
      %p253 = pneg %p69
      %p254 = pneg %p93
      %p255 = pneg %p90
      %p256 = pneg %p114
      %p257 = pneg %p111
      %p258 = pneg %p142
      %p259 = pneg %p139
      %s260 = smul.u32 8, %s23
      %p261 = scmp.lt.s32.totalorder %s22, 1
      %s262 = scalar_select %p261, %s22, 1
      %p263 = scmp.lt.s32.totalorder %s260, 15
      %s264 = scalar_select %p263, %s260, 15
      %s265 = smul.addr %s264, 2
      %s266 = smul.addr %s262, 32
      %s267 = sadd.s32 %s265, %s266
      %s268 = smul.addr %s267, 4
      %s269 = scalar_lea.vmem %s4, %s268
      %p270 = pneg %p172
      %p271 = pneg %p169
      %s272 = smul.u32 %s22, 2
      %s273 = sadd.s32 %s272, %s23
      %p274 = scmp.lt.s32.totalorder %s273, 3
      %s275 = scalar_select %p274, %s273, 3
      %s276 = scalar_lea.vmem %s5, %s275
      %p277 = pneg %p202
      %p278 = pneg %p199
      %s279 = smul.u32 %s22, 2
      %s280 = sadd.s32 %s279, %s23
      %p281 = scmp.lt.s32.totalorder %s280, 3
      %s282 = scalar_select %p281, %s280, 3
      %s283 = scalar_lea.vmem %s6, %s282
      %p284 = scmp.lt.s32.totalorder %s22, 1
      %s285 = scalar_select %p284, %s22, 1
      %s286 = smul.addr %s285, 32
      %s287 = smul.addr %s286, 4
      %s288 = scalar_lea.vmem %s0, %s287
      %s289 = smul.u32 8, %s23
      %p290 = scmp.lt.s32.totalorder %s22, 1
      %s291 = scalar_select %p290, %s22, 1
      %p292 = scmp.lt.s32.totalorder %s289, 15
      %s293 = scalar_select %p292, %s289, 15
      %s294 = smul.addr %s293, 2
      %s295 = smul.addr %s291, 32
      %s296 = sadd.s32 %s294, %s295
      %s297 = smul.addr %s296, 4
      %s298 = scalar_lea.vmem %s4, %s297
      %s299 = smul.u32 8, %s23
      %s300 = smul.u32 %s22, 2
      %s301 = sadd.s32 %s300, %s23
      %p302 = scmp.lt.s32.totalorder %s301, 3
      %s303 = scalar_select %p302, %s301, 3
      %s304 = scalar_lea.vmem %s5, %s303
      %s305 = smul.u32 %s22, 2
      %s306 = sadd.s32 %s305, %s23
      %s307 = smul.u32 %s22, 2
      %s308 = sadd.s32 %s307, %s23
      %p309 = scmp.lt.s32.totalorder %s308, 3
      %s310 = scalar_select %p309, %s308, 3
      %s311 = scalar_lea.vmem %s6, %s310
      %s312 = smul.u32 %s22, 2
      %s313 = sadd.s32 %s312, %s23
      %s315 = smul.u32 %s23, 8
      %v316 = vld [vmem:[%s1] sm:$0x1]
      %v317 = vld [vmem:[%s2] sm:$0x1]
      %318 = vst [vmem:[#allocation2] sm:$0xf] 0
      %319 = vst [vmem:[#allocation2 + $0x4] sm:$0xf] 0
      %320 = vst [vmem:[#allocation2 + $0x8] sm:$0x1] 0
      %s321 = scalar_lea.vmem [#allocation2], 108
      %322 = vst [vmem:[%s321] sm:$0xf] 0
      %323 = vst [vmem:[%s321 + $0x4] sm:$0xf] 0
      %324 = vst [vmem:[%s321 + $0x8] sm:$0x1] 0
      %vm325 = vcmask 1040384
      %vm326 = vsmask.f32 256
      %vm327 = vmand %vm325, %vm326
      %v328 = vld [vmem:[#allocation2] sm:$0x1]
      %v329 = vsel %vm327, 0, %v328
      %330 = vst [vmem:[#allocation2] sm:$0x1] %v329
      %v331 = vld [vmem:[#allocation2 + $0xc] sm:$0x1]
      %v332 = vsel %vm327, 0, %v331
      %333 = vst [vmem:[#allocation2 + $0xc] sm:$0x1] %v332
      %v334 = vld [vmem:[#allocation2 + $0x18] sm:$0x1]
      %v335 = vsel %vm327, 0, %v334
      %336 = vst [vmem:[#allocation2 + $0x18] sm:$0x1] %v335
      %v337 = vld [vmem:[#allocation2 + $0x24] sm:$0x1]
      %v338 = vsel %vm327, 0, %v337
      %339 = vst [vmem:[#allocation2 + $0x24] sm:$0x1] %v338
      %v340 = vld [vmem:[#allocation2 + $0x30] sm:$0x1]
      %v341 = vsel %vm327, 0, %v340
      %342 = vst [vmem:[#allocation2 + $0x30] sm:$0x1] %v341
      %v343 = vld [vmem:[#allocation2 + $0x3c] sm:$0x1]
      %v344 = vsel %vm327, 0, %v343
      %345 = vst [vmem:[#allocation2 + $0x3c] sm:$0x1] %v344
      %v346 = vld [vmem:[#allocation2 + $0x48] sm:$0x1]
      %v347 = vsel %vm327, 0, %v346
      %348 = vst [vmem:[#allocation2 + $0x48] sm:$0x1] %v347
      %v349 = vld [vmem:[#allocation2 + $0x54] sm:$0x1]
      %v350 = vsel %vm327, 0, %v349
      %351 = vst [vmem:[#allocation2 + $0x54] sm:$0x1] %v350
      %v352 = vld [vmem:[#allocation2 + $0x60] sm:$0x1]
      %v353 = vsel %vm327, 0, %v352
      %354 = vst [vmem:[#allocation2 + $0x60] sm:$0x1] %v353
      %v355 = vld [vmem:[#allocation2 + $0x6c] sm:$0x1]
      %v356 = vsel %vm327, 0, %v355
      %357 = vst [vmem:[#allocation2 + $0x6c] sm:$0x1] %v356
      %vm358 = vsmask.f32 7938
      %vm359 = vmand %vm325, %vm358
      %v360 = vld [vmem:[#allocation2 + $0x8] sm:$0x1]
      %v361 = vsel %vm359, 0, %v360
      %362 = vst [vmem:[#allocation2 + $0x8] sm:$0x1] %v361
      %v363 = vld [vmem:[#allocation2 + $0x14] sm:$0x1]
      %v364 = vsel %vm359, 0, %v363
      %365 = vst [vmem:[#allocation2 + $0x14] sm:$0x1] %v364
      %v366 = vld [vmem:[#allocation2 + $0x20] sm:$0x1]
      %v367 = vsel %vm359, 0, %v366
      %368 = vst [vmem:[#allocation2 + $0x20] sm:$0x1] %v367
      %v369 = vld [vmem:[#allocation2 + $0x2c] sm:$0x1]
      %v370 = vsel %vm359, 0, %v369
      %371 = vst [vmem:[#allocation2 + $0x2c] sm:$0x1] %v370
      %v372 = vld [vmem:[#allocation2 + $0x38] sm:$0x1]
      %v373 = vsel %vm359, 0, %v372
      %374 = vst [vmem:[#allocation2 + $0x38] sm:$0x1] %v373
      %v375 = vld [vmem:[#allocation2 + $0x44] sm:$0x1]
      %v376 = vsel %vm359, 0, %v375
      %377 = vst [vmem:[#allocation2 + $0x44] sm:$0x1] %v376
      %v378 = vld [vmem:[#allocation2 + $0x50] sm:$0x1]
      %v379 = vsel %vm359, 0, %v378
      %380 = vst [vmem:[#allocation2 + $0x50] sm:$0x1] %v379
      %v381 = vld [vmem:[#allocation2 + $0x5c] sm:$0x1]
      %v382 = vsel %vm359, 0, %v381
      %383 = vst [vmem:[#allocation2 + $0x5c] sm:$0x1] %v382
      %v384 = vld [vmem:[#allocation2 + $0x68] sm:$0x1]
      %v385 = vsel %vm359, 0, %v384
      %386 = vst [vmem:[#allocation2 + $0x68] sm:$0x1] %v385
      %v387 = vld [vmem:[#allocation2 + $0x74] sm:$0x1]
      %v388 = vsel %vm359, 0, %v387
      %389 = vst [vmem:[#allocation2 + $0x74] sm:$0x1] %v388
      %s390 = smul.u32 %s315, 2
      %s391 = smul.addr %s390, 4
      %s392 = scalar_lea.vmem %s288, %s391
      %v393 = vld [vmem:[%s392] sm:$0xf]
      %v394 = vld [vmem:[%s392 + $0x4] sm:$0xf]
      %v395 = vld [vmem:[%s392 + $0x8] sm:$0xf]
      %v396 = vld [vmem:[%s392 + $0xc] sm:$0xf]
      %v397 = vld [vmem:[%s392 + $0x10] sm:$0xf]
      %v398 = vld [vmem:[%s392 + $0x14] sm:$0xf]
      %v399 = vld [vmem:[%s392 + $0x18] sm:$0xf]
      %v400 = vld [vmem:[%s392 + $0x1c] sm:$0xf]
      %v401 = vld [vmem:[%s392 + $0x20] sm:$0xf]
      %v402 = vld [vmem:[%s392 + $0x24] sm:$0xf]
      %v403 = vld [vmem:[%s392 + $0x28] sm:$0xf]
      %v404 = vld [vmem:[%s392 + $0x2c] sm:$0xf]
      %v405 = vld [vmem:[%s392 + $0x30] sm:$0xf]
      %v406 = vld [vmem:[%s392 + $0x34] sm:$0xf]
      %v407 = vld [vmem:[%s392 + $0x38] sm:$0xf]
      %v408 = vld [vmem:[%s392 + $0x3c] sm:$0xf]
      %v409 = vunpack.c.l.bf16 %v393
      %v410 = vunpack.c.l.bf16 %v394
      %v411 = vunpack.c.l.bf16 %v395
      %v412 = vunpack.c.l.bf16 %v396
      %v413 = vunpack.c.l.bf16 %v397
      %v414 = vunpack.c.l.bf16 %v398
      %v415 = vunpack.c.l.bf16 %v399
      %v416 = vunpack.c.l.bf16 %v400
      %v417 = vunpack.c.l.bf16 %v401
      %v418 = vunpack.c.l.bf16 %v402
      %v419 = vunpack.c.l.bf16 %v403
      %v420 = vunpack.c.l.bf16 %v404
      %v421 = vunpack.c.l.bf16 %v405
      %v422 = vunpack.c.l.bf16 %v406
      %v423 = vunpack.c.l.bf16 %v407
      %v424 = vunpack.c.l.bf16 %v408
      %v426 = vlaneseq
      %v427 = vshrl.u32 %v426, 7
      %v428 = vsub.s32 0, %v427
      %v429 = vrot.slane %v316, %v428
      %v431 = vmul.f32 %v409, %v429
      %v432 = vmul.f32 %v410, %v429
      %v433 = vmul.f32 %v411, %v429
      %v434 = vmul.f32 %v412, %v429
      %v435 = vmul.f32 %v413, %v429
      %v436 = vmul.f32 %v414, %v429
      %v437 = vmul.f32 %v415, %v429
      %v438 = vmul.f32 %v416, %v429
      %v439 = vmul.f32 %v417, %v429
      %v440 = vmul.f32 %v418, %v429
      %v441 = vmul.f32 %v419, %v429
      %v442 = vmul.f32 %v420, %v429
      %v443 = vmul.f32 %v421, %v429
      %v444 = vmul.f32 %v422, %v429
      %v445 = vmul.f32 %v423, %v429
      %v446 = vmul.f32 %v424, %v429
      %v448 = vlaneseq
      %v449 = vshrl.u32 %v448, 7
      %v450 = vsub.s32 0, %v449
      %v451 = vrot.slane %v317, %v450
      %v453 = vadd.f32 %v431, %v451
      %v454 = vadd.f32 %v432, %v451
      %v455 = vadd.f32 %v433, %v451
      %v456 = vadd.f32 %v434, %v451
      %v457 = vadd.f32 %v435, %v451
      %v458 = vadd.f32 %v436, %v451
      %v459 = vadd.f32 %v437, %v451
      %v460 = vadd.f32 %v438, %v451
      %v461 = vadd.f32 %v439, %v451
      %v462 = vadd.f32 %v440, %v451
      %v463 = vadd.f32 %v441, %v451
      %v464 = vadd.f32 %v442, %v451
      %v465 = vadd.f32 %v443, %v451
      %v466 = vadd.f32 %v444, %v451
      %v467 = vadd.f32 %v445, %v451
      %v468 = vadd.f32 %v446, %v451
      %v469 = vmax.f32 %v453, 0.0
      %v470 = vmax.f32 %v454, 0.0
      %v471 = vmax.f32 %v455, 0.0
      %v472 = vmax.f32 %v456, 0.0
      %v473 = vmax.f32 %v457, 0.0
      %v474 = vmax.f32 %v458, 0.0
      %v475 = vmax.f32 %v459, 0.0
      %v476 = vmax.f32 %v460, 0.0
      %v477 = vmax.f32 %v461, 0.0
      %v478 = vmax.f32 %v462, 0.0
      %v479 = vmax.f32 %v463, 0.0
      %v480 = vmax.f32 %v464, 0.0
      %v481 = vmax.f32 %v465, 0.0
      %v482 = vmax.f32 %v466, 0.0
      %v483 = vmax.f32 %v467, 0.0
      %v484 = vmax.f32 %v468, 0.0
      %v485 = vpack.c.bf16 %v470, %v469
      %v486 = vpack.c.bf16 %v472, %v471
      %v487 = vpack.c.bf16 %v474, %v473
      %v488 = vpack.c.bf16 %v476, %v475
      %v489 = vpack.c.bf16 %v478, %v477
      %v490 = vpack.c.bf16 %v480, %v479
      %v491 = vpack.c.bf16 %v482, %v481
      %v492 = vpack.c.bf16 %v484, %v483
      %v501 = vunpack.c.l.b16 %v485
      %v502 = vunpack.c.h.b16 %v485
      %v503 = vunpack.c.l.b16 %v486
      %v504 = vunpack.c.h.b16 %v486
      %v505 = vunpack.c.l.b16 %v487
      %v506 = vunpack.c.h.b16 %v487
      %v507 = vunpack.c.l.b16 %v488
      %v508 = vunpack.c.h.b16 %v488
      %v509 = vunpack.c.l.b16 %v489
      %v510 = vunpack.c.h.b16 %v489
      %v511 = vunpack.c.l.b16 %v490
      %v512 = vunpack.c.h.b16 %v490
      %v513 = vunpack.c.l.b16 %v491
      %v514 = vunpack.c.h.b16 %v491
      %v515 = vunpack.c.l.b16 %v492
      %v516 = vunpack.c.h.b16 %v492
      %v517 = vpack.c.b16 %v501, %v501
      %v518 = vpack.c.b16 %v502, %v502
      %v519 = vpack.c.b16 %v503, %v503
      %v520 = vpack.c.b16 %v504, %v504
      %v521 = vpack.c.b16 %v505, %v505
      %v522 = vpack.c.b16 %v506, %v506
      %v523 = vpack.c.b16 %v507, %v507
      %v524 = vpack.c.b16 %v508, %v508
      %v525 = vpack.c.b16 %v509, %v509
      %v526 = vpack.c.b16 %v510, %v510
      %v527 = vpack.c.b16 %v511, %v511
      %v528 = vpack.c.b16 %v512, %v512
      %v529 = vpack.c.b16 %v513, %v513
      %v530 = vpack.c.b16 %v514, %v514
      %v531 = vpack.c.b16 %v515, %v515
      %v532 = vpack.c.b16 %v516, %v516
      %vm533 = vsmask.f32 4368
      %vm534 = vmor %vm326, %vm533
      %v536 = vshrl.u32 %v517, 16
      %v538 = vrot.slane %v536, 7
      %v539 = vshll.u32 %v517, 16
      %v541 = vor.u32 %v538, %v539
      %v542 = vrot.slane %v538, 4
      %v544 = vshrl.u32 %v518, 16
      %v546 = vrot.slane %v544, 7
      %v547 = vshll.u32 %v518, 16
      %v549 = vor.u32 %v546, %v547
      %v550 = vsel %vm534, %v542, %v549
      %v551 = vrot.slane %v546, 4
      %v553 = vshrl.u32 %v519, 16
      %v555 = vrot.slane %v553, 7
      %v556 = vshll.u32 %v519, 16
      %v558 = vor.u32 %v555, %v556
      %v559 = vrot.slane %v555, 4
      %v561 = vshrl.u32 %v520, 16
      %v563 = vrot.slane %v561, 7
      %v564 = vshll.u32 %v520, 16
      %v566 = vor.u32 %v563, %v564
      %v567 = vsel %vm534, %v559, %v566
      %v568 = vrot.slane %v563, 4
      %v570 = vshrl.u32 %v521, 16
      %v572 = vrot.slane %v570, 7
      %v573 = vshll.u32 %v521, 16
      %v575 = vor.u32 %v572, %v573
      %v576 = vrot.slane %v572, 4
      %v578 = vshrl.u32 %v522, 16
      %v580 = vrot.slane %v578, 7
      %v581 = vshll.u32 %v522, 16
      %v583 = vor.u32 %v580, %v581
      %v584 = vsel %vm534, %v576, %v583
      %v585 = vrot.slane %v580, 4
      %v587 = vshrl.u32 %v523, 16
      %v589 = vrot.slane %v587, 7
      %v590 = vshll.u32 %v523, 16
      %v592 = vor.u32 %v589, %v590
      %v593 = vrot.slane %v589, 4
      %v595 = vshrl.u32 %v524, 16
      %v597 = vrot.slane %v595, 7
      %v598 = vshll.u32 %v524, 16
      %v600 = vor.u32 %v597, %v598
      %v601 = vsel %vm534, %v593, %v600
      %v602 = vrot.slane %v597, 4
      %v604 = vshrl.u32 %v525, 16
      %v606 = vrot.slane %v604, 7
      %v607 = vshll.u32 %v525, 16
      %v609 = vor.u32 %v606, %v607
      %v610 = vrot.slane %v606, 4
      %v612 = vshrl.u32 %v526, 16
      %v614 = vrot.slane %v612, 7
      %v615 = vshll.u32 %v526, 16
      %v617 = vor.u32 %v614, %v615
      %v618 = vsel %vm534, %v610, %v617
      %v619 = vrot.slane %v614, 4
      %v621 = vshrl.u32 %v527, 16
      %v623 = vrot.slane %v621, 7
      %v624 = vshll.u32 %v527, 16
      %v626 = vor.u32 %v623, %v624
      %v627 = vrot.slane %v623, 4
      %v629 = vshrl.u32 %v528, 16
      %v631 = vrot.slane %v629, 7
      %v632 = vshll.u32 %v528, 16
      %v634 = vor.u32 %v631, %v632
      %v635 = vsel %vm534, %v627, %v634
      %v636 = vrot.slane %v631, 4
      %v638 = vshrl.u32 %v529, 16
      %v640 = vrot.slane %v638, 7
      %v641 = vshll.u32 %v529, 16
      %v643 = vor.u32 %v640, %v641
      %v644 = vrot.slane %v640, 4
      %v646 = vshrl.u32 %v530, 16
      %v648 = vrot.slane %v646, 7
      %v649 = vshll.u32 %v530, 16
      %v651 = vor.u32 %v648, %v649
      %v652 = vsel %vm534, %v644, %v651
      %v653 = vrot.slane %v648, 4
      %v655 = vshrl.u32 %v531, 16
      %v657 = vrot.slane %v655, 7
      %v658 = vshll.u32 %v531, 16
      %v660 = vor.u32 %v657, %v658
      %v661 = vrot.slane %v657, 4
      %v663 = vshrl.u32 %v532, 16
      %v665 = vrot.slane %v663, 7
      %v666 = vshll.u32 %v532, 16
      %v668 = vor.u32 %v665, %v666
      %v669 = vsel %vm534, %v661, %v668
      %v670 = vrot.slane %v665, 4
      %s695 = scalar_lea.vmem [#allocation2], 12
      %vm696 = vcmask 1043456
      %vm697 = vmand %vm696, %vm358
      %v698 = vld [vmem:[%s695] sm:$0xf]
      %v699 = vsel %vm697, %v541, %v698
      %700 = vst [vmem:[%s695] sm:$0xf] %v699
      %701 = vst [vmem:[%s695 + $0x4] sm:$0xf] %v550
      %v702 = vld [vmem:[%s695 + $0x8] sm:$0x1]
      %v703 = vsel %vm327, %v551, %v702
      %704 = vst [vmem:[%s695 + $0x8] sm:$0x1] %v703
      %v705 = vld [vmem:[%s695 + $0xc] sm:$0xf]
      %v706 = vsel %vm697, %v558, %v705
      %707 = vst [vmem:[%s695 + $0xc] sm:$0xf] %v706
      %708 = vst [vmem:[%s695 + $0x10] sm:$0xf] %v567
      %v709 = vld [vmem:[%s695 + $0x14] sm:$0x1]
      %v710 = vsel %vm327, %v568, %v709
      %711 = vst [vmem:[%s695 + $0x14] sm:$0x1] %v710
      %v712 = vld [vmem:[%s695 + $0x18] sm:$0xf]
      %v713 = vsel %vm697, %v575, %v712
      %714 = vst [vmem:[%s695 + $0x18] sm:$0xf] %v713
      %715 = vst [vmem:[%s695 + $0x1c] sm:$0xf] %v584
      %v716 = vld [vmem:[%s695 + $0x20] sm:$0x1]
      %v717 = vsel %vm327, %v585, %v716
      %718 = vst [vmem:[%s695 + $0x20] sm:$0x1] %v717
      %v719 = vld [vmem:[%s695 + $0x24] sm:$0xf]
      %v720 = vsel %vm697, %v592, %v719
      %721 = vst [vmem:[%s695 + $0x24] sm:$0xf] %v720
      %722 = vst [vmem:[%s695 + $0x28] sm:$0xf] %v601
      %v723 = vld [vmem:[%s695 + $0x2c] sm:$0x1]
      %v724 = vsel %vm327, %v602, %v723
      %725 = vst [vmem:[%s695 + $0x2c] sm:$0x1] %v724
      %v726 = vld [vmem:[%s695 + $0x30] sm:$0xf]
      %v727 = vsel %vm697, %v609, %v726
      %728 = vst [vmem:[%s695 + $0x30] sm:$0xf] %v727
      %729 = vst [vmem:[%s695 + $0x34] sm:$0xf] %v618
      %v730 = vld [vmem:[%s695 + $0x38] sm:$0x1]
      %v731 = vsel %vm327, %v619, %v730
      %732 = vst [vmem:[%s695 + $0x38] sm:$0x1] %v731
      %v733 = vld [vmem:[%s695 + $0x3c] sm:$0xf]
      %v734 = vsel %vm697, %v626, %v733
      %735 = vst [vmem:[%s695 + $0x3c] sm:$0xf] %v734
      %736 = vst [vmem:[%s695 + $0x40] sm:$0xf] %v635
      %v737 = vld [vmem:[%s695 + $0x44] sm:$0x1]
      %v738 = vsel %vm327, %v636, %v737
      %739 = vst [vmem:[%s695 + $0x44] sm:$0x1] %v738
      %v740 = vld [vmem:[%s695 + $0x48] sm:$0xf]
      %v741 = vsel %vm697, %v643, %v740
      %742 = vst [vmem:[%s695 + $0x48] sm:$0xf] %v741
      %743 = vst [vmem:[%s695 + $0x4c] sm:$0xf] %v652
      %v744 = vld [vmem:[%s695 + $0x50] sm:$0x1]
      %v745 = vsel %vm327, %v653, %v744
      %746 = vst [vmem:[%s695 + $0x50] sm:$0x1] %v745
      %v747 = vld [vmem:[%s695 + $0x54] sm:$0xf]
      %v748 = vsel %vm697, %v660, %v747
      %749 = vst [vmem:[%s695 + $0x54] sm:$0xf] %v748
      %750 = vst [vmem:[%s695 + $0x58] sm:$0xf] %v669
      %v751 = vld [vmem:[%s695 + $0x5c] sm:$0x1]
      %v752 = vsel %vm327, %v670, %v751
      %753 = vst [vmem:[%s695 + $0x5c] sm:$0x1] %v752
      %p754 = scmp.gt.s32.totalorder %s23, 0
      // Predicated region
      $region37: #{residual_bottleneck_block.5} parent=35 // pred_check
        %p755 = pneg %p754
      $region38: #{residual_bottleneck_block.5} parent=35 // pred_check_branch
        %757 = sbr.rel (%p755) target = $region40
      $region39: #{residual_bottleneck_block.5} parent=35 // pred_region
        %s758 = ssub.s32 %s315, 1
        %s759 = smul.u32 %s758, 2
        %s760 = smul.addr %s759, 4
        %s761 = scalar_lea.vmem %s288, %s760
        %v762 = vld [vmem:[%s761] sm:$0xf]
        %v763 = vld [vmem:[%s761 + $0x4] sm:$0xf]
        %v764 = vunpack.c.l.bf16 %v762
        %v765 = vunpack.c.l.bf16 %v763
        %v766 = vmul.f32 %v764, %v429
        %v767 = vmul.f32 %v765, %v429
        %v768 = vadd.f32 %v766, %v451
        %v769 = vadd.f32 %v767, %v451
        %v770 = vmax.f32 %v768, 0.0
        %v771 = vmax.f32 %v769, 0.0
        %v772 = vpack.c.bf16 %v771, %v770
        %v774 = vunpack.c.l.b16 %v772
        %v775 = vunpack.c.h.b16 %v772
        %v776 = vpack.c.b16 %v774, %v774
        %v777 = vpack.c.b16 %v775, %v775
        %v779 = vshrl.u32 %v776, 16
        %v781 = vrot.slane %v779, 7
        %v782 = vshll.u32 %v776, 16
        %v784 = vor.u32 %v781, %v782
        %v785 = vrot.slane %v781, 4
        %v787 = vshrl.u32 %v777, 16
        %v789 = vrot.slane %v787, 7
        %v790 = vshll.u32 %v777, 16
        %v792 = vor.u32 %v789, %v790
        %v793 = vsel %vm534, %v785, %v792
        %v794 = vrot.slane %v789, 4
        %v798 = vld [vmem:[#allocation2] sm:$0xf]
        %v799 = vsel %vm697, %v784, %v798
        %800 = vst [vmem:[#allocation2] sm:$0xf] %v799
        %801 = vst [vmem:[#allocation2 + $0x4] sm:$0xf] %v793
        %v802 = vld [vmem:[#allocation2 + $0x8] sm:$0x1]
        %v803 = vsel %vm327, %v794, %v802
        %804 = vst [vmem:[#allocation2 + $0x8] sm:$0x1] %v803
      $region40: #{residual_bottleneck_block.5} parent=35 // pred_fallthru
        _
      %p805 = scmp.lt.s32.totalorder %s23, 1
      // Predicated region
      $region41: #{residual_bottleneck_block.5} parent=35 // pred_check
        %p806 = pneg %p805
      $region42: #{residual_bottleneck_block.5} parent=35 // pred_check_branch
        %808 = sbr.rel (%p806) target = $region44
      $region43: #{residual_bottleneck_block.5} parent=35 // pred_region
        %s809 = sadd.s32 %s315, 8
        %s810 = smul.u32 %s809, 2
        %s811 = smul.addr %s810, 4
        %s812 = scalar_lea.vmem %s288, %s811
        %v813 = vld [vmem:[%s812] sm:$0xf]
        %v814 = vld [vmem:[%s812 + $0x4] sm:$0xf]
        %v815 = vunpack.c.l.bf16 %v813
        %v816 = vunpack.c.l.bf16 %v814
        %v817 = vmul.f32 %v815, %v429
        %v818 = vmul.f32 %v816, %v429
        %v819 = vadd.f32 %v817, %v451
        %v820 = vadd.f32 %v818, %v451
        %v821 = vmax.f32 %v819, 0.0
        %v822 = vmax.f32 %v820, 0.0
        %v823 = vpack.c.bf16 %v822, %v821
        %v825 = vunpack.c.l.b16 %v823
        %v826 = vunpack.c.h.b16 %v823
        %v827 = vpack.c.b16 %v825, %v825
        %v828 = vpack.c.b16 %v826, %v826
        %v830 = vshrl.u32 %v827, 16
        %v832 = vrot.slane %v830, 7
        %v833 = vshll.u32 %v827, 16
        %v835 = vor.u32 %v832, %v833
        %v836 = vrot.slane %v832, 4
        %v838 = vshrl.u32 %v828, 16
        %v840 = vrot.slane %v838, 7
        %v841 = vshll.u32 %v828, 16
        %v843 = vor.u32 %v840, %v841
        %v844 = vsel %vm534, %v836, %v843
        %v845 = vrot.slane %v840, 4
        %v849 = vld [vmem:[%s321] sm:$0xf]
        %v850 = vsel %vm697, %v835, %v849
        %851 = vst [vmem:[%s321] sm:$0xf] %v850
        %852 = vst [vmem:[%s321 + $0x4] sm:$0xf] %v844
        %v853 = vld [vmem:[%s321 + $0x8] sm:$0x1]
        %v854 = vsel %vm327, %v845, %v853
        %855 = vst [vmem:[%s321 + $0x8] sm:$0x1] %v854
      $region44: #{residual_bottleneck_block.5} parent=35 // pred_fallthru
        _
      %v856 = vld [vmem:[#allocation2] sm:$0xf]
      %v857 = vld [vmem:[#allocation2 + $0x4] sm:$0xf]
      %v858 = vld [vmem:[#allocation2 + $0xc] sm:$0xf]
      %v859 = vld [vmem:[#allocation2 + $0x10] sm:$0xf]
      %v860 = vld [vmem:[#allocation2 + $0x18] sm:$0xf]
      %v861 = vld [vmem:[#allocation2 + $0x1c] sm:$0xf]
      %v862 = vld [vmem:[#allocation2 + $0x24] sm:$0xf]
      %v863 = vld [vmem:[#allocation2 + $0x28] sm:$0xf]
      %v864 = vld [vmem:[#allocation2 + $0x30] sm:$0xf]
      %v865 = vld [vmem:[#allocation2 + $0x34] sm:$0xf]
      %v866 = vld [vmem:[#allocation2 + $0x3c] sm:$0xf]
      %v867 = vld [vmem:[#allocation2 + $0x40] sm:$0xf]
      %v868 = vld [vmem:[#allocation2 + $0x48] sm:$0xf]
      %v869 = vld [vmem:[#allocation2 + $0x4c] sm:$0xf]
      %v870 = vld [vmem:[#allocation2 + $0x54] sm:$0xf]
      %v871 = vld [vmem:[#allocation2 + $0x58] sm:$0xf]
      %v888 = vunpack.c.l.b16 %v856
      %v889 = vunpack.c.l.b16 %v857
      %v890 = vunpack.c.l.b16 %v858
      %v891 = vunpack.c.l.b16 %v859
      %v892 = vunpack.c.l.b16 %v860
      %v893 = vunpack.c.l.b16 %v861
      %v894 = vunpack.c.l.b16 %v862
      %v895 = vunpack.c.l.b16 %v863
      %v896 = vunpack.c.l.b16 %v864
      %v897 = vunpack.c.l.b16 %v865
      %v898 = vunpack.c.l.b16 %v866
      %v899 = vunpack.c.l.b16 %v867
      %v900 = vunpack.c.l.b16 %v868
      %v901 = vunpack.c.l.b16 %v869
      %v902 = vunpack.c.l.b16 %v870
      %v903 = vunpack.c.l.b16 %v871
      %v904 = vpack.c.b16 %v889, %v888
      %v905 = vpack.c.b16 %v891, %v890
      %v906 = vpack.c.b16 %v893, %v892
      %v907 = vpack.c.b16 %v895, %v894
      %v908 = vpack.c.b16 %v897, %v896
      %v909 = vpack.c.b16 %v899, %v898
      %v910 = vpack.c.b16 %v901, %v900
      %v911 = vpack.c.b16 %v903, %v902
      %920 = vst [vmem:[#allocation3] sm:$0xff] %v904
      %921 = vst [vmem:[#allocation3 + $0x48] sm:$0xff] %v905
      %922 = vst [vmem:[#allocation3 + $0x90] sm:$0xff] %v906
      %923 = vst [vmem:[#allocation3 + $0xd8] sm:$0xff] %v907
      %924 = vst [vmem:[#allocation3 + $0x120] sm:$0xff] %v908
      %925 = vst [vmem:[#allocation3 + $0x168] sm:$0xff] %v909
      %926 = vst [vmem:[#allocation3 + $0x1b0] sm:$0xff] %v910
      %927 = vst [vmem:[#allocation3 + $0x1f8] sm:$0xff] %v911
      %v928 = vld [vmem:[#allocation2] sm:$0xf]
      %v929 = vld [vmem:[#allocation2 + $0x4] sm:$0xf]
      %v930 = vld [vmem:[#allocation2 + $0x8] sm:$0x1]
      %v931 = vld [vmem:[#allocation2 + $0xc] sm:$0xf]
      %v932 = vld [vmem:[#allocation2 + $0x10] sm:$0xf]
      %v933 = vld [vmem:[#allocation2 + $0x14] sm:$0x1]
      %v934 = vld [vmem:[#allocation2 + $0x18] sm:$0xf]
      %v935 = vld [vmem:[#allocation2 + $0x1c] sm:$0xf]
      %v936 = vld [vmem:[#allocation2 + $0x20] sm:$0x1]
      %v937 = vld [vmem:[#allocation2 + $0x24] sm:$0xf]
      %v938 = vld [vmem:[#allocation2 + $0x28] sm:$0xf]
      %v939 = vld [vmem:[#allocation2 + $0x2c] sm:$0x1]
      %v940 = vld [vmem:[#allocation2 + $0x30] sm:$0xf]
      %v941 = vld [vmem:[#allocation2 + $0x34] sm:$0xf]
      %v942 = vld [vmem:[#allocation2 + $0x38] sm:$0x1]
      %v943 = vld [vmem:[#allocation2 + $0x3c] sm:$0xf]
      %v944 = vld [vmem:[#allocation2 + $0x40] sm:$0xf]
      %v945 = vld [vmem:[#allocation2 + $0x44] sm:$0x1]
      %v946 = vld [vmem:[#allocation2 + $0x48] sm:$0xf]
      %v947 = vld [vmem:[#allocation2 + $0x4c] sm:$0xf]
      %v948 = vld [vmem:[#allocation2 + $0x50] sm:$0x1]
      %v949 = vld [vmem:[#allocation2 + $0x54] sm:$0xf]
      %v950 = vld [vmem:[#allocation2 + $0x58] sm:$0xf]
      %v951 = vld [vmem:[#allocation2 + $0x5c] sm:$0x1]
      %vm952 = vsmask.f32 3328
      %vm953 = vsmask.f32 7440
      %vm954 = vmor %vm952, %vm953
      %v956 = vshrl.u32 %v928, 16
      %v958 = vrot.slane %v956, 4
      %v959 = vshll.u32 %v928, 16
      %v961 = vrot.slane %v959, 5
      %v962 = vor.u32 %v958, %v961
      %v963 = vrot.slane %v962, 4
      %v965 = vshll.u32 %v929, 16
      %v967 = vrot.slane %v965, 5
      %v968 = vsel %vm954, %v963, %v967
      %v969 = vshrl.u32 %v929, 16
      %v971 = vrot.slane %v969, 4
      %v972 = vor.u32 %v971, %v967
      %v973 = vrot.slane %v972, 4
      %v975 = vshll.u32 %v930, 16
      %v977 = vrot.slane %v975, 5
      %v978 = vsel %vm954, %v973, %v977
      %v980 = vshrl.u32 %v931, 16
      %v982 = vrot.slane %v980, 4
      %v983 = vshll.u32 %v931, 16
      %v985 = vrot.slane %v983, 5
      %v986 = vor.u32 %v982, %v985
      %v987 = vrot.slane %v986, 4
      %v989 = vshll.u32 %v932, 16
      %v991 = vrot.slane %v989, 5
      %v992 = vsel %vm954, %v987, %v991
      %v993 = vshrl.u32 %v932, 16
      %v995 = vrot.slane %v993, 4
      %v996 = vor.u32 %v995, %v991
      %v997 = vrot.slane %v996, 4
      %v999 = vshll.u32 %v933, 16
      %v1001 = vrot.slane %v999, 5
      %v1002 = vsel %vm954, %v997, %v1001
      %v1004 = vshrl.u32 %v934, 16
      %v1006 = vrot.slane %v1004, 4
      %v1007 = vshll.u32 %v934, 16
      %v1009 = vrot.slane %v1007, 5
      %v1010 = vor.u32 %v1006, %v1009
      %v1011 = vrot.slane %v1010, 4
      %v1013 = vshll.u32 %v935, 16
      %v1015 = vrot.slane %v1013, 5
      %v1016 = vsel %vm954, %v1011, %v1015
      %v1017 = vshrl.u32 %v935, 16
      %v1019 = vrot.slane %v1017, 4
      %v1020 = vor.u32 %v1019, %v1015
      %v1021 = vrot.slane %v1020, 4
      %v1023 = vshll.u32 %v936, 16
      %v1025 = vrot.slane %v1023, 5
      %v1026 = vsel %vm954, %v1021, %v1025
      %v1028 = vshrl.u32 %v937, 16
      %v1030 = vrot.slane %v1028, 4
      %v1031 = vshll.u32 %v937, 16
      %v1033 = vrot.slane %v1031, 5
      %v1034 = vor.u32 %v1030, %v1033
      %v1035 = vrot.slane %v1034, 4
      %v1037 = vshll.u32 %v938, 16
      %v1039 = vrot.slane %v1037, 5
      %v1040 = vsel %vm954, %v1035, %v1039
      %v1041 = vshrl.u32 %v938, 16
      %v1043 = vrot.slane %v1041, 4
      %v1044 = vor.u32 %v1043, %v1039
      %v1045 = vrot.slane %v1044, 4
      %v1047 = vshll.u32 %v939, 16
      %v1049 = vrot.slane %v1047, 5
      %v1050 = vsel %vm954, %v1045, %v1049
      %v1052 = vshrl.u32 %v940, 16
      %v1054 = vrot.slane %v1052, 4
      %v1055 = vshll.u32 %v940, 16
      %v1057 = vrot.slane %v1055, 5
      %v1058 = vor.u32 %v1054, %v1057
      %v1059 = vrot.slane %v1058, 4
      %v1061 = vshll.u32 %v941, 16
      %v1063 = vrot.slane %v1061, 5
      %v1064 = vsel %vm954, %v1059, %v1063
      %v1065 = vshrl.u32 %v941, 16
      %v1067 = vrot.slane %v1065, 4
      %v1068 = vor.u32 %v1067, %v1063
      %v1069 = vrot.slane %v1068, 4
      %v1071 = vshll.u32 %v942, 16
      %v1073 = vrot.slane %v1071, 5
      %v1074 = vsel %vm954, %v1069, %v1073
      %v1076 = vshrl.u32 %v943, 16
      %v1078 = vrot.slane %v1076, 4
      %v1079 = vshll.u32 %v943, 16
      %v1081 = vrot.slane %v1079, 5
      %v1082 = vor.u32 %v1078, %v1081
      %v1083 = vrot.slane %v1082, 4
      %v1085 = vshll.u32 %v944, 16
      %v1087 = vrot.slane %v1085, 5
      %v1088 = vsel %vm954, %v1083, %v1087
      %v1089 = vshrl.u32 %v944, 16
      %v1091 = vrot.slane %v1089, 4
      %v1092 = vor.u32 %v1091, %v1087
      %v1093 = vrot.slane %v1092, 4
      %v1095 = vshll.u32 %v945, 16
      %v1097 = vrot.slane %v1095, 5
      %v1098 = vsel %vm954, %v1093, %v1097
      %v1100 = vshrl.u32 %v946, 16
      %v1102 = vrot.slane %v1100, 4
      %v1103 = vshll.u32 %v946, 16
      %v1105 = vrot.slane %v1103, 5
      %v1106 = vor.u32 %v1102, %v1105
      %v1107 = vrot.slane %v1106, 4
      %v1109 = vshll.u32 %v947, 16
      %v1111 = vrot.slane %v1109, 5
      %v1112 = vsel %vm954, %v1107, %v1111
      %v1113 = vshrl.u32 %v947, 16
      %v1115 = vrot.slane %v1113, 4
      %v1116 = vor.u32 %v1115, %v1111
      %v1117 = vrot.slane %v1116, 4
      %v1119 = vshll.u32 %v948, 16
      %v1121 = vrot.slane %v1119, 5
      %v1122 = vsel %vm954, %v1117, %v1121
      %v1124 = vshrl.u32 %v949, 16
      %v1126 = vrot.slane %v1124, 4
      %v1127 = vshll.u32 %v949, 16
      %v1129 = vrot.slane %v1127, 5
      %v1130 = vor.u32 %v1126, %v1129
      %v1131 = vrot.slane %v1130, 4
      %v1133 = vshll.u32 %v950, 16
      %v1135 = vrot.slane %v1133, 5
      %v1136 = vsel %vm954, %v1131, %v1135
      %v1137 = vshrl.u32 %v950, 16
      %v1139 = vrot.slane %v1137, 4
      %v1140 = vor.u32 %v1139, %v1135
      %v1141 = vrot.slane %v1140, 4
      %v1143 = vshll.u32 %v951, 16
      %v1145 = vrot.slane %v1143, 5
      %v1146 = vsel %vm954, %v1141, %v1145
      %v1147 = vunpack.c.l.b16 %v968
      %v1148 = vunpack.c.l.b16 %v978
      %v1149 = vunpack.c.l.b16 %v992
      %v1150 = vunpack.c.l.b16 %v1002
      %v1151 = vunpack.c.l.b16 %v1016
      %v1152 = vunpack.c.l.b16 %v1026
      %v1153 = vunpack.c.l.b16 %v1040
      %v1154 = vunpack.c.l.b16 %v1050
      %v1155 = vunpack.c.l.b16 %v1064
      %v1156 = vunpack.c.l.b16 %v1074
      %v1157 = vunpack.c.l.b16 %v1088
      %v1158 = vunpack.c.l.b16 %v1098
      %v1159 = vunpack.c.l.b16 %v1112
      %v1160 = vunpack.c.l.b16 %v1122
      %v1161 = vunpack.c.l.b16 %v1136
      %v1162 = vunpack.c.l.b16 %v1146
      %v1163 = vpack.c.b16 %v1148, %v1147
      %v1164 = vpack.c.b16 %v1150, %v1149
      %v1165 = vpack.c.b16 %v1152, %v1151
      %v1166 = vpack.c.b16 %v1154, %v1153
      %v1167 = vpack.c.b16 %v1156, %v1155
      %v1168 = vpack.c.b16 %v1158, %v1157
      %v1169 = vpack.c.b16 %v1160, %v1159
      %v1170 = vpack.c.b16 %v1162, %v1161
      %1179 = vst [vmem:[#allocation3 + $0x8] sm:$0xff] %v1163
      %1180 = vst [vmem:[#allocation3 + $0x50] sm:$0xff] %v1164
      %1181 = vst [vmem:[#allocation3 + $0x98] sm:$0xff] %v1165
      %1182 = vst [vmem:[#allocation3 + $0xe0] sm:$0xff] %v1166
      %1183 = vst [vmem:[#allocation3 + $0x128] sm:$0xff] %v1167
      %1184 = vst [vmem:[#allocation3 + $0x170] sm:$0xff] %v1168
      %1185 = vst [vmem:[#allocation3 + $0x1b8] sm:$0xff] %v1169
      %1186 = vst [vmem:[#allocation3 + $0x200] sm:$0xff] %v1170
      %v1187 = vld [vmem:[#allocation2] sm:$0xe]
      %v1188 = vld [vmem:[#allocation2 + $0x4] sm:$0xf]
      %v1189 = vld [vmem:[#allocation2 + $0x8] sm:$0x1]
      %v1190 = vld [vmem:[#allocation2 + $0xc] sm:$0xe]
      %v1191 = vld [vmem:[#allocation2 + $0x10] sm:$0xf]
      %v1192 = vld [vmem:[#allocation2 + $0x14] sm:$0x1]
      %v1193 = vld [vmem:[#allocation2 + $0x18] sm:$0xe]
      %v1194 = vld [vmem:[#allocation2 + $0x1c] sm:$0xf]
      %v1195 = vld [vmem:[#allocation2 + $0x20] sm:$0x1]
      %v1196 = vld [vmem:[#allocation2 + $0x24] sm:$0xe]
      %v1197 = vld [vmem:[#allocation2 + $0x28] sm:$0xf]
      %v1198 = vld [vmem:[#allocation2 + $0x2c] sm:$0x1]
      %v1199 = vld [vmem:[#allocation2 + $0x30] sm:$0xe]
      %v1200 = vld [vmem:[#allocation2 + $0x34] sm:$0xf]
      %v1201 = vld [vmem:[#allocation2 + $0x38] sm:$0x1]
      %v1202 = vld [vmem:[#allocation2 + $0x3c] sm:$0xe]
      %v1203 = vld [vmem:[#allocation2 + $0x40] sm:$0xf]
      %v1204 = vld [vmem:[#allocation2 + $0x44] sm:$0x1]
      %v1205 = vld [vmem:[#allocation2 + $0x48] sm:$0xe]
      %v1206 = vld [vmem:[#allocation2 + $0x4c] sm:$0xf]
      %v1207 = vld [vmem:[#allocation2 + $0x50] sm:$0x1]
      %v1208 = vld [vmem:[#allocation2 + $0x54] sm:$0xe]
      %v1209 = vld [vmem:[#allocation2 + $0x58] sm:$0xf]
      %v1210 = vld [vmem:[#allocation2 + $0x5c] sm:$0x1]
      %vm1235 = vcmask 1042432
      %vm1236 = vcmask 1046532
      %vm1237 = vmor %vm1235, %vm1236
      %v1238 = vrot.slane %v1187, 5
      %v1239 = vrot.slane %v1238, 4
      %v1240 = vrot.slane %v1188, 5
      %v1241 = vsel %vm1237, %v1239, %v1240
      %v1242 = vrot.slane %v1240, 4
      %v1243 = vrot.slane %v1189, 5
      %v1244 = vsel %vm1237, %v1242, %v1243
      %v1245 = vrot.slane %v1190, 5
      %v1246 = vrot.slane %v1245, 4
      %v1247 = vrot.slane %v1191, 5
      %v1248 = vsel %vm1237, %v1246, %v1247
      %v1249 = vrot.slane %v1247, 4
      %v1250 = vrot.slane %v1192, 5
      %v1251 = vsel %vm1237, %v1249, %v1250
      %v1252 = vrot.slane %v1193, 5
      %v1253 = vrot.slane %v1252, 4
      %v1254 = vrot.slane %v1194, 5
      %v1255 = vsel %vm1237, %v1253, %v1254
      %v1256 = vrot.slane %v1254, 4
      %v1257 = vrot.slane %v1195, 5
      %v1258 = vsel %vm1237, %v1256, %v1257
      %v1259 = vrot.slane %v1196, 5
      %v1260 = vrot.slane %v1259, 4
      %v1261 = vrot.slane %v1197, 5
      %v1262 = vsel %vm1237, %v1260, %v1261
      %v1263 = vrot.slane %v1261, 4
      %v1264 = vrot.slane %v1198, 5
      %v1265 = vsel %vm1237, %v1263, %v1264
      %v1266 = vrot.slane %v1199, 5
      %v1267 = vrot.slane %v1266, 4
      %v1268 = vrot.slane %v1200, 5
      %v1269 = vsel %vm1237, %v1267, %v1268
      %v1270 = vrot.slane %v1268, 4
      %v1271 = vrot.slane %v1201, 5
      %v1272 = vsel %vm1237, %v1270, %v1271
      %v1273 = vrot.slane %v1202, 5
      %v1274 = vrot.slane %v1273, 4
      %v1275 = vrot.slane %v1203, 5
      %v1276 = vsel %vm1237, %v1274, %v1275
      %v1277 = vrot.slane %v1275, 4
      %v1278 = vrot.slane %v1204, 5
      %v1279 = vsel %vm1237, %v1277, %v1278
      %v1280 = vrot.slane %v1205, 5
      %v1281 = vrot.slane %v1280, 4
      %v1282 = vrot.slane %v1206, 5
      %v1283 = vsel %vm1237, %v1281, %v1282
      %v1284 = vrot.slane %v1282, 4
      %v1285 = vrot.slane %v1207, 5
      %v1286 = vsel %vm1237, %v1284, %v1285
      %v1287 = vrot.slane %v1208, 5
      %v1288 = vrot.slane %v1287, 4
      %v1289 = vrot.slane %v1209, 5
      %v1290 = vsel %vm1237, %v1288, %v1289
      %v1291 = vrot.slane %v1289, 4
      %v1292 = vrot.slane %v1210, 5
      %v1293 = vsel %vm1237, %v1291, %v1292
      %v1294 = vunpack.c.l.b16 %v1241
      %v1295 = vunpack.c.l.b16 %v1244
      %v1296 = vunpack.c.l.b16 %v1248
      %v1297 = vunpack.c.l.b16 %v1251
      %v1298 = vunpack.c.l.b16 %v1255
      %v1299 = vunpack.c.l.b16 %v1258
      %v1300 = vunpack.c.l.b16 %v1262
      %v1301 = vunpack.c.l.b16 %v1265
      %v1302 = vunpack.c.l.b16 %v1269
      %v1303 = vunpack.c.l.b16 %v1272
      %v1304 = vunpack.c.l.b16 %v1276
      %v1305 = vunpack.c.l.b16 %v1279
      %v1306 = vunpack.c.l.b16 %v1283
      %v1307 = vunpack.c.l.b16 %v1286
      %v1308 = vunpack.c.l.b16 %v1290
      %v1309 = vunpack.c.l.b16 %v1293
      %v1310 = vpack.c.b16 %v1295, %v1294
      %v1311 = vpack.c.b16 %v1297, %v1296
      %v1312 = vpack.c.b16 %v1299, %v1298
      %v1313 = vpack.c.b16 %v1301, %v1300
      %v1314 = vpack.c.b16 %v1303, %v1302
      %v1315 = vpack.c.b16 %v1305, %v1304
      %v1316 = vpack.c.b16 %v1307, %v1306
      %v1317 = vpack.c.b16 %v1309, %v1308
      %1326 = vst [vmem:[#allocation3 + $0x10] sm:$0xff] %v1310
      %1327 = vst [vmem:[#allocation3 + $0x58] sm:$0xff] %v1311
      %1328 = vst [vmem:[#allocation3 + $0xa0] sm:$0xff] %v1312
      %1329 = vst [vmem:[#allocation3 + $0xe8] sm:$0xff] %v1313
      %1330 = vst [vmem:[#allocation3 + $0x130] sm:$0xff] %v1314
      %1331 = vst [vmem:[#allocation3 + $0x178] sm:$0xff] %v1315
      %1332 = vst [vmem:[#allocation3 + $0x1c0] sm:$0xff] %v1316
      %1333 = vst [vmem:[#allocation3 + $0x208] sm:$0xff] %v1317
      %v1334 = vld [vmem:[%s695] sm:$0xf]
      %v1335 = vld [vmem:[%s695 + $0x4] sm:$0xf]
      %v1336 = vld [vmem:[%s695 + $0xc] sm:$0xf]
      %v1337 = vld [vmem:[%s695 + $0x10] sm:$0xf]
      %v1338 = vld [vmem:[%s695 + $0x18] sm:$0xf]
      %v1339 = vld [vmem:[%s695 + $0x1c] sm:$0xf]
      %v1340 = vld [vmem:[%s695 + $0x24] sm:$0xf]
      %v1341 = vld [vmem:[%s695 + $0x28] sm:$0xf]
      %v1342 = vld [vmem:[%s695 + $0x30] sm:$0xf]
      %v1343 = vld [vmem:[%s695 + $0x34] sm:$0xf]
      %v1344 = vld [vmem:[%s695 + $0x3c] sm:$0xf]
      %v1345 = vld [vmem:[%s695 + $0x40] sm:$0xf]
      %v1346 = vld [vmem:[%s695 + $0x48] sm:$0xf]
      %v1347 = vld [vmem:[%s695 + $0x4c] sm:$0xf]
      %v1348 = vld [vmem:[%s695 + $0x54] sm:$0xf]
      %v1349 = vld [vmem:[%s695 + $0x58] sm:$0xf]
      %v1366 = vunpack.c.l.b16 %v1334
      %v1367 = vunpack.c.l.b16 %v1335
      %v1368 = vunpack.c.l.b16 %v1336
      %v1369 = vunpack.c.l.b16 %v1337
      %v1370 = vunpack.c.l.b16 %v1338
      %v1371 = vunpack.c.l.b16 %v1339
      %v1372 = vunpack.c.l.b16 %v1340
      %v1373 = vunpack.c.l.b16 %v1341
      %v1374 = vunpack.c.l.b16 %v1342
      %v1375 = vunpack.c.l.b16 %v1343
      %v1376 = vunpack.c.l.b16 %v1344
      %v1377 = vunpack.c.l.b16 %v1345
      %v1378 = vunpack.c.l.b16 %v1346
      %v1379 = vunpack.c.l.b16 %v1347
      %v1380 = vunpack.c.l.b16 %v1348
      %v1381 = vunpack.c.l.b16 %v1349
      %v1382 = vpack.c.b16 %v1367, %v1366
      %v1383 = vpack.c.b16 %v1369, %v1368
      %v1384 = vpack.c.b16 %v1371, %v1370
      %v1385 = vpack.c.b16 %v1373, %v1372
      %v1386 = vpack.c.b16 %v1375, %v1374
      %v1387 = vpack.c.b16 %v1377, %v1376
      %v1388 = vpack.c.b16 %v1379, %v1378
      %v1389 = vpack.c.b16 %v1381, %v1380
      %1398 = vst [vmem:[#allocation3 + $0x18] sm:$0xff] %v1382
      %1399 = vst [vmem:[#allocation3 + $0x60] sm:$0xff] %v1383
      %1400 = vst [vmem:[#allocation3 + $0xa8] sm:$0xff] %v1384
      %1401 = vst [vmem:[#allocation3 + $0xf0] sm:$0xff] %v1385
      %1402 = vst [vmem:[#allocation3 + $0x138] sm:$0xff] %v1386
      %1403 = vst [vmem:[#allocation3 + $0x180] sm:$0xff] %v1387
      %1404 = vst [vmem:[#allocation3 + $0x1c8] sm:$0xff] %v1388
      %1405 = vst [vmem:[#allocation3 + $0x210] sm:$0xff] %v1389
      %v1406 = vld [vmem:[%s695] sm:$0xf]
      %v1407 = vld [vmem:[%s695 + $0x4] sm:$0xf]
      %v1408 = vld [vmem:[%s695 + $0x8] sm:$0x1]
      %v1409 = vld [vmem:[%s695 + $0xc] sm:$0xf]
      %v1410 = vld [vmem:[%s695 + $0x10] sm:$0xf]
      %v1411 = vld [vmem:[%s695 + $0x14] sm:$0x1]
      %v1412 = vld [vmem:[%s695 + $0x18] sm:$0xf]
      %v1413 = vld [vmem:[%s695 + $0x1c] sm:$0xf]
      %v1414 = vld [vmem:[%s695 + $0x20] sm:$0x1]
      %v1415 = vld [vmem:[%s695 + $0x24] sm:$0xf]
      %v1416 = vld [vmem:[%s695 + $0x28] sm:$0xf]
      %v1417 = vld [vmem:[%s695 + $0x2c] sm:$0x1]
      %v1418 = vld [vmem:[%s695 + $0x30] sm:$0xf]
      %v1419 = vld [vmem:[%s695 + $0x34] sm:$0xf]
      %v1420 = vld [vmem:[%s695 + $0x38] sm:$0x1]
      %v1421 = vld [vmem:[%s695 + $0x3c] sm:$0xf]
      %v1422 = vld [vmem:[%s695 + $0x40] sm:$0xf]
      %v1423 = vld [vmem:[%s695 + $0x44] sm:$0x1]
      %v1424 = vld [vmem:[%s695 + $0x48] sm:$0xf]
      %v1425 = vld [vmem:[%s695 + $0x4c] sm:$0xf]
      %v1426 = vld [vmem:[%s695 + $0x50] sm:$0x1]
      %v1427 = vld [vmem:[%s695 + $0x54] sm:$0xf]
      %v1428 = vld [vmem:[%s695 + $0x58] sm:$0xf]
      %v1429 = vld [vmem:[%s695 + $0x5c] sm:$0x1]
      %v1431 = vshrl.u32 %v1406, 16
      %v1433 = vrot.slane %v1431, 4
      %v1434 = vshll.u32 %v1406, 16
      %v1436 = vrot.slane %v1434, 5
      %v1437 = vor.u32 %v1433, %v1436
      %v1438 = vrot.slane %v1437, 4
      %v1440 = vshll.u32 %v1407, 16
      %v1442 = vrot.slane %v1440, 5
      %v1443 = vsel %vm954, %v1438, %v1442
      %v1444 = vshrl.u32 %v1407, 16
      %v1446 = vrot.slane %v1444, 4
      %v1447 = vor.u32 %v1446, %v1442
      %v1448 = vrot.slane %v1447, 4
      %v1450 = vshll.u32 %v1408, 16
      %v1452 = vrot.slane %v1450, 5
      %v1453 = vsel %vm954, %v1448, %v1452
      %v1455 = vshrl.u32 %v1409, 16
      %v1457 = vrot.slane %v1455, 4
      %v1458 = vshll.u32 %v1409, 16
      %v1460 = vrot.slane %v1458, 5
      %v1461 = vor.u32 %v1457, %v1460
      %v1462 = vrot.slane %v1461, 4
      %v1464 = vshll.u32 %v1410, 16
      %v1466 = vrot.slane %v1464, 5
      %v1467 = vsel %vm954, %v1462, %v1466
      %v1468 = vshrl.u32 %v1410, 16
      %v1470 = vrot.slane %v1468, 4
      %v1471 = vor.u32 %v1470, %v1466
      %v1472 = vrot.slane %v1471, 4
      %v1474 = vshll.u32 %v1411, 16
      %v1476 = vrot.slane %v1474, 5
      %v1477 = vsel %vm954, %v1472, %v1476
      %v1479 = vshrl.u32 %v1412, 16
      %v1481 = vrot.slane %v1479, 4
      %v1482 = vshll.u32 %v1412, 16
      %v1484 = vrot.slane %v1482, 5
      %v1485 = vor.u32 %v1481, %v1484
      %v1486 = vrot.slane %v1485, 4
      %v1488 = vshll.u32 %v1413, 16
      %v1490 = vrot.slane %v1488, 5
      %v1491 = vsel %vm954, %v1486, %v1490
      %v1492 = vshrl.u32 %v1413, 16
      %v1494 = vrot.slane %v1492, 4
      %v1495 = vor.u32 %v1494, %v1490
      %v1496 = vrot.slane %v1495, 4
      %v1498 = vshll.u32 %v1414, 16
      %v1500 = vrot.slane %v1498, 5
      %v1501 = vsel %vm954, %v1496, %v1500
      %v1503 = vshrl.u32 %v1415, 16
      %v1505 = vrot.slane %v1503, 4
      %v1506 = vshll.u32 %v1415, 16
      %v1508 = vrot.slane %v1506, 5
      %v1509 = vor.u32 %v1505, %v1508
      %v1510 = vrot.slane %v1509, 4
      %v1512 = vshll.u32 %v1416, 16
      %v1514 = vrot.slane %v1512, 5
      %v1515 = vsel %vm954, %v1510, %v1514
      %v1516 = vshrl.u32 %v1416, 16
      %v1518 = vrot.slane %v1516, 4
      %v1519 = vor.u32 %v1518, %v1514
      %v1520 = vrot.slane %v1519, 4
      %v1522 = vshll.u32 %v1417, 16
      %v1524 = vrot.slane %v1522, 5
      %v1525 = vsel %vm954, %v1520, %v1524
      %v1527 = vshrl.u32 %v1418, 16
      %v1529 = vrot.slane %v1527, 4
      %v1530 = vshll.u32 %v1418, 16
      %v1532 = vrot.slane %v1530, 5
      %v1533 = vor.u32 %v1529, %v1532
      %v1534 = vrot.slane %v1533, 4
      %v1536 = vshll.u32 %v1419, 16
      %v1538 = vrot.slane %v1536, 5
      %v1539 = vsel %vm954, %v1534, %v1538
      %v1540 = vshrl.u32 %v1419, 16
      %v1542 = vrot.slane %v1540, 4
      %v1543 = vor.u32 %v1542, %v1538
      %v1544 = vrot.slane %v1543, 4
      %v1546 = vshll.u32 %v1420, 16
      %v1548 = vrot.slane %v1546, 5
      %v1549 = vsel %vm954, %v1544, %v1548
      %v1551 = vshrl.u32 %v1421, 16
      %v1553 = vrot.slane %v1551, 4
      %v1554 = vshll.u32 %v1421, 16
      %v1556 = vrot.slane %v1554, 5
      %v1557 = vor.u32 %v1553, %v1556
      %v1558 = vrot.slane %v1557, 4
      %v1560 = vshll.u32 %v1422, 16
      %v1562 = vrot.slane %v1560, 5
      %v1563 = vsel %vm954, %v1558, %v1562
      %v1564 = vshrl.u32 %v1422, 16
      %v1566 = vrot.slane %v1564, 4
      %v1567 = vor.u32 %v1566, %v1562
      %v1568 = vrot.slane %v1567, 4
      %v1570 = vshll.u32 %v1423, 16
      %v1572 = vrot.slane %v1570, 5
      %v1573 = vsel %vm954, %v1568, %v1572
      %v1575 = vshrl.u32 %v1424, 16
      %v1577 = vrot.slane %v1575, 4
      %v1578 = vshll.u32 %v1424, 16
      %v1580 = vrot.slane %v1578, 5
      %v1581 = vor.u32 %v1577, %v1580
      %v1582 = vrot.slane %v1581, 4
      %v1584 = vshll.u32 %v1425, 16
      %v1586 = vrot.slane %v1584, 5
      %v1587 = vsel %vm954, %v1582, %v1586
      %v1588 = vshrl.u32 %v1425, 16
      %v1590 = vrot.slane %v1588, 4
      %v1591 = vor.u32 %v1590, %v1586
      %v1592 = vrot.slane %v1591, 4
      %v1594 = vshll.u32 %v1426, 16
      %v1596 = vrot.slane %v1594, 5
      %v1597 = vsel %vm954, %v1592, %v1596
      %v1599 = vshrl.u32 %v1427, 16
      %v1601 = vrot.slane %v1599, 4
      %v1602 = vshll.u32 %v1427, 16
      %v1604 = vrot.slane %v1602, 5
      %v1605 = vor.u32 %v1601, %v1604
      %v1606 = vrot.slane %v1605, 4
      %v1608 = vshll.u32 %v1428, 16
      %v1610 = vrot.slane %v1608, 5
      %v1611 = vsel %vm954, %v1606, %v1610
      %v1612 = vshrl.u32 %v1428, 16
      %v1614 = vrot.slane %v1612, 4
      %v1615 = vor.u32 %v1614, %v1610
      %v1616 = vrot.slane %v1615, 4
      %v1618 = vshll.u32 %v1429, 16
      %v1620 = vrot.slane %v1618, 5
      %v1621 = vsel %vm954, %v1616, %v1620
      %v1622 = vunpack.c.l.b16 %v1443
      %v1623 = vunpack.c.l.b16 %v1453
      %v1624 = vunpack.c.l.b16 %v1467
      %v1625 = vunpack.c.l.b16 %v1477
      %v1626 = vunpack.c.l.b16 %v1491
      %v1627 = vunpack.c.l.b16 %v1501
      %v1628 = vunpack.c.l.b16 %v1515
      %v1629 = vunpack.c.l.b16 %v1525
      %v1630 = vunpack.c.l.b16 %v1539
      %v1631 = vunpack.c.l.b16 %v1549
      %v1632 = vunpack.c.l.b16 %v1563
      %v1633 = vunpack.c.l.b16 %v1573
      %v1634 = vunpack.c.l.b16 %v1587
      %v1635 = vunpack.c.l.b16 %v1597
      %v1636 = vunpack.c.l.b16 %v1611
      %v1637 = vunpack.c.l.b16 %v1621
      %v1638 = vpack.c.b16 %v1623, %v1622
      %v1639 = vpack.c.b16 %v1625, %v1624
      %v1640 = vpack.c.b16 %v1627, %v1626
      %v1641 = vpack.c.b16 %v1629, %v1628
      %v1642 = vpack.c.b16 %v1631, %v1630
      %v1643 = vpack.c.b16 %v1633, %v1632
      %v1644 = vpack.c.b16 %v1635, %v1634
      %v1645 = vpack.c.b16 %v1637, %v1636
      %1654 = vst [vmem:[#allocation3 + $0x20] sm:$0xff] %v1638
      %1655 = vst [vmem:[#allocation3 + $0x68] sm:$0xff] %v1639
      %1656 = vst [vmem:[#allocation3 + $0xb0] sm:$0xff] %v1640
      %1657 = vst [vmem:[#allocation3 + $0xf8] sm:$0xff] %v1641
      %1658 = vst [vmem:[#allocation3 + $0x140] sm:$0xff] %v1642
      %1659 = vst [vmem:[#allocation3 + $0x188] sm:$0xff] %v1643
      %1660 = vst [vmem:[#allocation3 + $0x1d0] sm:$0xff] %v1644
      %1661 = vst [vmem:[#allocation3 + $0x218] sm:$0xff] %v1645
      %v1662 = vld [vmem:[%s695] sm:$0xe]
      %v1663 = vld [vmem:[%s695 + $0x4] sm:$0xf]
      %v1664 = vld [vmem:[%s695 + $0x8] sm:$0x1]
      %v1665 = vld [vmem:[%s695 + $0xc] sm:$0xe]
      %v1666 = vld [vmem:[%s695 + $0x10] sm:$0xf]
      %v1667 = vld [vmem:[%s695 + $0x14] sm:$0x1]
      %v1668 = vld [vmem:[%s695 + $0x18] sm:$0xe]
      %v1669 = vld [vmem:[%s695 + $0x1c] sm:$0xf]
      %v1670 = vld [vmem:[%s695 + $0x20] sm:$0x1]
      %v1671 = vld [vmem:[%s695 + $0x24] sm:$0xe]
      %v1672 = vld [vmem:[%s695 + $0x28] sm:$0xf]
      %v1673 = vld [vmem:[%s695 + $0x2c] sm:$0x1]
      %v1674 = vld [vmem:[%s695 + $0x30] sm:$0xe]
      %v1675 = vld [vmem:[%s695 + $0x34] sm:$0xf]
      %v1676 = vld [vmem:[%s695 + $0x38] sm:$0x1]
      %v1677 = vld [vmem:[%s695 + $0x3c] sm:$0xe]
      %v1678 = vld [vmem:[%s695 + $0x40] sm:$0xf]
      %v1679 = vld [vmem:[%s695 + $0x44] sm:$0x1]
      %v1680 = vld [vmem:[%s695 + $0x48] sm:$0xe]
      %v1681 = vld [vmem:[%s695 + $0x4c] sm:$0xf]
      %v1682 = vld [vmem:[%s695 + $0x50] sm:$0x1]
      %v1683 = vld [vmem:[%s695 + $0x54] sm:$0xe]
      %v1684 = vld [vmem:[%s695 + $0x58] sm:$0xf]
      %v1685 = vld [vmem:[%s695 + $0x5c] sm:$0x1]
      %v1710 = vrot.slane %v1662, 5
      %v1711 = vrot.slane %v1710, 4
      %v1712 = vrot.slane %v1663, 5
      %v1713 = vsel %vm1237, %v1711, %v1712
      %v1714 = vrot.slane %v1712, 4
      %v1715 = vrot.slane %v1664, 5
      %v1716 = vsel %vm1237, %v1714, %v1715
      %v1717 = vrot.slane %v1665, 5
      %v1718 = vrot.slane %v1717, 4
      %v1719 = vrot.slane %v1666, 5
      %v1720 = vsel %vm1237, %v1718, %v1719
      %v1721 = vrot.slane %v1719, 4
      %v1722 = vrot.slane %v1667, 5
      %v1723 = vsel %vm1237, %v1721, %v1722
      %v1724 = vrot.slane %v1668, 5
      %v1725 = vrot.slane %v1724, 4
      %v1726 = vrot.slane %v1669, 5
      %v1727 = vsel %vm1237, %v1725, %v1726
      %v1728 = vrot.slane %v1726, 4
      %v1729 = vrot.slane %v1670, 5
      %v1730 = vsel %vm1237, %v1728, %v1729
      %v1731 = vrot.slane %v1671, 5
      %v1732 = vrot.slane %v1731, 4
      %v1733 = vrot.slane %v1672, 5
      %v1734 = vsel %vm1237, %v1732, %v1733
      %v1735 = vrot.slane %v1733, 4
      %v1736 = vrot.slane %v1673, 5
      %v1737 = vsel %vm1237, %v1735, %v1736
      %v1738 = vrot.slane %v1674, 5
      %v1739 = vrot.slane %v1738, 4
      %v1740 = vrot.slane %v1675, 5
      %v1741 = vsel %vm1237, %v1739, %v1740
      %v1742 = vrot.slane %v1740, 4
      %v1743 = vrot.slane %v1676, 5
      %v1744 = vsel %vm1237, %v1742, %v1743
      %v1745 = vrot.slane %v1677, 5
      %v1746 = vrot.slane %v1745, 4
      %v1747 = vrot.slane %v1678, 5
      %v1748 = vsel %vm1237, %v1746, %v1747
      %v1749 = vrot.slane %v1747, 4
      %v1750 = vrot.slane %v1679, 5
      %v1751 = vsel %vm1237, %v1749, %v1750
      %v1752 = vrot.slane %v1680, 5
      %v1753 = vrot.slane %v1752, 4
      %v1754 = vrot.slane %v1681, 5
      %v1755 = vsel %vm1237, %v1753, %v1754
      %v1756 = vrot.slane %v1754, 4
      %v1757 = vrot.slane %v1682, 5
      %v1758 = vsel %vm1237, %v1756, %v1757
      %v1759 = vrot.slane %v1683, 5
      %v1760 = vrot.slane %v1759, 4
      %v1761 = vrot.slane %v1684, 5
      %v1762 = vsel %vm1237, %v1760, %v1761
      %v1763 = vrot.slane %v1761, 4
      %v1764 = vrot.slane %v1685, 5
      %v1765 = vsel %vm1237, %v1763, %v1764
      %v1766 = vunpack.c.l.b16 %v1713
      %v1767 = vunpack.c.l.b16 %v1716
      %v1768 = vunpack.c.l.b16 %v1720
      %v1769 = vunpack.c.l.b16 %v1723
      %v1770 = vunpack.c.l.b16 %v1727
      %v1771 = vunpack.c.l.b16 %v1730
      %v1772 = vunpack.c.l.b16 %v1734
      %v1773 = vunpack.c.l.b16 %v1737
      %v1774 = vunpack.c.l.b16 %v1741
      %v1775 = vunpack.c.l.b16 %v1744
      %v1776 = vunpack.c.l.b16 %v1748
      %v1777 = vunpack.c.l.b16 %v1751
      %v1778 = vunpack.c.l.b16 %v1755
      %v1779 = vunpack.c.l.b16 %v1758
      %v1780 = vunpack.c.l.b16 %v1762
      %v1781 = vunpack.c.l.b16 %v1765
      %v1782 = vpack.c.b16 %v1767, %v1766
      %v1783 = vpack.c.b16 %v1769, %v1768
      %v1784 = vpack.c.b16 %v1771, %v1770
      %v1785 = vpack.c.b16 %v1773, %v1772
      %v1786 = vpack.c.b16 %v1775, %v1774
      %v1787 = vpack.c.b16 %v1777, %v1776
      %v1788 = vpack.c.b16 %v1779, %v1778
      %v1789 = vpack.c.b16 %v1781, %v1780
      %1798 = vst [vmem:[#allocation3 + $0x28] sm:$0xff] %v1782
      %1799 = vst [vmem:[#allocation3 + $0x70] sm:$0xff] %v1783
      %1800 = vst [vmem:[#allocation3 + $0xb8] sm:$0xff] %v1784
      %1801 = vst [vmem:[#allocation3 + $0x100] sm:$0xff] %v1785
      %1802 = vst [vmem:[#allocation3 + $0x148] sm:$0xff] %v1786
      %1803 = vst [vmem:[#allocation3 + $0x190] sm:$0xff] %v1787
      %1804 = vst [vmem:[#allocation3 + $0x1d8] sm:$0xff] %v1788
      %1805 = vst [vmem:[#allocation3 + $0x220] sm:$0xff] %v1789
      %s1806 = scalar_lea.vmem [#allocation2], 24
      %v1807 = vld [vmem:[%s1806] sm:$0xf]
      %v1808 = vld [vmem:[%s1806 + $0x4] sm:$0xf]
      %v1809 = vld [vmem:[%s1806 + $0xc] sm:$0xf]
      %v1810 = vld [vmem:[%s1806 + $0x10] sm:$0xf]
      %v1811 = vld [vmem:[%s1806 + $0x18] sm:$0xf]
      %v1812 = vld [vmem:[%s1806 + $0x1c] sm:$0xf]
      %v1813 = vld [vmem:[%s1806 + $0x24] sm:$0xf]
      %v1814 = vld [vmem:[%s1806 + $0x28] sm:$0xf]
      %v1815 = vld [vmem:[%s1806 + $0x30] sm:$0xf]
      %v1816 = vld [vmem:[%s1806 + $0x34] sm:$0xf]
      %v1817 = vld [vmem:[%s1806 + $0x3c] sm:$0xf]
      %v1818 = vld [vmem:[%s1806 + $0x40] sm:$0xf]
      %v1819 = vld [vmem:[%s1806 + $0x48] sm:$0xf]
      %v1820 = vld [vmem:[%s1806 + $0x4c] sm:$0xf]
      %v1821 = vld [vmem:[%s1806 + $0x54] sm:$0xf]
      %v1822 = vld [vmem:[%s1806 + $0x58] sm:$0xf]
      %v1839 = vunpack.c.l.b16 %v1807
      %v1840 = vunpack.c.l.b16 %v1808
      %v1841 = vunpack.c.l.b16 %v1809
      %v1842 = vunpack.c.l.b16 %v1810
      %v1843 = vunpack.c.l.b16 %v1811
      %v1844 = vunpack.c.l.b16 %v1812
      %v1845 = vunpack.c.l.b16 %v1813
      %v1846 = vunpack.c.l.b16 %v1814
      %v1847 = vunpack.c.l.b16 %v1815
      %v1848 = vunpack.c.l.b16 %v1816
      %v1849 = vunpack.c.l.b16 %v1817
      %v1850 = vunpack.c.l.b16 %v1818
      %v1851 = vunpack.c.l.b16 %v1819
      %v1852 = vunpack.c.l.b16 %v1820
      %v1853 = vunpack.c.l.b16 %v1821
      %v1854 = vunpack.c.l.b16 %v1822
      %v1855 = vpack.c.b16 %v1840, %v1839
      %v1856 = vpack.c.b16 %v1842, %v1841
      %v1857 = vpack.c.b16 %v1844, %v1843
      %v1858 = vpack.c.b16 %v1846, %v1845
      %v1859 = vpack.c.b16 %v1848, %v1847
      %v1860 = vpack.c.b16 %v1850, %v1849
      %v1861 = vpack.c.b16 %v1852, %v1851
      %v1862 = vpack.c.b16 %v1854, %v1853
      %1871 = vst [vmem:[#allocation3 + $0x30] sm:$0xff] %v1855
      %1872 = vst [vmem:[#allocation3 + $0x78] sm:$0xff] %v1856
      %1873 = vst [vmem:[#allocation3 + $0xc0] sm:$0xff] %v1857
      %1874 = vst [vmem:[#allocation3 + $0x108] sm:$0xff] %v1858
      %1875 = vst [vmem:[#allocation3 + $0x150] sm:$0xff] %v1859
      %1876 = vst [vmem:[#allocation3 + $0x198] sm:$0xff] %v1860
      %1877 = vst [vmem:[#allocation3 + $0x1e0] sm:$0xff] %v1861
      %1878 = vst [vmem:[#allocation3 + $0x228] sm:$0xff] %v1862
      %v1879 = vld [vmem:[%s1806] sm:$0xf]
      %v1880 = vld [vmem:[%s1806 + $0x4] sm:$0xf]
      %v1881 = vld [vmem:[%s1806 + $0x8] sm:$0x1]
      %v1882 = vld [vmem:[%s1806 + $0xc] sm:$0xf]
      %v1883 = vld [vmem:[%s1806 + $0x10] sm:$0xf]
      %v1884 = vld [vmem:[%s1806 + $0x14] sm:$0x1]
      %v1885 = vld [vmem:[%s1806 + $0x18] sm:$0xf]
      %v1886 = vld [vmem:[%s1806 + $0x1c] sm:$0xf]
      %v1887 = vld [vmem:[%s1806 + $0x20] sm:$0x1]
      %v1888 = vld [vmem:[%s1806 + $0x24] sm:$0xf]
      %v1889 = vld [vmem:[%s1806 + $0x28] sm:$0xf]
      %v1890 = vld [vmem:[%s1806 + $0x2c] sm:$0x1]
      %v1891 = vld [vmem:[%s1806 + $0x30] sm:$0xf]
      %v1892 = vld [vmem:[%s1806 + $0x34] sm:$0xf]
      %v1893 = vld [vmem:[%s1806 + $0x38] sm:$0x1]
      %v1894 = vld [vmem:[%s1806 + $0x3c] sm:$0xf]
      %v1895 = vld [vmem:[%s1806 + $0x40] sm:$0xf]
      %v1896 = vld [vmem:[%s1806 + $0x44] sm:$0x1]
      %v1897 = vld [vmem:[%s1806 + $0x48] sm:$0xf]
      %v1898 = vld [vmem:[%s1806 + $0x4c] sm:$0xf]
      %v1899 = vld [vmem:[%s1806 + $0x50] sm:$0x1]
      %v1900 = vld [vmem:[%s1806 + $0x54] sm:$0xf]
      %v1901 = vld [vmem:[%s1806 + $0x58] sm:$0xf]
      %v1902 = vld [vmem:[%s1806 + $0x5c] sm:$0x1]
      %v1904 = vshrl.u32 %v1879, 16
      %v1906 = vrot.slane %v1904, 4
      %v1907 = vshll.u32 %v1879, 16
      %v1909 = vrot.slane %v1907, 5
      %v1910 = vor.u32 %v1906, %v1909
      %v1911 = vrot.slane %v1910, 4
      %v1913 = vshll.u32 %v1880, 16
      %v1915 = vrot.slane %v1913, 5
      %v1916 = vsel %vm954, %v1911, %v1915
      %v1917 = vshrl.u32 %v1880, 16
      %v1919 = vrot.slane %v1917, 4
      %v1920 = vor.u32 %v1919, %v1915
      %v1921 = vrot.slane %v1920, 4
      %v1923 = vshll.u32 %v1881, 16
      %v1925 = vrot.slane %v1923, 5
      %v1926 = vsel %vm954, %v1921, %v1925
      %v1928 = vshrl.u32 %v1882, 16
      %v1930 = vrot.slane %v1928, 4
      %v1931 = vshll.u32 %v1882, 16
      %v1933 = vrot.slane %v1931, 5
      %v1934 = vor.u32 %v1930, %v1933
      %v1935 = vrot.slane %v1934, 4
      %v1937 = vshll.u32 %v1883, 16
      %v1939 = vrot.slane %v1937, 5
      %v1940 = vsel %vm954, %v1935, %v1939
      %v1941 = vshrl.u32 %v1883, 16
      %v1943 = vrot.slane %v1941, 4
      %v1944 = vor.u32 %v1943, %v1939
      %v1945 = vrot.slane %v1944, 4
      %v1947 = vshll.u32 %v1884, 16
      %v1949 = vrot.slane %v1947, 5
      %v1950 = vsel %vm954, %v1945, %v1949
      %v1952 = vshrl.u32 %v1885, 16
      %v1954 = vrot.slane %v1952, 4
      %v1955 = vshll.u32 %v1885, 16
      %v1957 = vrot.slane %v1955, 5
      %v1958 = vor.u32 %v1954, %v1957
      %v1959 = vrot.slane %v1958, 4
      %v1961 = vshll.u32 %v1886, 16
      %v1963 = vrot.slane %v1961, 5
      %v1964 = vsel %vm954, %v1959, %v1963
      %v1965 = vshrl.u32 %v1886, 16
      %v1967 = vrot.slane %v1965, 4
      %v1968 = vor.u32 %v1967, %v1963
      %v1969 = vrot.slane %v1968, 4
      %v1971 = vshll.u32 %v1887, 16
      %v1973 = vrot.slane %v1971, 5
      %v1974 = vsel %vm954, %v1969, %v1973
      %v1976 = vshrl.u32 %v1888, 16
      %v1978 = vrot.slane %v1976, 4
      %v1979 = vshll.u32 %v1888, 16
      %v1981 = vrot.slane %v1979, 5
      %v1982 = vor.u32 %v1978, %v1981
      %v1983 = vrot.slane %v1982, 4
      %v1985 = vshll.u32 %v1889, 16
      %v1987 = vrot.slane %v1985, 5
      %v1988 = vsel %vm954, %v1983, %v1987
      %v1989 = vshrl.u32 %v1889, 16
      %v1991 = vrot.slane %v1989, 4
      %v1992 = vor.u32 %v1991, %v1987
      %v1993 = vrot.slane %v1992, 4
      %v1995 = vshll.u32 %v1890, 16
      %v1997 = vrot.slane %v1995, 5
      %v1998 = vsel %vm954, %v1993, %v1997
      %v2000 = vshrl.u32 %v1891, 16
      %v2002 = vrot.slane %v2000, 4
      %v2003 = vshll.u32 %v1891, 16
      %v2005 = vrot.slane %v2003, 5
      %v2006 = vor.u32 %v2002, %v2005
      %v2007 = vrot.slane %v2006, 4
      %v2009 = vshll.u32 %v1892, 16
      %v2011 = vrot.slane %v2009, 5
      %v2012 = vsel %vm954, %v2007, %v2011
      %v2013 = vshrl.u32 %v1892, 16
      %v2015 = vrot.slane %v2013, 4
      %v2016 = vor.u32 %v2015, %v2011
      %v2017 = vrot.slane %v2016, 4
      %v2019 = vshll.u32 %v1893, 16
      %v2021 = vrot.slane %v2019, 5
      %v2022 = vsel %vm954, %v2017, %v2021
      %v2024 = vshrl.u32 %v1894, 16
      %v2026 = vrot.slane %v2024, 4
      %v2027 = vshll.u32 %v1894, 16
      %v2029 = vrot.slane %v2027, 5
      %v2030 = vor.u32 %v2026, %v2029
      %v2031 = vrot.slane %v2030, 4
      %v2033 = vshll.u32 %v1895, 16
      %v2035 = vrot.slane %v2033, 5
      %v2036 = vsel %vm954, %v2031, %v2035
      %v2037 = vshrl.u32 %v1895, 16
      %v2039 = vrot.slane %v2037, 4
      %v2040 = vor.u32 %v2039, %v2035
      %v2041 = vrot.slane %v2040, 4
      %v2043 = vshll.u32 %v1896, 16
      %v2045 = vrot.slane %v2043, 5
      %v2046 = vsel %vm954, %v2041, %v2045
      %v2048 = vshrl.u32 %v1897, 16
      %v2050 = vrot.slane %v2048, 4
      %v2051 = vshll.u32 %v1897, 16
      %v2053 = vrot.slane %v2051, 5
      %v2054 = vor.u32 %v2050, %v2053
      %v2055 = vrot.slane %v2054, 4
      %v2057 = vshll.u32 %v1898, 16
      %v2059 = vrot.slane %v2057, 5
      %v2060 = vsel %vm954, %v2055, %v2059
      %v2061 = vshrl.u32 %v1898, 16
      %v2063 = vrot.slane %v2061, 4
      %v2064 = vor.u32 %v2063, %v2059
      %v2065 = vrot.slane %v2064, 4
      %v2067 = vshll.u32 %v1899, 16
      %v2069 = vrot.slane %v2067, 5
      %v2070 = vsel %vm954, %v2065, %v2069
      %v2072 = vshrl.u32 %v1900, 16
      %v2074 = vrot.slane %v2072, 4
      %v2075 = vshll.u32 %v1900, 16
      %v2077 = vrot.slane %v2075, 5
      %v2078 = vor.u32 %v2074, %v2077
      %v2079 = vrot.slane %v2078, 4
      %v2081 = vshll.u32 %v1901, 16
      %v2083 = vrot.slane %v2081, 5
      %v2084 = vsel %vm954, %v2079, %v2083
      %v2085 = vshrl.u32 %v1901, 16
      %v2087 = vrot.slane %v2085, 4
      %v2088 = vor.u32 %v2087, %v2083
      %v2089 = vrot.slane %v2088, 4
      %v2091 = vshll.u32 %v1902, 16
      %v2093 = vrot.slane %v2091, 5
      %v2094 = vsel %vm954, %v2089, %v2093
      %v2095 = vunpack.c.l.b16 %v1916
      %v2096 = vunpack.c.l.b16 %v1926
      %v2097 = vunpack.c.l.b16 %v1940
      %v2098 = vunpack.c.l.b16 %v1950
      %v2099 = vunpack.c.l.b16 %v1964
      %v2100 = vunpack.c.l.b16 %v1974
      %v2101 = vunpack.c.l.b16 %v1988
      %v2102 = vunpack.c.l.b16 %v1998
      %v2103 = vunpack.c.l.b16 %v2012
      %v2104 = vunpack.c.l.b16 %v2022
      %v2105 = vunpack.c.l.b16 %v2036
      %v2106 = vunpack.c.l.b16 %v2046
      %v2107 = vunpack.c.l.b16 %v2060
      %v2108 = vunpack.c.l.b16 %v2070
      %v2109 = vunpack.c.l.b16 %v2084
      %v2110 = vunpack.c.l.b16 %v2094
      %v2111 = vpack.c.b16 %v2096, %v2095
      %v2112 = vpack.c.b16 %v2098, %v2097
      %v2113 = vpack.c.b16 %v2100, %v2099
      %v2114 = vpack.c.b16 %v2102, %v2101
      %v2115 = vpack.c.b16 %v2104, %v2103
      %v2116 = vpack.c.b16 %v2106, %v2105
      %v2117 = vpack.c.b16 %v2108, %v2107
      %v2118 = vpack.c.b16 %v2110, %v2109
      %2127 = vst [vmem:[#allocation3 + $0x38] sm:$0xff] %v2111
      %2128 = vst [vmem:[#allocation3 + $0x80] sm:$0xff] %v2112
      %2129 = vst [vmem:[#allocation3 + $0xc8] sm:$0xff] %v2113
      %2130 = vst [vmem:[#allocation3 + $0x110] sm:$0xff] %v2114
      %2131 = vst [vmem:[#allocation3 + $0x158] sm:$0xff] %v2115
      %2132 = vst [vmem:[#allocation3 + $0x1a0] sm:$0xff] %v2116
      %2133 = vst [vmem:[#allocation3 + $0x1e8] sm:$0xff] %v2117
      %2134 = vst [vmem:[#allocation3 + $0x230] sm:$0xff] %v2118
      %v2135 = vld [vmem:[%s1806] sm:$0xe]
      %v2136 = vld [vmem:[%s1806 + $0x4] sm:$0xf]
      %v2137 = vld [vmem:[%s1806 + $0x8] sm:$0x1]
      %v2138 = vld [vmem:[%s1806 + $0xc] sm:$0xe]
      %v2139 = vld [vmem:[%s1806 + $0x10] sm:$0xf]
      %v2140 = vld [vmem:[%s1806 + $0x14] sm:$0x1]
      %v2141 = vld [vmem:[%s1806 + $0x18] sm:$0xe]
      %v2142 = vld [vmem:[%s1806 + $0x1c] sm:$0xf]
      %v2143 = vld [vmem:[%s1806 + $0x20] sm:$0x1]
      %v2144 = vld [vmem:[%s1806 + $0x24] sm:$0xe]
      %v2145 = vld [vmem:[%s1806 + $0x28] sm:$0xf]
      %v2146 = vld [vmem:[%s1806 + $0x2c] sm:$0x1]
      %v2147 = vld [vmem:[%s1806 + $0x30] sm:$0xe]
      %v2148 = vld [vmem:[%s1806 + $0x34] sm:$0xf]
      %v2149 = vld [vmem:[%s1806 + $0x38] sm:$0x1]
      %v2150 = vld [vmem:[%s1806 + $0x3c] sm:$0xe]
      %v2151 = vld [vmem:[%s1806 + $0x40] sm:$0xf]
      %v2152 = vld [vmem:[%s1806 + $0x44] sm:$0x1]
      %v2153 = vld [vmem:[%s1806 + $0x48] sm:$0xe]
      %v2154 = vld [vmem:[%s1806 + $0x4c] sm:$0xf]
      %v2155 = vld [vmem:[%s1806 + $0x50] sm:$0x1]
      %v2156 = vld [vmem:[%s1806 + $0x54] sm:$0xe]
      %v2157 = vld [vmem:[%s1806 + $0x58] sm:$0xf]
      %v2158 = vld [vmem:[%s1806 + $0x5c] sm:$0x1]
      %v2183 = vrot.slane %v2135, 5
      %v2184 = vrot.slane %v2183, 4
      %v2185 = vrot.slane %v2136, 5
      %v2186 = vsel %vm1237, %v2184, %v2185
      %v2187 = vrot.slane %v2185, 4
      %v2188 = vrot.slane %v2137, 5
      %v2189 = vsel %vm1237, %v2187, %v2188
      %v2190 = vrot.slane %v2138, 5
      %v2191 = vrot.slane %v2190, 4
      %v2192 = vrot.slane %v2139, 5
      %v2193 = vsel %vm1237, %v2191, %v2192
      %v2194 = vrot.slane %v2192, 4
      %v2195 = vrot.slane %v2140, 5
      %v2196 = vsel %vm1237, %v2194, %v2195
      %v2197 = vrot.slane %v2141, 5
      %v2198 = vrot.slane %v2197, 4
      %v2199 = vrot.slane %v2142, 5
      %v2200 = vsel %vm1237, %v2198, %v2199
      %v2201 = vrot.slane %v2199, 4
      %v2202 = vrot.slane %v2143, 5
      %v2203 = vsel %vm1237, %v2201, %v2202
      %v2204 = vrot.slane %v2144, 5
      %v2205 = vrot.slane %v2204, 4
      %v2206 = vrot.slane %v2145, 5
      %v2207 = vsel %vm1237, %v2205, %v2206
      %v2208 = vrot.slane %v2206, 4
      %v2209 = vrot.slane %v2146, 5
      %v2210 = vsel %vm1237, %v2208, %v2209
      %v2211 = vrot.slane %v2147, 5
      %v2212 = vrot.slane %v2211, 4
      %v2213 = vrot.slane %v2148, 5
      %v2214 = vsel %vm1237, %v2212, %v2213
      %v2215 = vrot.slane %v2213, 4
      %v2216 = vrot.slane %v2149, 5
      %v2217 = vsel %vm1237, %v2215, %v2216
      %v2218 = vrot.slane %v2150, 5
      %v2219 = vrot.slane %v2218, 4
      %v2220 = vrot.slane %v2151, 5
      %v2221 = vsel %vm1237, %v2219, %v2220
      %v2222 = vrot.slane %v2220, 4
      %v2223 = vrot.slane %v2152, 5
      %v2224 = vsel %vm1237, %v2222, %v2223
      %v2225 = vrot.slane %v2153, 5
      %v2226 = vrot.slane %v2225, 4
      %v2227 = vrot.slane %v2154, 5
      %v2228 = vsel %vm1237, %v2226, %v2227
      %v2229 = vrot.slane %v2227, 4
      %v2230 = vrot.slane %v2155, 5
      %v2231 = vsel %vm1237, %v2229, %v2230
      %v2232 = vrot.slane %v2156, 5
      %v2233 = vrot.slane %v2232, 4
      %v2234 = vrot.slane %v2157, 5
      %v2235 = vsel %vm1237, %v2233, %v2234
      %v2236 = vrot.slane %v2234, 4
      %v2237 = vrot.slane %v2158, 5
      %v2238 = vsel %vm1237, %v2236, %v2237
      %v2239 = vunpack.c.l.b16 %v2186
      %v2240 = vunpack.c.l.b16 %v2189
      %v2241 = vunpack.c.l.b16 %v2193
      %v2242 = vunpack.c.l.b16 %v2196
      %v2243 = vunpack.c.l.b16 %v2200
      %v2244 = vunpack.c.l.b16 %v2203
      %v2245 = vunpack.c.l.b16 %v2207
      %v2246 = vunpack.c.l.b16 %v2210
      %v2247 = vunpack.c.l.b16 %v2214
      %v2248 = vunpack.c.l.b16 %v2217
      %v2249 = vunpack.c.l.b16 %v2221
      %v2250 = vunpack.c.l.b16 %v2224
      %v2251 = vunpack.c.l.b16 %v2228
      %v2252 = vunpack.c.l.b16 %v2231
      %v2253 = vunpack.c.l.b16 %v2235
      %v2254 = vunpack.c.l.b16 %v2238
      %v2255 = vpack.c.b16 %v2240, %v2239
      %v2256 = vpack.c.b16 %v2242, %v2241
      %v2257 = vpack.c.b16 %v2244, %v2243
      %v2258 = vpack.c.b16 %v2246, %v2245
      %v2259 = vpack.c.b16 %v2248, %v2247
      %v2260 = vpack.c.b16 %v2250, %v2249
      %v2261 = vpack.c.b16 %v2252, %v2251
      %v2262 = vpack.c.b16 %v2254, %v2253
      %2271 = vst [vmem:[#allocation3 + $0x40] sm:$0xff] %v2255
      %2272 = vst [vmem:[#allocation3 + $0x88] sm:$0xff] %v2256
      %2273 = vst [vmem:[#allocation3 + $0xd0] sm:$0xff] %v2257
      %2274 = vst [vmem:[#allocation3 + $0x118] sm:$0xff] %v2258
      %2275 = vst [vmem:[#allocation3 + $0x160] sm:$0xff] %v2259
      %2276 = vst [vmem:[#allocation3 + $0x1a8] sm:$0xff] %v2260
      %2277 = vst [vmem:[#allocation3 + $0x1f0] sm:$0xff] %v2261
      %2278 = vst [vmem:[#allocation3 + $0x238] sm:$0xff] %v2262
      %v2279 = vld [vmem:[#allocation3] sm:$0xff]
      %v2280 = vld [vmem:[#allocation3 + $0x8] sm:$0xff]
      %v2281 = vld [vmem:[#allocation3 + $0x10] sm:$0xff]
      %v2282 = vld [vmem:[#allocation3 + $0x18] sm:$0xff]
      %v2283 = vld [vmem:[#allocation3 + $0x20] sm:$0xff]
      %v2284 = vld [vmem:[#allocation3 + $0x28] sm:$0xff]
      %v2285 = vld [vmem:[#allocation3 + $0x30] sm:$0xff]
      %v2286 = vld [vmem:[#allocation3 + $0x38] sm:$0xff]
      %v2287 = vld [vmem:[#allocation3 + $0x40] sm:$0xff]
      %v2288 = vld [vmem:[#allocation3 + $0x48] sm:$0xff]
      %v2289 = vld [vmem:[#allocation3 + $0x50] sm:$0xff]
      %v2290 = vld [vmem:[#allocation3 + $0x58] sm:$0xff]
      %v2291 = vld [vmem:[#allocation3 + $0x60] sm:$0xff]
      %v2292 = vld [vmem:[#allocation3 + $0x68] sm:$0xff]
      %v2293 = vld [vmem:[#allocation3 + $0x70] sm:$0xff]
      %v2294 = vld [vmem:[#allocation3 + $0x78] sm:$0xff]
      %v2295 = vld [vmem:[#allocation3 + $0x80] sm:$0xff]
      %v2296 = vld [vmem:[#allocation3 + $0x88] sm:$0xff]
      %v2297 = vld [vmem:[#allocation3 + $0x90] sm:$0xff]
      %v2298 = vld [vmem:[#allocation3 + $0x98] sm:$0xff]
      %v2299 = vld [vmem:[#allocation3 + $0xa0] sm:$0xff]
      %v2300 = vld [vmem:[#allocation3 + $0xa8] sm:$0xff]
      %v2301 = vld [vmem:[#allocation3 + $0xb0] sm:$0xff]
      %v2302 = vld [vmem:[#allocation3 + $0xb8] sm:$0xff]
      %v2303 = vld [vmem:[#allocation3 + $0xc0] sm:$0xff]
      %v2304 = vld [vmem:[#allocation3 + $0xc8] sm:$0xff]
      %v2305 = vld [vmem:[#allocation3 + $0xd0] sm:$0xff]
      %v2306 = vld [vmem:[#allocation3 + $0xd8] sm:$0xff]
      %v2307 = vld [vmem:[#allocation3 + $0xe0] sm:$0xff]
      %v2308 = vld [vmem:[#allocation3 + $0xe8] sm:$0xff]
      %v2309 = vld [vmem:[#allocation3 + $0xf0] sm:$0xff]
      %v2310 = vld [vmem:[#allocation3 + $0xf8] sm:$0xff]
      %v2311 = vld [vmem:[#allocation3 + $0x100] sm:$0xff]
      %v2312 = vld [vmem:[#allocation3 + $0x108] sm:$0xff]
      %v2313 = vld [vmem:[#allocation3 + $0x110] sm:$0xff]
      %v2314 = vld [vmem:[#allocation3 + $0x118] sm:$0xff]
      %v2315 = vld [vmem:[#allocation3 + $0x120] sm:$0xff]
      %v2316 = vld [vmem:[#allocation3 + $0x128] sm:$0xff]
      %v2317 = vld [vmem:[#allocation3 + $0x130] sm:$0xff]
      %v2318 = vld [vmem:[#allocation3 + $0x138] sm:$0xff]
      %v2319 = vld [vmem:[#allocation3 + $0x140] sm:$0xff]
      %v2320 = vld [vmem:[#allocation3 + $0x148] sm:$0xff]
      %v2321 = vld [vmem:[#allocation3 + $0x150] sm:$0xff]
      %v2322 = vld [vmem:[#allocation3 + $0x158] sm:$0xff]
      %v2323 = vld [vmem:[#allocation3 + $0x160] sm:$0xff]
      %v2324 = vld [vmem:[#allocation3 + $0x168] sm:$0xff]
      %v2325 = vld [vmem:[#allocation3 + $0x170] sm:$0xff]
      %v2326 = vld [vmem:[#allocation3 + $0x178] sm:$0xff]
      %v2327 = vld [vmem:[#allocation3 + $0x180] sm:$0xff]
      %v2328 = vld [vmem:[#allocation3 + $0x188] sm:$0xff]
      %v2329 = vld [vmem:[#allocation3 + $0x190] sm:$0xff]
      %v2330 = vld [vmem:[#allocation3 + $0x198] sm:$0xff]
      %v2331 = vld [vmem:[#allocation3 + $0x1a0] sm:$0xff]
      %v2332 = vld [vmem:[#allocation3 + $0x1a8] sm:$0xff]
      %v2333 = vld [vmem:[#allocation3 + $0x1b0] sm:$0xff]
      %v2334 = vld [vmem:[#allocation3 + $0x1b8] sm:$0xff]
      %v2335 = vld [vmem:[#allocation3 + $0x1c0] sm:$0xff]
      %v2336 = vld [vmem:[#allocation3 + $0x1c8] sm:$0xff]
      %v2337 = vld [vmem:[#allocation3 + $0x1d0] sm:$0xff]
      %v2338 = vld [vmem:[#allocation3 + $0x1d8] sm:$0xff]
      %v2339 = vld [vmem:[#allocation3 + $0x1e0] sm:$0xff]
      %v2340 = vld [vmem:[#allocation3 + $0x1e8] sm:$0xff]
      %v2341 = vld [vmem:[#allocation3 + $0x1f0] sm:$0xff]
      %v2342 = vld [vmem:[#allocation3 + $0x1f8] sm:$0xff]
      %v2343 = vld [vmem:[#allocation3 + $0x200] sm:$0xff]
      %v2344 = vld [vmem:[#allocation3 + $0x208] sm:$0xff]
      %v2345 = vld [vmem:[#allocation3 + $0x210] sm:$0xff]
      %v2346 = vld [vmem:[#allocation3 + $0x218] sm:$0xff]
      %v2347 = vld [vmem:[#allocation3 + $0x220] sm:$0xff]
      %v2348 = vld [vmem:[#allocation3 + $0x228] sm:$0xff]
      %v2349 = vld [vmem:[#allocation3 + $0x230] sm:$0xff]
      %v2350 = vld [vmem:[#allocation3 + $0x238] sm:$0xff]
      %v2351 = vld [vmem:[%s3] sm:$0xf]
      %v2352 = vld [vmem:[%s3 + $0x4] sm:$0xf]
      %v2353 = vld [vmem:[%s3 + $0x8] sm:$0xf]
      %v2354 = vld [vmem:[%s3 + $0xc] sm:$0xf]
      %v2355 = vld [vmem:[%s3 + $0x10] sm:$0xf]
      %v2356 = vld [vmem:[%s3 + $0x14] sm:$0xf]
      %v2357 = vld [vmem:[%s3 + $0x18] sm:$0xf]
      %v2358 = vld [vmem:[%s3 + $0x1c] sm:$0xf]
      %v2359 = vld [vmem:[%s3 + $0x20] sm:$0xf]
      %v2360 = vld [vmem:[%s3 + $0x24] sm:$0xf]
      %v2361 = vld [vmem:[%s3 + $0x28] sm:$0xf]
      %v2362 = vld [vmem:[%s3 + $0x2c] sm:$0xf]
      %v2363 = vld [vmem:[%s3 + $0x30] sm:$0xf]
      %v2364 = vld [vmem:[%s3 + $0x34] sm:$0xf]
      %v2365 = vld [vmem:[%s3 + $0x38] sm:$0xf]
      %v2366 = vld [vmem:[%s3 + $0x3c] sm:$0xf]
      %v2367 = vld [vmem:[%s3 + $0x40] sm:$0xf]
      %v2368 = vld [vmem:[%s3 + $0x44] sm:$0xf]
      %v2369 = vld [vmem:[%s3 + $0x48] sm:$0xf]
      %v2370 = vld [vmem:[%s3 + $0x4c] sm:$0xf]
      %v2371 = vld [vmem:[%s3 + $0x50] sm:$0xf]
      %v2372 = vld [vmem:[%s3 + $0x54] sm:$0xf]
      %v2373 = vld [vmem:[%s3 + $0x58] sm:$0xf]
      %v2374 = vld [vmem:[%s3 + $0x5c] sm:$0xf]
      %v2375 = vld [vmem:[%s3 + $0x60] sm:$0xf]
      %v2376 = vld [vmem:[%s3 + $0x64] sm:$0xf]
      %v2377 = vld [vmem:[%s3 + $0x68] sm:$0xf]
      %v2378 = vld [vmem:[%s3 + $0x6c] sm:$0xf]
      %v2379 = vld [vmem:[%s3 + $0x70] sm:$0xf]
      %v2380 = vld [vmem:[%s3 + $0x74] sm:$0xf]
      %v2381 = vld [vmem:[%s3 + $0x78] sm:$0xf]
      %v2382 = vld [vmem:[%s3 + $0x7c] sm:$0xf]
      %v2383 = vld [vmem:[%s3 + $0x80] sm:$0xf]
      %v2384 = vld [vmem:[%s3 + $0x84] sm:$0xf]
      %v2385 = vld [vmem:[%s3 + $0x88] sm:$0xf]
      %v2386 = vld [vmem:[%s3 + $0x8c] sm:$0xf]
      %v2387 = vld [vmem:[%s3 + $0x90] sm:$0xf]
      %v2388 = vld [vmem:[%s3 + $0x94] sm:$0xf]
      %v2389 = vld [vmem:[%s3 + $0x98] sm:$0xf]
      %v2390 = vld [vmem:[%s3 + $0x9c] sm:$0xf]
      %v2391 = vld [vmem:[%s3 + $0xa0] sm:$0xf]
      %v2392 = vld [vmem:[%s3 + $0xa4] sm:$0xf]
      %v2393 = vld [vmem:[%s3 + $0xa8] sm:$0xf]
      %v2394 = vld [vmem:[%s3 + $0xac] sm:$0xf]
      %v2395 = vld [vmem:[%s3 + $0xb0] sm:$0xf]
      %v2396 = vld [vmem:[%s3 + $0xb4] sm:$0xf]
      %v2397 = vld [vmem:[%s3 + $0xb8] sm:$0xf]
      %v2398 = vld [vmem:[%s3 + $0xbc] sm:$0xf]
      %v2399 = vld [vmem:[%s3 + $0xc0] sm:$0xf]
      %v2400 = vld [vmem:[%s3 + $0xc4] sm:$0xf]
      %v2401 = vld [vmem:[%s3 + $0xc8] sm:$0xf]
      %v2402 = vld [vmem:[%s3 + $0xcc] sm:$0xf]
      %v2403 = vld [vmem:[%s3 + $0xd0] sm:$0xf]
      %v2404 = vld [vmem:[%s3 + $0xd4] sm:$0xf]
      %v2405 = vld [vmem:[%s3 + $0xd8] sm:$0xf]
      %v2406 = vld [vmem:[%s3 + $0xdc] sm:$0xf]
      %v2407 = vld [vmem:[%s3 + $0xe0] sm:$0xf]
      %v2408 = vld [vmem:[%s3 + $0xe4] sm:$0xf]
      %v2409 = vld [vmem:[%s3 + $0xe8] sm:$0xf]
      %v2410 = vld [vmem:[%s3 + $0xec] sm:$0xf]
      %v2411 = vld [vmem:[%s3 + $0xf0] sm:$0xf]
      %v2412 = vld [vmem:[%s3 + $0xf4] sm:$0xf]
      %v2413 = vld [vmem:[%s3 + $0xf8] sm:$0xf]
      %v2414 = vld [vmem:[%s3 + $0xfc] sm:$0xf]
      %v2415 = vld [vmem:[%s3 + $0x100] sm:$0xf]
      %v2416 = vld [vmem:[%s3 + $0x104] sm:$0xf]
      %v2417 = vld [vmem:[%s3 + $0x108] sm:$0xf]
      %v2418 = vld [vmem:[%s3 + $0x10c] sm:$0xf]
      %v2419 = vld [vmem:[%s3 + $0x110] sm:$0xf]
      %v2420 = vld [vmem:[%s3 + $0x114] sm:$0xf]
      %v2421 = vld [vmem:[%s3 + $0x118] sm:$0xf]
      %v2422 = vld [vmem:[%s3 + $0x11c] sm:$0xf]
      %v2423 = vld [vmem:[%s3 + $0x120] sm:$0xf]
      %v2424 = vld [vmem:[%s3 + $0x124] sm:$0xf]
      %v2425 = vld [vmem:[%s3 + $0x128] sm:$0xf]
      %v2426 = vld [vmem:[%s3 + $0x12c] sm:$0xf]
      %v2427 = vld [vmem:[%s3 + $0x130] sm:$0xf]
      %v2428 = vld [vmem:[%s3 + $0x134] sm:$0xf]
      %v2429 = vld [vmem:[%s3 + $0x138] sm:$0xf]
      %v2430 = vld [vmem:[%s3 + $0x13c] sm:$0xf]
      %v2431 = vld [vmem:[%s3 + $0x140] sm:$0xf]
      %v2432 = vld [vmem:[%s3 + $0x144] sm:$0xf]
      %v2433 = vld [vmem:[%s3 + $0x148] sm:$0xf]
      %v2434 = vld [vmem:[%s3 + $0x14c] sm:$0xf]
      %v2435 = vld [vmem:[%s3 + $0x150] sm:$0xf]
      %v2436 = vld [vmem:[%s3 + $0x154] sm:$0xf]
      %v2437 = vld [vmem:[%s3 + $0x158] sm:$0xf]
      %v2438 = vld [vmem:[%s3 + $0x15c] sm:$0xf]
      %v2439 = vld [vmem:[%s3 + $0x160] sm:$0xf]
      %v2440 = vld [vmem:[%s3 + $0x164] sm:$0xf]
      %v2441 = vld [vmem:[%s3 + $0x168] sm:$0xf]
      %v2442 = vld [vmem:[%s3 + $0x16c] sm:$0xf]
      %v2443 = vld [vmem:[%s3 + $0x170] sm:$0xf]
      %v2444 = vld [vmem:[%s3 + $0x174] sm:$0xf]
      %v2445 = vld [vmem:[%s3 + $0x178] sm:$0xf]
      %v2446 = vld [vmem:[%s3 + $0x17c] sm:$0xf]
      %v2447 = vld [vmem:[%s3 + $0x180] sm:$0xf]
      %v2448 = vld [vmem:[%s3 + $0x184] sm:$0xf]
      %v2449 = vld [vmem:[%s3 + $0x188] sm:$0xf]
      %v2450 = vld [vmem:[%s3 + $0x18c] sm:$0xf]
      %v2451 = vld [vmem:[%s3 + $0x190] sm:$0xf]
      %v2452 = vld [vmem:[%s3 + $0x194] sm:$0xf]
      %v2453 = vld [vmem:[%s3 + $0x198] sm:$0xf]
      %v2454 = vld [vmem:[%s3 + $0x19c] sm:$0xf]
      %v2455 = vld [vmem:[%s3 + $0x1a0] sm:$0xf]
      %v2456 = vld [vmem:[%s3 + $0x1a4] sm:$0xf]
      %v2457 = vld [vmem:[%s3 + $0x1a8] sm:$0xf]
      %v2458 = vld [vmem:[%s3 + $0x1ac] sm:$0xf]
      %v2459 = vld [vmem:[%s3 + $0x1b0] sm:$0xf]
      %v2460 = vld [vmem:[%s3 + $0x1b4] sm:$0xf]
      %v2461 = vld [vmem:[%s3 + $0x1b8] sm:$0xf]
      %v2462 = vld [vmem:[%s3 + $0x1bc] sm:$0xf]
      %v2463 = vld [vmem:[%s3 + $0x1c0] sm:$0xf]
      %v2464 = vld [vmem:[%s3 + $0x1c4] sm:$0xf]
      %v2465 = vld [vmem:[%s3 + $0x1c8] sm:$0xf]
      %v2466 = vld [vmem:[%s3 + $0x1cc] sm:$0xf]
      %v2467 = vld [vmem:[%s3 + $0x1d0] sm:$0xf]
      %v2468 = vld [vmem:[%s3 + $0x1d4] sm:$0xf]
      %v2469 = vld [vmem:[%s3 + $0x1d8] sm:$0xf]
      %v2470 = vld [vmem:[%s3 + $0x1dc] sm:$0xf]
      %v2471 = vld [vmem:[%s3 + $0x1e0] sm:$0xf]
      %v2472 = vld [vmem:[%s3 + $0x1e4] sm:$0xf]
      %v2473 = vld [vmem:[%s3 + $0x1e8] sm:$0xf]
      %v2474 = vld [vmem:[%s3 + $0x1ec] sm:$0xf]
      %v2475 = vld [vmem:[%s3 + $0x1f0] sm:$0xf]
      %v2476 = vld [vmem:[%s3 + $0x1f4] sm:$0xf]
      %v2477 = vld [vmem:[%s3 + $0x1f8] sm:$0xf]
      %v2478 = vld [vmem:[%s3 + $0x1fc] sm:$0xf]
      %v2479 = vld [vmem:[%s3 + $0x200] sm:$0xf]
      %v2480 = vld [vmem:[%s3 + $0x204] sm:$0xf]
      %v2481 = vld [vmem:[%s3 + $0x208] sm:$0xf]
      %v2482 = vld [vmem:[%s3 + $0x20c] sm:$0xf]
      %v2483 = vld [vmem:[%s3 + $0x210] sm:$0xf]
      %v2484 = vld [vmem:[%s3 + $0x214] sm:$0xf]
      %v2485 = vld [vmem:[%s3 + $0x218] sm:$0xf]
      %v2486 = vld [vmem:[%s3 + $0x21c] sm:$0xf]
      %v2487 = vld [vmem:[%s3 + $0x220] sm:$0xf]
      %v2488 = vld [vmem:[%s3 + $0x224] sm:$0xf]
      %v2489 = vld [vmem:[%s3 + $0x228] sm:$0xf]
      %v2490 = vld [vmem:[%s3 + $0x22c] sm:$0xf]
      %v2491 = vld [vmem:[%s3 + $0x230] sm:$0xf]
      %v2492 = vld [vmem:[%s3 + $0x234] sm:$0xf]
      %v2493 = vld [vmem:[%s3 + $0x238] sm:$0xf]
      %v2494 = vld [vmem:[%s3 + $0x23c] sm:$0xf]
      %v2639 = vunpack.c.l.b16 %v2351
      %v2640 = vunpack.c.l.b16 %v2352
      %v2641 = vunpack.c.l.b16 %v2353
      %v2642 = vunpack.c.l.b16 %v2354
      %v2643 = vunpack.c.l.b16 %v2355
      %v2644 = vunpack.c.l.b16 %v2356
      %v2645 = vunpack.c.l.b16 %v2357
      %v2646 = vunpack.c.l.b16 %v2358
      %v2647 = vunpack.c.l.b16 %v2359
      %v2648 = vunpack.c.l.b16 %v2360
      %v2649 = vunpack.c.l.b16 %v2361
      %v2650 = vunpack.c.l.b16 %v2362
      %v2651 = vunpack.c.l.b16 %v2363
      %v2652 = vunpack.c.l.b16 %v2364
      %v2653 = vunpack.c.l.b16 %v2365
      %v2654 = vunpack.c.l.b16 %v2366
      %v2655 = vunpack.c.l.b16 %v2367
      %v2656 = vunpack.c.l.b16 %v2368
      %v2657 = vunpack.c.l.b16 %v2369
      %v2658 = vunpack.c.l.b16 %v2370
      %v2659 = vunpack.c.l.b16 %v2371
      %v2660 = vunpack.c.l.b16 %v2372
      %v2661 = vunpack.c.l.b16 %v2373
      %v2662 = vunpack.c.l.b16 %v2374
      %v2663 = vunpack.c.l.b16 %v2375
      %v2664 = vunpack.c.l.b16 %v2376
      %v2665 = vunpack.c.l.b16 %v2377
      %v2666 = vunpack.c.l.b16 %v2378
      %v2667 = vunpack.c.l.b16 %v2379
      %v2668 = vunpack.c.l.b16 %v2380
      %v2669 = vunpack.c.l.b16 %v2381
      %v2670 = vunpack.c.l.b16 %v2382
      %v2671 = vunpack.c.l.b16 %v2383
      %v2672 = vunpack.c.l.b16 %v2384
      %v2673 = vunpack.c.l.b16 %v2385
      %v2674 = vunpack.c.l.b16 %v2386
      %v2675 = vunpack.c.l.b16 %v2387
      %v2676 = vunpack.c.l.b16 %v2388
      %v2677 = vunpack.c.l.b16 %v2389
      %v2678 = vunpack.c.l.b16 %v2390
      %v2679 = vunpack.c.l.b16 %v2391
      %v2680 = vunpack.c.l.b16 %v2392
      %v2681 = vunpack.c.l.b16 %v2393
      %v2682 = vunpack.c.l.b16 %v2394
      %v2683 = vunpack.c.l.b16 %v2395
      %v2684 = vunpack.c.l.b16 %v2396
      %v2685 = vunpack.c.l.b16 %v2397
      %v2686 = vunpack.c.l.b16 %v2398
      %v2687 = vunpack.c.l.b16 %v2399
      %v2688 = vunpack.c.l.b16 %v2400
      %v2689 = vunpack.c.l.b16 %v2401
      %v2690 = vunpack.c.l.b16 %v2402
      %v2691 = vunpack.c.l.b16 %v2403
      %v2692 = vunpack.c.l.b16 %v2404
      %v2693 = vunpack.c.l.b16 %v2405
      %v2694 = vunpack.c.l.b16 %v2406
      %v2695 = vunpack.c.l.b16 %v2407
      %v2696 = vunpack.c.l.b16 %v2408
      %v2697 = vunpack.c.l.b16 %v2409
      %v2698 = vunpack.c.l.b16 %v2410
      %v2699 = vunpack.c.l.b16 %v2411
      %v2700 = vunpack.c.l.b16 %v2412
      %v2701 = vunpack.c.l.b16 %v2413
      %v2702 = vunpack.c.l.b16 %v2414
      %v2703 = vunpack.c.l.b16 %v2415
      %v2704 = vunpack.c.l.b16 %v2416
      %v2705 = vunpack.c.l.b16 %v2417
      %v2706 = vunpack.c.l.b16 %v2418
      %v2707 = vunpack.c.l.b16 %v2419
      %v2708 = vunpack.c.l.b16 %v2420
      %v2709 = vunpack.c.l.b16 %v2421
      %v2710 = vunpack.c.l.b16 %v2422
      %v2711 = vunpack.c.l.b16 %v2423
      %v2712 = vunpack.c.l.b16 %v2424
      %v2713 = vunpack.c.l.b16 %v2425
      %v2714 = vunpack.c.l.b16 %v2426
      %v2715 = vunpack.c.l.b16 %v2427
      %v2716 = vunpack.c.l.b16 %v2428
      %v2717 = vunpack.c.l.b16 %v2429
      %v2718 = vunpack.c.l.b16 %v2430
      %v2719 = vunpack.c.l.b16 %v2431
      %v2720 = vunpack.c.l.b16 %v2432
      %v2721 = vunpack.c.l.b16 %v2433
      %v2722 = vunpack.c.l.b16 %v2434
      %v2723 = vunpack.c.l.b16 %v2435
      %v2724 = vunpack.c.l.b16 %v2436
      %v2725 = vunpack.c.l.b16 %v2437
      %v2726 = vunpack.c.l.b16 %v2438
      %v2727 = vunpack.c.l.b16 %v2439
      %v2728 = vunpack.c.l.b16 %v2440
      %v2729 = vunpack.c.l.b16 %v2441
      %v2730 = vunpack.c.l.b16 %v2442
      %v2731 = vunpack.c.l.b16 %v2443
      %v2732 = vunpack.c.l.b16 %v2444
      %v2733 = vunpack.c.l.b16 %v2445
      %v2734 = vunpack.c.l.b16 %v2446
      %v2735 = vunpack.c.l.b16 %v2447
      %v2736 = vunpack.c.l.b16 %v2448
      %v2737 = vunpack.c.l.b16 %v2449
      %v2738 = vunpack.c.l.b16 %v2450
      %v2739 = vunpack.c.l.b16 %v2451
      %v2740 = vunpack.c.l.b16 %v2452
      %v2741 = vunpack.c.l.b16 %v2453
      %v2742 = vunpack.c.l.b16 %v2454
      %v2743 = vunpack.c.l.b16 %v2455
      %v2744 = vunpack.c.l.b16 %v2456
      %v2745 = vunpack.c.l.b16 %v2457
      %v2746 = vunpack.c.l.b16 %v2458
      %v2747 = vunpack.c.l.b16 %v2459
      %v2748 = vunpack.c.l.b16 %v2460
      %v2749 = vunpack.c.l.b16 %v2461
      %v2750 = vunpack.c.l.b16 %v2462
      %v2751 = vunpack.c.l.b16 %v2463
      %v2752 = vunpack.c.l.b16 %v2464
      %v2753 = vunpack.c.l.b16 %v2465
      %v2754 = vunpack.c.l.b16 %v2466
      %v2755 = vunpack.c.l.b16 %v2467
      %v2756 = vunpack.c.l.b16 %v2468
      %v2757 = vunpack.c.l.b16 %v2469
      %v2758 = vunpack.c.l.b16 %v2470
      %v2759 = vunpack.c.l.b16 %v2471
      %v2760 = vunpack.c.l.b16 %v2472
      %v2761 = vunpack.c.l.b16 %v2473
      %v2762 = vunpack.c.l.b16 %v2474
      %v2763 = vunpack.c.l.b16 %v2475
      %v2764 = vunpack.c.l.b16 %v2476
      %v2765 = vunpack.c.l.b16 %v2477
      %v2766 = vunpack.c.l.b16 %v2478
      %v2767 = vunpack.c.l.b16 %v2479
      %v2768 = vunpack.c.l.b16 %v2480
      %v2769 = vunpack.c.l.b16 %v2481
      %v2770 = vunpack.c.l.b16 %v2482
      %v2771 = vunpack.c.l.b16 %v2483
      %v2772 = vunpack.c.l.b16 %v2484
      %v2773 = vunpack.c.l.b16 %v2485
      %v2774 = vunpack.c.l.b16 %v2486
      %v2775 = vunpack.c.l.b16 %v2487
      %v2776 = vunpack.c.l.b16 %v2488
      %v2777 = vunpack.c.l.b16 %v2489
      %v2778 = vunpack.c.l.b16 %v2490
      %v2779 = vunpack.c.l.b16 %v2491
      %v2780 = vunpack.c.l.b16 %v2492
      %v2781 = vunpack.c.l.b16 %v2493
      %v2782 = vunpack.c.l.b16 %v2494
      %v2783 = vpack.c.b16 %v2640, %v2639
      %v2784 = vpack.c.b16 %v2642, %v2641
      %v2785 = vpack.c.b16 %v2644, %v2643
      %v2786 = vpack.c.b16 %v2646, %v2645
      %v2787 = vpack.c.b16 %v2648, %v2647
      %v2788 = vpack.c.b16 %v2650, %v2649
      %v2789 = vpack.c.b16 %v2652, %v2651
      %v2790 = vpack.c.b16 %v2654, %v2653
      %v2791 = vpack.c.b16 %v2656, %v2655
      %v2792 = vpack.c.b16 %v2658, %v2657
      %v2793 = vpack.c.b16 %v2660, %v2659
      %v2794 = vpack.c.b16 %v2662, %v2661
      %v2795 = vpack.c.b16 %v2664, %v2663
      %v2796 = vpack.c.b16 %v2666, %v2665
      %v2797 = vpack.c.b16 %v2668, %v2667
      %v2798 = vpack.c.b16 %v2670, %v2669
      %v2799 = vpack.c.b16 %v2672, %v2671
      %v2800 = vpack.c.b16 %v2674, %v2673
      %v2801 = vpack.c.b16 %v2676, %v2675
      %v2802 = vpack.c.b16 %v2678, %v2677
      %v2803 = vpack.c.b16 %v2680, %v2679
      %v2804 = vpack.c.b16 %v2682, %v2681
      %v2805 = vpack.c.b16 %v2684, %v2683
      %v2806 = vpack.c.b16 %v2686, %v2685
      %v2807 = vpack.c.b16 %v2688, %v2687
      %v2808 = vpack.c.b16 %v2690, %v2689
      %v2809 = vpack.c.b16 %v2692, %v2691
      %v2810 = vpack.c.b16 %v2694, %v2693
      %v2811 = vpack.c.b16 %v2696, %v2695
      %v2812 = vpack.c.b16 %v2698, %v2697
      %v2813 = vpack.c.b16 %v2700, %v2699
      %v2814 = vpack.c.b16 %v2702, %v2701
      %v2815 = vpack.c.b16 %v2704, %v2703
      %v2816 = vpack.c.b16 %v2706, %v2705
      %v2817 = vpack.c.b16 %v2708, %v2707
      %v2818 = vpack.c.b16 %v2710, %v2709
      %v2819 = vpack.c.b16 %v2712, %v2711
      %v2820 = vpack.c.b16 %v2714, %v2713
      %v2821 = vpack.c.b16 %v2716, %v2715
      %v2822 = vpack.c.b16 %v2718, %v2717
      %v2823 = vpack.c.b16 %v2720, %v2719
      %v2824 = vpack.c.b16 %v2722, %v2721
      %v2825 = vpack.c.b16 %v2724, %v2723
      %v2826 = vpack.c.b16 %v2726, %v2725
      %v2827 = vpack.c.b16 %v2728, %v2727
      %v2828 = vpack.c.b16 %v2730, %v2729
      %v2829 = vpack.c.b16 %v2732, %v2731
      %v2830 = vpack.c.b16 %v2734, %v2733
      %v2831 = vpack.c.b16 %v2736, %v2735
      %v2832 = vpack.c.b16 %v2738, %v2737
      %v2833 = vpack.c.b16 %v2740, %v2739
      %v2834 = vpack.c.b16 %v2742, %v2741
      %v2835 = vpack.c.b16 %v2744, %v2743
      %v2836 = vpack.c.b16 %v2746, %v2745
      %v2837 = vpack.c.b16 %v2748, %v2747
      %v2838 = vpack.c.b16 %v2750, %v2749
      %v2839 = vpack.c.b16 %v2752, %v2751
      %v2840 = vpack.c.b16 %v2754, %v2753
      %v2841 = vpack.c.b16 %v2756, %v2755
      %v2842 = vpack.c.b16 %v2758, %v2757
      %v2843 = vpack.c.b16 %v2760, %v2759
      %v2844 = vpack.c.b16 %v2762, %v2761
      %v2845 = vpack.c.b16 %v2764, %v2763
      %v2846 = vpack.c.b16 %v2766, %v2765
      %v2847 = vpack.c.b16 %v2768, %v2767
      %v2848 = vpack.c.b16 %v2770, %v2769
      %v2849 = vpack.c.b16 %v2772, %v2771
      %v2850 = vpack.c.b16 %v2774, %v2773
      %v2851 = vpack.c.b16 %v2776, %v2775
      %v2852 = vpack.c.b16 %v2778, %v2777
      %v2853 = vpack.c.b16 %v2780, %v2779
      %v2854 = vpack.c.b16 %v2782, %v2781
      %2927 = vmatprep.subr.bf16.mxu0 0
      %2928 = vmatpush1.bf16.msra.mxu0 %v2783
      %2929 = vmatprep.subr.bf16.mxu0 0
      %2930 = vmatpush1.bf16.msra.mxu0 %v2784
      %2931 = vmatprep.subr.bf16.mxu0 0
      %2932 = vmatpush1.bf16.msra.mxu0 %v2785
      %2933 = vmatprep.subr.bf16.mxu0 0
      %2934 = vmatpush1.bf16.msra.mxu0 %v2786
      %2935 = vmatprep.subr.bf16.mxu0 0
      %2936 = vmatpush1.bf16.msra.mxu0 %v2787
      %2937 = vmatprep.subr.bf16.mxu0 0
      %2938 = vmatpush1.bf16.msra.mxu0 %v2788
      %2939 = vmatprep.subr.bf16.mxu0 0
      %2940 = vmatpush1.bf16.msra.mxu0 %v2789
      %2941 = vmatprep.subr.bf16.mxu0 0
      %2942 = vmatpush1.bf16.msra.mxu0 %v2790
      %2943 = vmatprep.subr.bf16.mxu0 0
      %2944 = vmatpush1.bf16.msra.mxu0 %v2791
      %2945 = vmatprep.subr.bf16.mxu0 0
      %2946 = vmatpush1.bf16.msra.mxu0 %v2792
      %2947 = vmatprep.subr.bf16.mxu0 0
      %2948 = vmatpush1.bf16.msra.mxu0 %v2793
      %2949 = vmatprep.subr.bf16.mxu0 0
      %2950 = vmatpush1.bf16.msra.mxu0 %v2794
      %2951 = vmatprep.subr.bf16.mxu0 0
      %2952 = vmatpush1.bf16.msra.mxu0 %v2795
      %2953 = vmatprep.subr.bf16.mxu0 0
      %2954 = vmatpush1.bf16.msra.mxu0 %v2796
      %2955 = vmatprep.subr.bf16.mxu0 0
      %2956 = vmatpush1.bf16.msra.mxu0 %v2797
      %2957 = vmatprep.subr.bf16.mxu0 0
      %2958 = vmatpush1.bf16.msra.mxu0 %v2798
      %2959 = vmatprep.mubr.bf16.mxu0 %v2280
      %2960 = vmatmul.mubr.bf16.gmra.mrb[0].mxu0 %v2279
      %v2961 = vpop.f32.mrb[0].mxu0
      %v2962 = vadd.f32 0.0, %v2961
      %v2963 = vpop.f32.mrb[0].mxu0
      %v2964 = vpop.f32.mrb[0].mxu0
      %v2965 = vadd.f32 0.0, %v2964
      %v2966 = vpop.f32.mrb[0].mxu0
      %2967 = vmatprep.mubr.bf16.mxu0 %v2289
      %2968 = vmatmul.mubr.bf16.gmra.mrb[0].mxu0 %v2288
      %v2969 = vpop.f32.mrb[0].mxu0
      %v2970 = vadd.f32 0.0, %v2969
      %v2971 = vpop.f32.mrb[0].mxu0
      %v2972 = vpop.f32.mrb[0].mxu0
      %v2973 = vadd.f32 0.0, %v2972
      %v2974 = vpop.f32.mrb[0].mxu0
      %2975 = vmatprep.mubr.bf16.mxu0 %v2298
      %2976 = vmatmul.mubr.bf16.gmra.mrb[0].mxu0 %v2297
      %v2977 = vpop.f32.mrb[0].mxu0
      %v2978 = vadd.f32 0.0, %v2977
      %v2979 = vpop.f32.mrb[0].mxu0
      %v2980 = vpop.f32.mrb[0].mxu0
      %v2981 = vadd.f32 0.0, %v2980
      %v2982 = vpop.f32.mrb[0].mxu0
      %2983 = vmatprep.mubr.bf16.mxu0 %v2307
      %2984 = vmatmul.mubr.bf16.gmra.mrb[0].mxu0 %v2306
      %v2985 = vpop.f32.mrb[0].mxu0
      %v2986 = vadd.f32 0.0, %v2985
      %v2987 = vpop.f32.mrb[0].mxu0
      %v2988 = vpop.f32.mrb[0].mxu0
      %v2989 = vadd.f32 0.0, %v2988
      %v2990 = vpop.f32.mrb[0].mxu0
      %2991 = vmatprep.mubr.bf16.mxu0 %v2316
      %2992 = vmatmul.mubr.bf16.gmra.mrb[0].mxu0 %v2315
      %v2993 = vpop.f32.mrb[0].mxu0
      %v2994 = vadd.f32 0.0, %v2993
      %v2995 = vpop.f32.mrb[0].mxu0
      %v2996 = vpop.f32.mrb[0].mxu0
      %v2997 = vadd.f32 0.0, %v2996
      %v2998 = vpop.f32.mrb[0].mxu0
      %2999 = vmatprep.mubr.bf16.mxu0 %v2325
      %3000 = vmatmul.mubr.bf16.gmra.mrb[0].mxu0 %v2324
      %v3001 = vpop.f32.mrb[0].mxu0
      %v3002 = vadd.f32 0.0, %v3001
      %v3003 = vpop.f32.mrb[0].mxu0
      %v3004 = vpop.f32.mrb[0].mxu0
      %v3005 = vadd.f32 0.0, %v3004
      %v3006 = vpop.f32.mrb[0].mxu0
      %3007 = vmatprep.mubr.bf16.mxu0 %v2334
      %3008 = vmatmul.mubr.bf16.gmra.mrb[0].mxu0 %v2333
      %v3009 = vpop.f32.mrb[0].mxu0
      %v3010 = vadd.f32 0.0, %v3009
      %v3011 = vpop.f32.mrb[0].mxu0
      %v3012 = vpop.f32.mrb[0].mxu0
      %v3013 = vadd.f32 0.0, %v3012
      %v3014 = vpop.f32.mrb[0].mxu0
      %3015 = vmatprep.mubr.bf16.mxu0 %v2343
      %3016 = vmatmul.mubr.bf16.gmra.mrb[0].mxu0 %v2342
      %v3017 = vpop.f32.mrb[0].mxu0
      %v3018 = vadd.f32 0.0, %v3017
      %v3019 = vpop.f32.mrb[0].mxu0
      %v3020 = vpop.f32.mrb[0].mxu0
      %v3021 = vadd.f32 0.0, %v3020
      %v3022 = vpop.f32.mrb[0].mxu0
      %3023 = vdwg.mxu0
      %3024 = vmatprep.subr.bf16.mxu0 0
      %3025 = vmatpush1.bf16.msra.mxu0 %v2799
      %3026 = vmatprep.subr.bf16.mxu0 0
      %3027 = vmatpush1.bf16.msra.mxu0 %v2800
      %3028 = vmatprep.subr.bf16.mxu0 0
      %3029 = vmatpush1.bf16.msra.mxu0 %v2801
      %3030 = vmatprep.subr.bf16.mxu0 0
      %3031 = vmatpush1.bf16.msra.mxu0 %v2802
      %3032 = vmatprep.subr.bf16.mxu0 0
      %3033 = vmatpush1.bf16.msra.mxu0 %v2803
      %3034 = vmatprep.subr.bf16.mxu0 0
      %3035 = vmatpush1.bf16.msra.mxu0 %v2804
      %3036 = vmatprep.subr.bf16.mxu0 0
      %3037 = vmatpush1.bf16.msra.mxu0 %v2805
      %3038 = vmatprep.subr.bf16.mxu0 0
      %3039 = vmatpush1.bf16.msra.mxu0 %v2806
      %3040 = vmatprep.subr.bf16.mxu0 0
      %3041 = vmatpush1.bf16.msra.mxu0 %v2807
      %3042 = vmatprep.subr.bf16.mxu0 0
      %3043 = vmatpush1.bf16.msra.mxu0 %v2808
      %3044 = vmatprep.subr.bf16.mxu0 0
      %3045 = vmatpush1.bf16.msra.mxu0 %v2809
      %3046 = vmatprep.subr.bf16.mxu0 0
      %3047 = vmatpush1.bf16.msra.mxu0 %v2810
      %3048 = vmatprep.subr.bf16.mxu0 0
      %3049 = vmatpush1.bf16.msra.mxu0 %v2811
      %3050 = vmatprep.subr.bf16.mxu0 0
      %3051 = vmatpush1.bf16.msra.mxu0 %v2812
      %3052 = vmatprep.subr.bf16.mxu0 0
      %3053 = vmatpush1.bf16.msra.mxu0 %v2813
      %3054 = vmatprep.subr.bf16.mxu0 0
      %3055 = vmatpush1.bf16.msra.mxu0 %v2814
      %3056 = vmatprep.mubr.bf16.mxu0 %v2282
      %3057 = vmatmul.mubr.bf16.gmra.mrb[0].mxu0 %v2281
      %v3058 = vpop.f32.mrb[0].mxu0
      %v3059 = vadd.f32 %v2962, %v3058
      %v3060 = vpop.f32.mrb[0].mxu0
      %v3061 = vpop.f32.mrb[0].mxu0
      %v3062 = vadd.f32 %v2965, %v3061
      %v3063 = vpop.f32.mrb[0].mxu0
      %3064 = vmatprep.mubr.bf16.mxu0 %v2291
      %3065 = vmatmul.mubr.bf16.gmra.mrb[0].mxu0 %v2290
      %v3066 = vpop.f32.mrb[0].mxu0
      %v3067 = vadd.f32 %v2970, %v3066
      %v3068 = vpop.f32.mrb[0].mxu0
      %v3069 = vpop.f32.mrb[0].mxu0
      %v3070 = vadd.f32 %v2973, %v3069
      %v3071 = vpop.f32.mrb[0].mxu0
      %3072 = vmatprep.mubr.bf16.mxu0 %v2300
      %3073 = vmatmul.mubr.bf16.gmra.mrb[0].mxu0 %v2299
      %v3074 = vpop.f32.mrb[0].mxu0
      %v3075 = vadd.f32 %v2978, %v3074
      %v3076 = vpop.f32.mrb[0].mxu0
      %v3077 = vpop.f32.mrb[0].mxu0
      %v3078 = vadd.f32 %v2981, %v3077
      %v3079 = vpop.f32.mrb[0].mxu0
      %3080 = vmatprep.mubr.bf16.mxu0 %v2309
      %3081 = vmatmul.mubr.bf16.gmra.mrb[0].mxu0 %v2308
      %v3082 = vpop.f32.mrb[0].mxu0
      %v3083 = vadd.f32 %v2986, %v3082
      %v3084 = vpop.f32.mrb[0].mxu0
      %v3085 = vpop.f32.mrb[0].mxu0
      %v3086 = vadd.f32 %v2989, %v3085
      %v3087 = vpop.f32.mrb[0].mxu0
      %3088 = vmatprep.mubr.bf16.mxu0 %v2318
      %3089 = vmatmul.mubr.bf16.gmra.mrb[0].mxu0 %v2317
      %v3090 = vpop.f32.mrb[0].mxu0
      %v3091 = vadd.f32 %v2994, %v3090
      %v3092 = vpop.f32.mrb[0].mxu0
      %v3093 = vpop.f32.mrb[0].mxu0
      %v3094 = vadd.f32 %v2997, %v3093
      %v3095 = vpop.f32.mrb[0].mxu0
      %3096 = vmatprep.mubr.bf16.mxu0 %v2327
      %3097 = vmatmul.mubr.bf16.gmra.mrb[0].mxu0 %v2326
      %v3098 = vpop.f32.mrb[0].mxu0
      %v3099 = vadd.f32 %v3002, %v3098
      %v3100 = vpop.f32.mrb[0].mxu0
      %v3101 = vpop.f32.mrb[0].mxu0
      %v3102 = vadd.f32 %v3005, %v3101
      %v3103 = vpop.f32.mrb[0].mxu0
      %3104 = vmatprep.mubr.bf16.mxu0 %v2336
      %3105 = vmatmul.mubr.bf16.gmra.mrb[0].mxu0 %v2335
      %v3106 = vpop.f32.mrb[0].mxu0
      %v3107 = vadd.f32 %v3010, %v3106
      %v3108 = vpop.f32.mrb[0].mxu0
      %v3109 = vpop.f32.mrb[0].mxu0
      %v3110 = vadd.f32 %v3013, %v3109
      %v3111 = vpop.f32.mrb[0].mxu0
      %3112 = vmatprep.mubr.bf16.mxu0 %v2345
      %3113 = vmatmul.mubr.bf16.gmra.mrb[0].mxu0 %v2344
      %v3114 = vpop.f32.mrb[0].mxu0
      %v3115 = vadd.f32 %v3018, %v3114
      %v3116 = vpop.f32.mrb[0].mxu0
      %v3117 = vpop.f32.mrb[0].mxu0
      %v3118 = vadd.f32 %v3021, %v3117
      %v3119 = vpop.f32.mrb[0].mxu0
      %3120 = vdwg.mxu0
      %3121 = vmatprep.subr.bf16.mxu0 0
      %3122 = vmatpush1.bf16.msra.mxu0 %v2815
      %3123 = vmatprep.subr.bf16.mxu0 0
      %3124 = vmatpush1.bf16.msra.mxu0 %v2816
      %3125 = vmatprep.subr.bf16.mxu0 0
      %3126 = vmatpush1.bf16.msra.mxu0 %v2817
      %3127 = vmatprep.subr.bf16.mxu0 0
      %3128 = vmatpush1.bf16.msra.mxu0 %v2818
      %3129 = vmatprep.subr.bf16.mxu0 0
      %3130 = vmatpush1.bf16.msra.mxu0 %v2819
      %3131 = vmatprep.subr.bf16.mxu0 0
      %3132 = vmatpush1.bf16.msra.mxu0 %v2820
      %3133 = vmatprep.subr.bf16.mxu0 0
      %3134 = vmatpush1.bf16.msra.mxu0 %v2821
      %3135 = vmatprep.subr.bf16.mxu0 0
      %3136 = vmatpush1.bf16.msra.mxu0 %v2822
      %3137 = vmatprep.subr.bf16.mxu0 0
      %3138 = vmatpush1.bf16.msra.mxu0 %v2823
      %3139 = vmatprep.subr.bf16.mxu0 0
      %3140 = vmatpush1.bf16.msra.mxu0 %v2824
      %3141 = vmatprep.subr.bf16.mxu0 0
      %3142 = vmatpush1.bf16.msra.mxu0 %v2825
      %3143 = vmatprep.subr.bf16.mxu0 0
      %3144 = vmatpush1.bf16.msra.mxu0 %v2826
      %3145 = vmatprep.subr.bf16.mxu0 0
      %3146 = vmatpush1.bf16.msra.mxu0 %v2827
      %3147 = vmatprep.subr.bf16.mxu0 0
      %3148 = vmatpush1.bf16.msra.mxu0 %v2828
      %3149 = vmatprep.subr.bf16.mxu0 0
      %3150 = vmatpush1.bf16.msra.mxu0 %v2829
      %3151 = vmatprep.subr.bf16.mxu0 0
      %3152 = vmatpush1.bf16.msra.mxu0 %v2830
      %3153 = vmatprep.mubr.bf16.mxu0 %v2284
      %3154 = vmatmul.mubr.bf16.gmra.mrb[0].mxu0 %v2283
      %v3155 = vpop.f32.mrb[0].mxu0
      %v3156 = vadd.f32 %v3059, %v3155
      %v3157 = vpop.f32.mrb[0].mxu0
      %v3158 = vpop.f32.mrb[0].mxu0
      %v3159 = vadd.f32 %v3062, %v3158
      %v3160 = vpop.f32.mrb[0].mxu0
      %3161 = vmatprep.mubr.bf16.mxu0 %v2293
      %3162 = vmatmul.mubr.bf16.gmra.mrb[0].mxu0 %v2292
      %v3163 = vpop.f32.mrb[0].mxu0
      %v3164 = vadd.f32 %v3067, %v3163
      %v3165 = vpop.f32.mrb[0].mxu0
      %v3166 = vpop.f32.mrb[0].mxu0
      %v3167 = vadd.f32 %v3070, %v3166
      %v3168 = vpop.f32.mrb[0].mxu0
      %3169 = vmatprep.mubr.bf16.mxu0 %v2302
      %3170 = vmatmul.mubr.bf16.gmra.mrb[0].mxu0 %v2301
      %v3171 = vpop.f32.mrb[0].mxu0
      %v3172 = vadd.f32 %v3075, %v3171
      %v3173 = vpop.f32.mrb[0].mxu0
      %v3174 = vpop.f32.mrb[0].mxu0
      %v3175 = vadd.f32 %v3078, %v3174
      %v3176 = vpop.f32.mrb[0].mxu0
      %3177 = vmatprep.mubr.bf16.mxu0 %v2311
      %3178 = vmatmul.mubr.bf16.gmra.mrb[0].mxu0 %v2310
      %v3179 = vpop.f32.mrb[0].mxu0
      %v3180 = vadd.f32 %v3083, %v3179
      %v3181 = vpop.f32.mrb[0].mxu0
      %v3182 = vpop.f32.mrb[0].mxu0
      %v3183 = vadd.f32 %v3086, %v3182
      %v3184 = vpop.f32.mrb[0].mxu0
      %3185 = vmatprep.mubr.bf16.mxu0 %v2320
      %3186 = vmatmul.mubr.bf16.gmra.mrb[0].mxu0 %v2319
      %v3187 = vpop.f32.mrb[0].mxu0
      %v3188 = vadd.f32 %v3091, %v3187
      %v3189 = vpop.f32.mrb[0].mxu0
      %v3190 = vpop.f32.mrb[0].mxu0
      %v3191 = vadd.f32 %v3094, %v3190
      %v3192 = vpop.f32.mrb[0].mxu0
      %3193 = vmatprep.mubr.bf16.mxu0 %v2329
      %3194 = vmatmul.mubr.bf16.gmra.mrb[0].mxu0 %v2328
      %v3195 = vpop.f32.mrb[0].mxu0
      %v3196 = vadd.f32 %v3099, %v3195
      %v3197 = vpop.f32.mrb[0].mxu0
      %v3198 = vpop.f32.mrb[0].mxu0
      %v3199 = vadd.f32 %v3102, %v3198
      %v3200 = vpop.f32.mrb[0].mxu0
      %3201 = vmatprep.mubr.bf16.mxu0 %v2338
      %3202 = vmatmul.mubr.bf16.gmra.mrb[0].mxu0 %v2337
      %v3203 = vpop.f32.mrb[0].mxu0
      %v3204 = vadd.f32 %v3107, %v3203
      %v3205 = vpop.f32.mrb[0].mxu0
      %v3206 = vpop.f32.mrb[0].mxu0
      %v3207 = vadd.f32 %v3110, %v3206
      %v3208 = vpop.f32.mrb[0].mxu0
      %3209 = vmatprep.mubr.bf16.mxu0 %v2347
      %3210 = vmatmul.mubr.bf16.gmra.mrb[0].mxu0 %v2346
      %v3211 = vpop.f32.mrb[0].mxu0
      %v3212 = vadd.f32 %v3115, %v3211
      %v3213 = vpop.f32.mrb[0].mxu0
      %v3214 = vpop.f32.mrb[0].mxu0
      %v3215 = vadd.f32 %v3118, %v3214
      %v3216 = vpop.f32.mrb[0].mxu0
      %3217 = vdwg.mxu0
      %3218 = vmatprep.subr.bf16.mxu0 0
      %3219 = vmatpush1.bf16.msra.mxu0 %v2831
      %3220 = vmatprep.subr.bf16.mxu0 0
      %3221 = vmatpush1.bf16.msra.mxu0 %v2832
      %3222 = vmatprep.subr.bf16.mxu0 0
      %3223 = vmatpush1.bf16.msra.mxu0 %v2833
      %3224 = vmatprep.subr.bf16.mxu0 0
      %3225 = vmatpush1.bf16.msra.mxu0 %v2834
      %3226 = vmatprep.subr.bf16.mxu0 0
      %3227 = vmatpush1.bf16.msra.mxu0 %v2835
      %3228 = vmatprep.subr.bf16.mxu0 0
      %3229 = vmatpush1.bf16.msra.mxu0 %v2836
      %3230 = vmatprep.subr.bf16.mxu0 0
      %3231 = vmatpush1.bf16.msra.mxu0 %v2837
      %3232 = vmatprep.subr.bf16.mxu0 0
      %3233 = vmatpush1.bf16.msra.mxu0 %v2838
      %3234 = vmatprep.subr.bf16.mxu0 0
      %3235 = vmatpush1.bf16.msra.mxu0 %v2839
      %3236 = vmatprep.subr.bf16.mxu0 0
      %3237 = vmatpush1.bf16.msra.mxu0 %v2840
      %3238 = vmatprep.subr.bf16.mxu0 0
      %3239 = vmatpush1.bf16.msra.mxu0 %v2841
      %3240 = vmatprep.subr.bf16.mxu0 0
      %3241 = vmatpush1.bf16.msra.mxu0 %v2842
      %3242 = vmatprep.subr.bf16.mxu0 0
      %3243 = vmatpush1.bf16.msra.mxu0 %v2843
      %3244 = vmatprep.subr.bf16.mxu0 0
      %3245 = vmatpush1.bf16.msra.mxu0 %v2844
      %3246 = vmatprep.subr.bf16.mxu0 0
      %3247 = vmatpush1.bf16.msra.mxu0 %v2845
      %3248 = vmatprep.subr.bf16.mxu0 0
      %3249 = vmatpush1.bf16.msra.mxu0 %v2846
      %3250 = vmatprep.mubr.bf16.mxu0 %v2286
      %3251 = vmatmul.mubr.bf16.gmra.mrb[0].mxu0 %v2285
      %v3252 = vpop.f32.mrb[0].mxu0
      %v3253 = vadd.f32 %v3156, %v3252
      %v3254 = vpop.f32.mrb[0].mxu0
      %v3255 = vpop.f32.mrb[0].mxu0
      %v3256 = vadd.f32 %v3159, %v3255
      %v3257 = vpop.f32.mrb[0].mxu0
      %3258 = vmatprep.mubr.bf16.mxu0 %v2295
      %3259 = vmatmul.mubr.bf16.gmra.mrb[0].mxu0 %v2294
      %v3260 = vpop.f32.mrb[0].mxu0
      %v3261 = vadd.f32 %v3164, %v3260
      %v3262 = vpop.f32.mrb[0].mxu0
      %v3263 = vpop.f32.mrb[0].mxu0
      %v3264 = vadd.f32 %v3167, %v3263
      %v3265 = vpop.f32.mrb[0].mxu0
      %3266 = vmatprep.mubr.bf16.mxu0 %v2304
      %3267 = vmatmul.mubr.bf16.gmra.mrb[0].mxu0 %v2303
      %v3268 = vpop.f32.mrb[0].mxu0
      %v3269 = vadd.f32 %v3172, %v3268
      %v3270 = vpop.f32.mrb[0].mxu0
      %v3271 = vpop.f32.mrb[0].mxu0
      %v3272 = vadd.f32 %v3175, %v3271
      %v3273 = vpop.f32.mrb[0].mxu0
      %3274 = vmatprep.mubr.bf16.mxu0 %v2313
      %3275 = vmatmul.mubr.bf16.gmra.mrb[0].mxu0 %v2312
      %v3276 = vpop.f32.mrb[0].mxu0
      %v3277 = vadd.f32 %v3180, %v3276
      %v3278 = vpop.f32.mrb[0].mxu0
      %v3279 = vpop.f32.mrb[0].mxu0
      %v3280 = vadd.f32 %v3183, %v3279
      %v3281 = vpop.f32.mrb[0].mxu0
      %3282 = vmatprep.mubr.bf16.mxu0 %v2322
      %3283 = vmatmul.mubr.bf16.gmra.mrb[0].mxu0 %v2321
      %v3284 = vpop.f32.mrb[0].mxu0
      %v3285 = vadd.f32 %v3188, %v3284
      %v3286 = vpop.f32.mrb[0].mxu0
      %v3287 = vpop.f32.mrb[0].mxu0
      %v3288 = vadd.f32 %v3191, %v3287
      %v3289 = vpop.f32.mrb[0].mxu0
      %3290 = vmatprep.mubr.bf16.mxu0 %v2331
      %3291 = vmatmul.mubr.bf16.gmra.mrb[0].mxu0 %v2330
      %v3292 = vpop.f32.mrb[0].mxu0
      %v3293 = vadd.f32 %v3196, %v3292
      %v3294 = vpop.f32.mrb[0].mxu0
      %v3295 = vpop.f32.mrb[0].mxu0
      %v3296 = vadd.f32 %v3199, %v3295
      %v3297 = vpop.f32.mrb[0].mxu0
      %3298 = vmatprep.mubr.bf16.mxu0 %v2340
      %3299 = vmatmul.mubr.bf16.gmra.mrb[0].mxu0 %v2339
      %v3300 = vpop.f32.mrb[0].mxu0
      %v3301 = vadd.f32 %v3204, %v3300
      %v3302 = vpop.f32.mrb[0].mxu0
      %v3303 = vpop.f32.mrb[0].mxu0
      %v3304 = vadd.f32 %v3207, %v3303
      %v3305 = vpop.f32.mrb[0].mxu0
      %3306 = vmatprep.mubr.bf16.mxu0 %v2349
      %3307 = vmatmul.mubr.bf16.gmra.mrb[0].mxu0 %v2348
      %v3308 = vpop.f32.mrb[0].mxu0
      %v3309 = vadd.f32 %v3212, %v3308
      %v3310 = vpop.f32.mrb[0].mxu0
      %v3311 = vpop.f32.mrb[0].mxu0
      %v3312 = vadd.f32 %v3215, %v3311
      %v3313 = vpop.f32.mrb[0].mxu0
      %3314 = vdwg.mxu0
      %3315 = vmatprep.subr.bf16.mxu0 0
      %3316 = vmatpush1.bf16.msra.mxu0 %v2847
      %3317 = vmatprep.subr.bf16.mxu0 0
      %3318 = vmatpush1.bf16.msra.mxu0 %v2848
      %3319 = vmatprep.subr.bf16.mxu0 0
      %3320 = vmatpush1.bf16.msra.mxu0 %v2849
      %3321 = vmatprep.subr.bf16.mxu0 0
      %3322 = vmatpush1.bf16.msra.mxu0 %v2850
      %3323 = vmatprep.subr.bf16.mxu0 0
      %3324 = vmatpush1.bf16.msra.mxu0 %v2851
      %3325 = vmatprep.subr.bf16.mxu0 0
      %3326 = vmatpush1.bf16.msra.mxu0 %v2852
      %3327 = vmatprep.subr.bf16.mxu0 0
      %3328 = vmatpush1.bf16.msra.mxu0 %v2853
      %3329 = vmatprep.subr.bf16.mxu0 0
      %3330 = vmatpush1.bf16.msra.mxu0 %v2854
      %3331 = vmatprep.subr.bf16.mxu0 0
      %3332 = vmatpush1.bf16.msra.mxu0 0
      %3333 = vmatprep.subr.bf16.mxu0 0
      %3334 = vmatpush1.bf16.msra.mxu0 0
      %3335 = vmatprep.subr.bf16.mxu0 0
      %3336 = vmatpush1.bf16.msra.mxu0 0
      %3337 = vmatprep.subr.bf16.mxu0 0
      %3338 = vmatpush1.bf16.msra.mxu0 0
      %3339 = vmatprep.subr.bf16.mxu0 0
      %3340 = vmatpush1.bf16.msra.mxu0 0
      %3341 = vmatprep.subr.bf16.mxu0 0
      %3342 = vmatpush1.bf16.msra.mxu0 0
      %3343 = vmatprep.subr.bf16.mxu0 0
      %3344 = vmatpush1.bf16.msra.mxu0 0
      %3345 = vmatprep.subr.bf16.mxu0 0
      %3346 = vmatpush1.bf16.msra.mxu0 0
      %3347 = vmatprep.mubr.bf16.mxu0 0
      %3348 = vmatmul.mubr.bf16.gmra.mrb[0].mxu0 %v2287
      %v3349 = vpop.f32.mrb[0].mxu0
      %v3350 = vadd.f32 %v3253, %v3349
      %v3351 = vpop.f32.mrb[0].mxu0
      %v3352 = vpop.f32.mrb[0].mxu0
      %v3353 = vadd.f32 %v3256, %v3352
      %v3354 = vpop.f32.mrb[0].mxu0
      %3355 = vmatprep.mubr.bf16.mxu0 0
      %3356 = vmatmul.mubr.bf16.gmra.mrb[0].mxu0 %v2296
      %v3357 = vpop.f32.mrb[0].mxu0
      %v3358 = vadd.f32 %v3261, %v3357
      %v3359 = vpop.f32.mrb[0].mxu0
      %v3360 = vpop.f32.mrb[0].mxu0
      %v3361 = vadd.f32 %v3264, %v3360
      %v3362 = vpop.f32.mrb[0].mxu0
      %3363 = vmatprep.mubr.bf16.mxu0 0
      %3364 = vmatmul.mubr.bf16.gmra.mrb[0].mxu0 %v2305
      %v3365 = vpop.f32.mrb[0].mxu0
      %v3366 = vadd.f32 %v3269, %v3365
      %v3367 = vpop.f32.mrb[0].mxu0
      %v3368 = vpop.f32.mrb[0].mxu0
      %v3369 = vadd.f32 %v3272, %v3368
      %v3370 = vpop.f32.mrb[0].mxu0
      %3371 = vmatprep.mubr.bf16.mxu0 0
      %3372 = vmatmul.mubr.bf16.gmra.mrb[0].mxu0 %v2314
      %v3373 = vpop.f32.mrb[0].mxu0
      %v3374 = vadd.f32 %v3277, %v3373
      %v3375 = vpop.f32.mrb[0].mxu0
      %v3376 = vpop.f32.mrb[0].mxu0
      %v3377 = vadd.f32 %v3280, %v3376
      %v3378 = vpop.f32.mrb[0].mxu0
      %3379 = vmatprep.mubr.bf16.mxu0 0
      %3380 = vmatmul.mubr.bf16.gmra.mrb[0].mxu0 %v2323
      %v3381 = vpop.f32.mrb[0].mxu0
      %v3382 = vadd.f32 %v3285, %v3381
      %v3383 = vpop.f32.mrb[0].mxu0
      %v3384 = vpop.f32.mrb[0].mxu0
      %v3385 = vadd.f32 %v3288, %v3384
      %v3386 = vpop.f32.mrb[0].mxu0
      %3387 = vmatprep.mubr.bf16.mxu0 0
      %3388 = vmatmul.mubr.bf16.gmra.mrb[0].mxu0 %v2332
      %v3389 = vpop.f32.mrb[0].mxu0
      %v3390 = vadd.f32 %v3293, %v3389
      %v3391 = vpop.f32.mrb[0].mxu0
      %v3392 = vpop.f32.mrb[0].mxu0
      %v3393 = vadd.f32 %v3296, %v3392
      %v3394 = vpop.f32.mrb[0].mxu0
      %3395 = vmatprep.mubr.bf16.mxu0 0
      %3396 = vmatmul.mubr.bf16.gmra.mrb[0].mxu0 %v2341
      %v3397 = vpop.f32.mrb[0].mxu0
      %v3398 = vadd.f32 %v3301, %v3397
      %v3399 = vpop.f32.mrb[0].mxu0
      %v3400 = vpop.f32.mrb[0].mxu0
      %v3401 = vadd.f32 %v3304, %v3400
      %v3402 = vpop.f32.mrb[0].mxu0
      %3403 = vmatprep.mubr.bf16.mxu0 0
      %3404 = vmatmul.mubr.bf16.gmra.mrb[0].mxu0 %v2350
      %v3405 = vpop.f32.mrb[0].mxu0
      %v3406 = vadd.f32 %v3309, %v3405
      %v3407 = vpop.f32.mrb[0].mxu0
      %v3408 = vpop.f32.mrb[0].mxu0
      %v3409 = vadd.f32 %v3312, %v3408
      %v3410 = vpop.f32.mrb[0].mxu0
      %3411 = vdwg.mxu0
      %v3412 = vpack.c.bf16 %v3353, %v3350
      %v3413 = vpack.c.bf16 %v3361, %v3358
      %v3414 = vpack.c.bf16 %v3369, %v3366
      %v3415 = vpack.c.bf16 %v3377, %v3374
      %v3416 = vpack.c.bf16 %v3385, %v3382
      %v3417 = vpack.c.bf16 %v3393, %v3390
      %v3418 = vpack.c.bf16 %v3401, %v3398
      %v3419 = vpack.c.bf16 %v3409, %v3406
      %v3428 = vunpack.c.l.b16 %v3412
      %v3429 = vunpack.c.h.b16 %v3412
      %v3430 = vunpack.c.l.b16 %v3413
      %v3431 = vunpack.c.h.b16 %v3413
      %v3432 = vunpack.c.l.b16 %v3414
      %v3433 = vunpack.c.h.b16 %v3414
      %v3434 = vunpack.c.l.b16 %v3415
      %v3435 = vunpack.c.h.b16 %v3415
      %v3436 = vunpack.c.l.b16 %v3416
      %v3437 = vunpack.c.h.b16 %v3416
      %v3438 = vunpack.c.l.b16 %v3417
      %v3439 = vunpack.c.h.b16 %v3417
      %v3440 = vunpack.c.l.b16 %v3418
      %v3441 = vunpack.c.h.b16 %v3418
      %v3442 = vunpack.c.l.b16 %v3419
      %v3443 = vunpack.c.h.b16 %v3419
      %v3444 = vpack.c.b16 %v3428, %v3428
      %v3445 = vpack.c.b16 %v3429, %v3429
      %v3446 = vpack.c.b16 %v3430, %v3430
      %v3447 = vpack.c.b16 %v3431, %v3431
      %v3448 = vpack.c.b16 %v3432, %v3432
      %v3449 = vpack.c.b16 %v3433, %v3433
      %v3450 = vpack.c.b16 %v3434, %v3434
      %v3451 = vpack.c.b16 %v3435, %v3435
      %v3452 = vpack.c.b16 %v3436, %v3436
      %v3453 = vpack.c.b16 %v3437, %v3437
      %v3454 = vpack.c.b16 %v3438, %v3438
      %v3455 = vpack.c.b16 %v3439, %v3439
      %v3456 = vpack.c.b16 %v3440, %v3440
      %v3457 = vpack.c.b16 %v3441, %v3441
      %v3458 = vpack.c.b16 %v3442, %v3442
      %v3459 = vpack.c.b16 %v3443, %v3443
      %3476 = vst [vmem:[%s298] sm:$0xf] %v3444
      %3477 = vst [vmem:[%s298 + $0x4] sm:$0xf] %v3445
      %3478 = vst [vmem:[%s298 + $0x8] sm:$0xf] %v3446
      %3479 = vst [vmem:[%s298 + $0xc] sm:$0xf] %v3447
      %3480 = vst [vmem:[%s298 + $0x10] sm:$0xf] %v3448
      %3481 = vst [vmem:[%s298 + $0x14] sm:$0xf] %v3449
      %3482 = vst [vmem:[%s298 + $0x18] sm:$0xf] %v3450
      %3483 = vst [vmem:[%s298 + $0x1c] sm:$0xf] %v3451
      %3484 = vst [vmem:[%s298 + $0x20] sm:$0xf] %v3452
      %3485 = vst [vmem:[%s298 + $0x24] sm:$0xf] %v3453
      %3486 = vst [vmem:[%s298 + $0x28] sm:$0xf] %v3454
      %3487 = vst [vmem:[%s298 + $0x2c] sm:$0xf] %v3455
      %3488 = vst [vmem:[%s298 + $0x30] sm:$0xf] %v3456
      %3489 = vst [vmem:[%s298 + $0x34] sm:$0xf] %v3457
      %3490 = vst [vmem:[%s298 + $0x38] sm:$0xf] %v3458
      %3491 = vst [vmem:[%s298 + $0x3c] sm:$0xf] %v3459
      %v3492 = vadd.f32 %v3350, %v3353
      %v3493 = vadd.f32 %v3492, %v3358
      %v3494 = vadd.f32 %v3493, %v3361
      %v3495 = vadd.f32 %v3494, %v3366
      %v3496 = vadd.f32 %v3495, %v3369
      %v3497 = vadd.f32 %v3496, %v3374
      %v3498 = vadd.f32 %v3497, %v3377
      %v3499 = vadd.f32 %v3498, %v3382
      %v3500 = vadd.f32 %v3499, %v3385
      %v3501 = vadd.f32 %v3500, %v3390
      %v3502 = vadd.f32 %v3501, %v3393
      %v3503 = vadd.f32 %v3502, %v3398
      %v3504 = vadd.f32 %v3503, %v3401
      %v3505 = vadd.f32 %v3504, %v3406
      %v3506 = vadd.f32 %v3505, %v3409
      %v3507 = vrot.slane %v3506, 4
      %v3508 = vadd.f32 %v3506, %v3507
      %v3509 = vrot.slane %v3508, 2
      %v3510 = vadd.f32 %v3508, %v3509
      %v3511 = vrot.slane %v3510, 1
      %v3512 = vadd.f32 %v3510, %v3511
      %3513 = vst [vmem:[%s304] sm:$0x1] %v3512
      %v3514 = vmul.f32 %v3350, %v3350
      %v3515 = vmul.f32 %v3353, %v3353
      %v3516 = vmul.f32 %v3358, %v3358
      %v3517 = vmul.f32 %v3361, %v3361
      %v3518 = vmul.f32 %v3366, %v3366
      %v3519 = vmul.f32 %v3369, %v3369
      %v3520 = vmul.f32 %v3374, %v3374
      %v3521 = vmul.f32 %v3377, %v3377
      %v3522 = vmul.f32 %v3382, %v3382
      %v3523 = vmul.f32 %v3385, %v3385
      %v3524 = vmul.f32 %v3390, %v3390
      %v3525 = vmul.f32 %v3393, %v3393
      %v3526 = vmul.f32 %v3398, %v3398
      %v3527 = vmul.f32 %v3401, %v3401
      %v3528 = vmul.f32 %v3406, %v3406
      %v3529 = vmul.f32 %v3409, %v3409
      %v3530 = vadd.f32 %v3514, %v3515
      %v3531 = vadd.f32 %v3530, %v3516
      %v3532 = vadd.f32 %v3531, %v3517
      %v3533 = vadd.f32 %v3532, %v3518
      %v3534 = vadd.f32 %v3533, %v3519
      %v3535 = vadd.f32 %v3534, %v3520
      %v3536 = vadd.f32 %v3535, %v3521
      %v3537 = vadd.f32 %v3536, %v3522
      %v3538 = vadd.f32 %v3537, %v3523
      %v3539 = vadd.f32 %v3538, %v3524
      %v3540 = vadd.f32 %v3539, %v3525
      %v3541 = vadd.f32 %v3540, %v3526
      %v3542 = vadd.f32 %v3541, %v3527
      %v3543 = vadd.f32 %v3542, %v3528
      %v3544 = vadd.f32 %v3543, %v3529
      %v3545 = vrot.slane %v3544, 4
      %v3546 = vadd.f32 %v3544, %v3545
      %v3547 = vrot.slane %v3546, 2
      %v3548 = vadd.f32 %v3546, %v3547
      %v3549 = vrot.slane %v3548, 1
      %v3550 = vadd.f32 %v3548, %v3549
      %3551 = vst [vmem:[%s311] sm:$0x1] %v3550
      %s3552 = smul.u32 8, %s23
      %p3553 = scmp.lt.s32.totalorder %s22, 1
      %s3554 = scalar_select %p3553, %s22, 1
      %p3555 = scmp.lt.s32.totalorder %s3552, 15
      %s3556 = scalar_select %p3555, %s3552, 15
      %s3557 = smul.addr %s3556, 2
      %s3558 = smul.addr %s3554, 32
      %s3559 = sadd.s32 %s3557, %s3558
      %s3560 = smul.addr %s3559, 4
      %s3561 = scalar_lea.vmem %s4, %s3560
      %s3562 = smul.u32 %s22, 2
      %s3563 = sadd.s32 %s3562, %s23
      %p3564 = scmp.lt.s32.totalorder %s3563, 3
      %s3565 = scalar_select %p3564, %s3563, 3
      %s3566 = scalar_lea.vmem %s5, %s3565
      %s3567 = smul.u32 %s22, 2
      %s3568 = sadd.s32 %s3567, %s23
      %p3569 = scmp.lt.s32.totalorder %s3568, 3
      %s3570 = scalar_select %p3569, %s3568, 3
      %s3571 = scalar_lea.vmem %s6, %s3570
      // Predicated region
      $region45: #{residual_bottleneck_block.5} parent=35 // pred_check
        %p3572 = pneg %p139
      $region46: #{residual_bottleneck_block.5} parent=35 // pred_check_branch
        %3574 = sbr.rel (%p3572) target = $region48
      $region47: #{residual_bottleneck_block.5} parent=35 // pred_region
        %s3575 = smul.u32 8, %s23
      $region48: #{residual_bottleneck_block.5} parent=35 // pred_fallthru
        _
      // Predicated region
      $region49: #{residual_bottleneck_block.5} parent=35 // pred_check
        %p3576 = pneg %p169
      $region50: #{residual_bottleneck_block.5} parent=35 // pred_check_branch
        %3578 = sbr.rel (%p3576) target = $region52
      $region51: #{residual_bottleneck_block.5} parent=35 // pred_region
        %s3579 = smul.u32 %s22, 2
        %s3580 = sadd.s32 %s3579, %s23
      $region52: #{residual_bottleneck_block.5} parent=35 // pred_fallthru
        _
      // Predicated region
      $region53: #{residual_bottleneck_block.5} parent=35 // pred_check
        %p3581 = pneg %p199
      $region54: #{residual_bottleneck_block.5} parent=35 // pred_check_branch
        %3583 = sbr.rel (%p3581) target = $region56
      $region55: #{residual_bottleneck_block.5} parent=35 // pred_region
        %s3584 = smul.u32 %s22, 2
        %s3585 = sadd.s32 %s3584, %s23
      $region56: #{residual_bottleneck_block.5} parent=35 // pred_fallthru
        _
    $region36: #{residual_bottleneck_block.5} parent=5 // pred_fallthru
      _
    %p3586 = scmp.le.s32.totalorder 2, %s13
    // Predicated region
    $region57: #{residual_bottleneck_block.5} parent=5 // pred_check
      %p3587 = pneg %p3586
    $region58: #{residual_bottleneck_block.5} parent=5 // pred_check_branch
      %3589 = sbr.rel (%p3587) target = $region60
    $region59: #{residual_bottleneck_block.5} parent=5 // pred_region
      %s3590 = ssub.s32 %s13, 2
      // Predicated region
      $region61: #{residual_bottleneck_block.5} parent=59 // pred_check
        %p3591 = pneg %p145
      $region62: #{residual_bottleneck_block.5} parent=59 // pred_check_branch
        %3593 = sbr.rel (%p3591) target = $region64
      $region63: #{residual_bottleneck_block.5} parent=59 // pred_region
        %s3594 = smul.u32 8, %s25
        %p3595 = scmp.lt.s32.totalorder %s24, 1
        %s3596 = scalar_select %p3595, %s24, 1
        %p3597 = scmp.lt.s32.totalorder %s3594, 15
        %s3598 = scalar_select %p3597, %s3594, 15
        %s3599 = smul.addr %s3598, 2
        %s3600 = smul.addr %s3596, 32
        %s3601 = sadd.s32 %s3599, %s3600
        %s3602 = smul.addr %s3601, 4
        %s3603 = scalar_lea.vmem %s4, %s3602
      $region64: #{residual_bottleneck_block.5} parent=59 // pred_fallthru
        _
      // Predicated region
      $region65: #{residual_bottleneck_block.5} parent=59 // pred_check
        %p3604 = pneg %p175
      $region66: #{residual_bottleneck_block.5} parent=59 // pred_check_branch
        %3606 = sbr.rel (%p3604) target = $region68
      $region67: #{residual_bottleneck_block.5} parent=59 // pred_region
        %s3607 = smul.u32 %s24, 2
        %s3608 = sadd.s32 %s3607, %s25
        %p3609 = scmp.lt.s32.totalorder %s3608, 3
        %s3610 = scalar_select %p3609, %s3608, 3
        %s3611 = scalar_lea.vmem %s5, %s3610
      $region68: #{residual_bottleneck_block.5} parent=59 // pred_fallthru
        _
      // Predicated region
      $region69: #{residual_bottleneck_block.5} parent=59 // pred_check
        %p3612 = pneg %p205
      $region70: #{residual_bottleneck_block.5} parent=59 // pred_check_branch
        %3614 = sbr.rel (%p3612) target = $region72
      $region71: #{residual_bottleneck_block.5} parent=59 // pred_region
        %s3615 = smul.u32 %s24, 2
        %s3616 = sadd.s32 %s3615, %s25
        %p3617 = scmp.lt.s32.totalorder %s3616, 3
        %s3618 = scalar_select %p3617, %s3616, 3
        %s3619 = scalar_lea.vmem %s6, %s3618
      $region72: #{residual_bottleneck_block.5} parent=59 // pred_fallthru
        _
    $region60: #{residual_bottleneck_block.5} parent=5 // pred_fallthru
      _
  $region6: #{residual_bottleneck_block.5} parent=0 // loop_footer
    %s17 = sadd.s32 1, %s13
  $region7: #{residual_bottleneck_block.5} parent=0 // loop_footer_branch
    %12 = sbr.rel target = $region3
  $region8: #{residual_bottleneck_block.5} parent=0 // loop_exit
    _

</llo_original>
